<compile_context>
chip_gen: v7x
topology: tpu7x:2x2x1
jax: 0.10.0
libtpu: 0.0.40
codegen_flags: <defaults>
</compile_context>

<pallas_src>
import math

import jax
import jax.numpy as jnp
from jax.experimental import pallas as pl
from jax.experimental.pallas import tpu as pltpu

# Module-consistent small config (config.hidden_size, num_heads, patches).
HIDDEN = 32
NUM_HEADS = 4
HEAD_DIM = HIDDEN // NUM_HEADS
PATCHES = 8            # tokens per modality -> feat has 2*PATCHES tokens
BATCH = 2
SEQ = 2 * PATCHES      # 16
EPS = 1e-6             # Block uses LayerNorm(hidden, eps=1e-06)


# ------------------------------ Fused Block kernel ---------------------------

def _block_kernel(feat_ref, w_ref, b_ref, o_ref):
    H, NH, HD = HIDDEN, NUM_HEADS, HEAD_DIM
    B, S, P = BATCH, SEQ, PATCHES
    scale = 1.0 / math.sqrt(HD)

    # ---- unpack the two packed operand slabs (static slices, one DMA each) --
    gamma = b_ref[0:1, 0:H]
    beta = b_ref[1:2, 0:H]
    bqkv_s = b_ref[2:3, :]            # (1, 3H)
    bqkv_c = b_ref[3:4, :]            # (1, 3H)
    bo_s = b_ref[4:5, 0:H]
    bo_c = b_ref[5:6, 0:H]
    wqkv_s = w_ref[0:H, :]            # (H, 3H)  self-attn  [Wq|Wk|Wv]
    wqkv_c = w_ref[H:2 * H, :]        # (H, 3H)  cross-attn [Wq|Wk|Wv]
    wo_s = w_ref[2 * H:3 * H, 0:H]    # (H, H)
    wo_c = w_ref[3 * H:4 * H, 0:H]    # (H, H)

    def ln(x2):
        # x2: (T, H); per-token LayerNorm (biased variance, torch-style).
        mu = jnp.mean(x2, axis=-1, keepdims=True)
        var = jnp.mean((x2 - mu) ** 2, axis=-1, keepdims=True)
        return (x2 - mu) * jax.lax.rsqrt(var + EPS) * gamma + beta

    def heads(y2, nb, s, base):
        # (nb*s, C) -> (NH*nb, s, HD); batch index n = h*nb + b.
        y3 = y2.reshape(nb, s, y2.shape[-1])
        return jnp.concatenate(
            [y3[:, :, base + h * HD: base + (h + 1) * HD] for h in range(NH)],
            axis=0)

    def merge_heads(ctx, nb, sq):
        # (NH*nb, sq, HD) -> (nb*sq, H): heads back into lanes, head-major.
        parts = [ctx[h * nb:(h + 1) * nb].reshape(nb * sq, HD)
                 for h in range(NH)]
        return jnp.concatenate(parts, axis=1)

    def attn(q_src, kv_src, nb, sq, sk, wo, bo):
        # q_src : (nb*sq, >=H)  with the Q projection in lanes [0, H)
        # kv_src: (nb*sk, 3H)   with K in lanes [H, 2H), V in lanes [2H, 3H)
        qh = heads(q_src, nb, sq, 0)
        kh = heads(kv_src, nb, sk, H)
        vh = heads(kv_src, nb, sk, 2 * H)
        s = jnp.einsum('nqd,nkd->nqk', qh, kh,
                       preferred_element_type=jnp.float32) * scale
        s = s - jnp.max(s, axis=-1, keepdims=True)        # stable softmax
        p = jnp.exp(s)
        p = p / jnp.sum(p, axis=-1, keepdims=True)        # exact division
        # attn_dropout is identity (eval mode)
        ctx = jnp.einsum('nqk,nkd->nqd', p, vh,
                         preferred_element_type=jnp.float32)
        c2 = merge_heads(ctx, nb, sq)                     # (nb*sq, H)
        # single output-projection matmul for all heads; proj_dropout = id.
        return jnp.dot(c2, wo, preferred_element_type=jnp.float32) + bo

    feat = feat_ref[...].astype(jnp.float32)              # (B*S, H), row=b*S+t

    # -------------------- self attention + residual --------------------
    x = ln(feat)
    qkv = jnp.dot(x, wqkv_s, preferred_element_type=jnp.float32) + bqkv_s
    feat = feat + attn(qkv, qkv, B, S, S, wo_s, bo_s)

    # -------------------- split into rgb / depth tokens --------------------
    f_rgb = jnp.concatenate([feat[b * S: b * S + P] for b in range(B)], axis=0)
    f_d = jnp.concatenate([feat[b * S + P: (b + 1) * S] for b in range(B)],
                          axis=0)

    f_rgb2 = ln(f_rgb)
    f_d2 = ln(f_d)

    # Fused cross-attention projections: one (2*B*P, H) @ (H, 3H) matmul gives
    # q1 (from f_d2) and q2/k/v (from f_rgb2).
    xc = jnp.concatenate([f_d2, f_rgb2], axis=0)           # (2*B*P, H)
    pc = jnp.dot(xc, wqkv_c, preferred_element_type=jnp.float32) + bqkv_c
    p_d = pc[: B * P]        # projections of f_d2   (only Q lanes used)
    p_rgb = pc[B * P:]       # projections of f_rgb2 (Q, K, V lanes used)

    # -------- cross attention 1: Q = LN(f_d), K = V = LN(f_rgb) --------
    f_d = f_d + attn(p_d, p_rgb, B, P, P, wo_c, bo_c)

    # -------- cross attention 2: Q = old LN(f_rgb), K = V = LN(new f_d) ----
    f_d2n = ln(f_d)
    kv_d = jnp.dot(f_d2n, wqkv_c, preferred_element_type=jnp.float32) + bqkv_c
    f_rgb = f_rgb + attn(p_rgb, kv_d, B, P, P, wo_c, bo_c)

    # ---------------- concat + lane-dense (8, 128) output store ----------------
    blocks = []
    for b in range(B):
        blocks.append(f_rgb[b * P:(b + 1) * P])            # (P, H)
        blocks.append(f_d[b * P:(b + 1) * P])               # (P, H)
    dense = jnp.concatenate(blocks, axis=1)                  # (P, 2*B*H) = (8,128)
    o_ref[...] = dense.astype(o_ref.dtype)


# ------------------------------- Block forward --------------------------------

def block_forward(feat, params):
    B, S, H = feat.shape
    P = S // 2
    p_s, p_c = params["self_attn"], params["cross_attn"]

    # Trace-time packing of all weights/biases into two lane-dense slabs.
    wqkv_s = jnp.concatenate([p_s["wq"], p_s["wk"], p_s["wv"]], axis=1)  # (H,3H)
    wqkv_c = jnp.concatenate([p_c["wq"], p_c["wk"], p_c["wv"]], axis=1)  # (H,3H)
    wo_s = jnp.pad(p_s["wo"], ((0, 0), (0, 2 * H)))                      # (H,3H)
    wo_c = jnp.pad(p_c["wo"], ((0, 0), (0, 2 * H)))                      # (H,3H)
    w_slab = jnp.concatenate([wqkv_s, wqkv_c, wo_s, wo_c], axis=0)       # (4H,3H)

    def row3h(v):
        return jnp.pad(v, ((0, 0), (0, 3 * H - v.shape[1])))

    b_slab = jnp.concatenate([
        row3h(params["ln_gamma"]), row3h(params["ln_beta"]),
        jnp.concatenate([p_s["bq"], p_s["bk"], p_s["bv"]], axis=1),
        jnp.concatenate([p_c["bq"], p_c["bk"], p_c["bv"]], axis=1),
        row3h(p_s["bo"]), row3h(p_c["bo"]),
        jnp.zeros((2, 3 * H), jnp.float32),
    ], axis=0)                                                           # (8,3H)

    feat2d = feat.reshape(B * S, H)

    vmem = pltpu.MemorySpace.VMEM
    dense = pl.pallas_call(
        _block_kernel,
        out_shape=jax.ShapeDtypeStruct((P, 2 * B * H), feat.dtype),
        in_specs=[pl.BlockSpec(memory_space=vmem)] * 3,
        out_specs=pl.BlockSpec(memory_space=vmem),
    )(feat2d, w_slab, b_slab)

    # Invert the lane-dense packing (free XLA reshapes/transpose):
    #   dense[r, (b*2+m)*H + c] == out[b, m*P + r, c]   (m=0: rgb, m=1: d)
    out = dense.reshape(P, 2 * B, H).transpose(1, 0, 2).reshape(B, S, H)

    # TODO(synk): dropout layers are identity (eval mode); vis=False so the
    # returned attention weights are None, matching the PyTorch default path.
    return out, None


# ----------------------------- Pure-JAX reference ------------------------------

def _ln_ref(x, g, b):
    mean = jnp.mean(x, axis=-1, keepdims=True)
    var = jnp.mean((x - mean) ** 2, axis=-1, keepdims=True)
    return (x - mean) / jnp.sqrt(var + EPS) * g + b


def _attn_ref(q, k, v, p):
    B, Sq, H = q.shape
    Sk = k.shape[1]
    Q = q @ p["wq"] + p["bq"]
    K = k @ p["wk"] + p["bk"]
    V = v @ p["wv"] + p["bv"]
    Qh = Q.reshape(B, Sq, NUM_HEADS, HEAD_DIM).transpose(0, 2, 1, 3)
    Kh = K.reshape(B, Sk, NUM_HEADS, HEAD_DIM).transpose(0, 2, 1, 3)
    Vh = V.reshape(B, Sk, NUM_HEADS, HEAD_DIM).transpose(0, 2, 1, 3)
    s = jnp.einsum("bnqd,bnkd->bnqk", Qh, Kh) / math.sqrt(HEAD_DIM)
    prob = jax.nn.softmax(s, axis=-1)
    ctx = jnp.einsum("bnqk,bnkd->bnqd", prob, Vh)
    ctx = ctx.transpose(0, 2, 1, 3).reshape(B, Sq, H)
    return ctx @ p["wo"] + p["bo"]


def block_forward_ref(feat, params):
    ln_g, ln_b = params["ln_gamma"], params["ln_beta"]
    p_self, p_cross = params["self_attn"], params["cross_attn"]
    P = PATCHES
    h = feat
    x = _ln_ref(feat, ln_g, ln_b)
    feat = _attn_ref(x, x, x, p_self) + h
    f_rgb, f_d = feat[:, :P, :], feat[:, P:, :]
    f_rgb2 = _ln_ref(f_rgb, ln_g, ln_b)
    f_d2 = _ln_ref(f_d, ln_g, ln_b)
    f_d = f_d + _attn_ref(f_d2, f_rgb2, f_rgb2, p_cross)
    f_d2 = _ln_ref(f_d, ln_g, ln_b)
    f_rgb = f_rgb + _attn_ref(f_rgb2, f_d2, f_d2, p_cross)
    return jnp.concatenate([f_rgb, f_d], axis=1)


# ------------------------------- Parameter init --------------------------------

def init_params(key):
    def attn_params(k):
        ks = jax.random.split(k, 8)

        def w(kk):
            return jax.random.normal(kk, (HIDDEN, HIDDEN), jnp.float32) * 0.05

        def b(kk):
            return jax.random.normal(kk, (1, HIDDEN), jnp.float32) * 0.02

        return {
            "wq": w(ks[0]), "bq": b(ks[1]),
            "wk": w(ks[2]), "bk": b(ks[3]),
            "wv": w(ks[4]), "bv": b(ks[5]),
            "wo": w(ks[6]), "bo": b(ks[7]),
        }

    k_self, k_cross, k_g, k_b = jax.random.split(key, 4)
    return {
        "self_attn": attn_params(k_self),
        "cross_attn": attn_params(k_cross),
        "ln_gamma": 1.0 + 0.1 * jax.random.normal(k_g, (1, HIDDEN), jnp.float32),
        "ln_beta": 0.1 * jax.random.normal(k_b, (1, HIDDEN), jnp.float32),
    }


# ------------------------------------ Main --------------------------------------

if __name__ == "__main__":
    key = jax.random.PRNGKey(0)
    k_in, k_par = jax.random.split(key)

    # feat = cat([rgb, d], dim=1) -> (B, 2*patches, hidden)
    feat = jax.random.normal(k_in, (BATCH, SEQ, HIDDEN), jnp.float32)
    params = init_params(k_par)

    out, weights = jax.jit(block_forward)(feat, params)
    out = jax.block_until_ready(out)

    ref = block_forward_ref(feat, params)
    assert out.shape == (BATCH, SEQ, HIDDEN)
    err = float(jnp.max(jnp.abs(out - ref)))
    assert jnp.allclose(out, ref, atol=1e-4, rtol=1e-4), err
    assert weights is None

    print("KERNEL_OK")
</pallas_src>

<mosaic_0001>
module attributes {stable_mosaic.version = 11 : i64} {
  func.func @_block_kernel(%arg0: memref<32x32xf32, #tpu.memory_space<vmem>>, %arg1: memref<128x96xf32, #tpu.memory_space<vmem>>, %arg2: memref<8x96xf32, #tpu.memory_space<vmem>>, %arg3: memref<8x128xf32, #tpu.memory_space<vmem>>) attributes {dimension_semantics = [], scalar_prefetch = 0 : i64, scratch_operands = 0 : i64, tpu.core_type = #tpu.core_type<tc>} {
    %c0 = arith.constant 0 : index
    %c0_0 = arith.constant 0 : index
    %0 = vector.load %arg2[%c0, %c0_0] : memref<8x96xf32, #tpu.memory_space<vmem>>, vector<1x32xf32>
    %c1 = arith.constant 1 : index
    %c0_1 = arith.constant 0 : index
    %1 = vector.load %arg2[%c1, %c0_1] : memref<8x96xf32, #tpu.memory_space<vmem>>, vector<1x32xf32>
    %c2 = arith.constant 2 : index
    %c0_2 = arith.constant 0 : index
    %2 = vector.load %arg2[%c2, %c0_2] : memref<8x96xf32, #tpu.memory_space<vmem>>, vector<1x96xf32>
    %c3 = arith.constant 3 : index
    %c0_3 = arith.constant 0 : index
    %3 = vector.load %arg2[%c3, %c0_3] : memref<8x96xf32, #tpu.memory_space<vmem>>, vector<1x96xf32>
    %c4 = arith.constant 4 : index
    %c0_4 = arith.constant 0 : index
    %4 = vector.load %arg2[%c4, %c0_4] : memref<8x96xf32, #tpu.memory_space<vmem>>, vector<1x32xf32>
    %c5 = arith.constant 5 : index
    %c0_5 = arith.constant 0 : index
    %5 = vector.load %arg2[%c5, %c0_5] : memref<8x96xf32, #tpu.memory_space<vmem>>, vector<1x32xf32>
    %c0_6 = arith.constant 0 : index
    %c0_7 = arith.constant 0 : index
    %6 = vector.load %arg1[%c0_6, %c0_7] : memref<128x96xf32, #tpu.memory_space<vmem>>, vector<32x96xf32>
    %c32 = arith.constant 32 : index
    %c0_8 = arith.constant 0 : index
    %7 = vector.load %arg1[%c32, %c0_8] : memref<128x96xf32, #tpu.memory_space<vmem>>, vector<32x96xf32>
    %c64 = arith.constant 64 : index
    %c0_9 = arith.constant 0 : index
    %8 = vector.load %arg1[%c64, %c0_9] : memref<128x96xf32, #tpu.memory_space<vmem>>, vector<32x32xf32>
    %c96 = arith.constant 96 : index
    %c0_10 = arith.constant 0 : index
    %9 = vector.load %arg1[%c96, %c0_10] : memref<128x96xf32, #tpu.memory_space<vmem>>, vector<32x32xf32>
    %c0_11 = arith.constant 0 : index
    %c0_12 = arith.constant 0 : index
    %10 = vector.load %arg0[%c0_11, %c0_12] : memref<32x32xf32, #tpu.memory_space<vmem>>, vector<32x32xf32>
    %cst = arith.constant dense<0.000000e+00> : vector<32xf32>
    %11 = vector.multi_reduction <add>, %10, %cst [1] : vector<32x32xf32> to vector<32xf32>
    %12 = vector.shape_cast %11 : vector<32xf32> to vector<32x1xf32>
    %cst_13 = arith.constant 3.200000e+01 : f32
    %13 = vector.broadcast %cst_13 : f32 to vector<32x1xf32>
    %14 = arith.divf %12, %13 : vector<32x1xf32>
    %15 = vector.broadcast %14 : vector<32x1xf32> to vector<32x32xf32>
    %16 = arith.subf %10, %15 : vector<32x32xf32>
    %17 = arith.mulf %16, %16 : vector<32x32xf32>
    %cst_14 = arith.constant dense<0.000000e+00> : vector<32xf32>
    %18 = vector.multi_reduction <add>, %17, %cst_14 [1] : vector<32x32xf32> to vector<32xf32>
    %19 = vector.shape_cast %18 : vector<32xf32> to vector<32x1xf32>
    %cst_15 = arith.constant 3.200000e+01 : f32
    %20 = vector.broadcast %cst_15 : f32 to vector<32x1xf32>
    %21 = arith.divf %19, %20 : vector<32x1xf32>
    %22 = vector.broadcast %14 : vector<32x1xf32> to vector<32x32xf32>
    %23 = arith.subf %10, %22 : vector<32x32xf32>
    %cst_16 = arith.constant 9.99999997E-7 : f32
    %24 = vector.broadcast %cst_16 : f32 to vector<32x1xf32>
    %25 = arith.addf %21, %24 : vector<32x1xf32>
    %26 = math.rsqrt %25 : vector<32x1xf32>
    %27 = vector.broadcast %26 : vector<32x1xf32> to vector<32x32xf32>
    %28 = arith.mulf %23, %27 : vector<32x32xf32>
    %29 = vector.broadcast %0 : vector<1x32xf32> to vector<32x32xf32>
    %30 = arith.mulf %28, %29 : vector<32x32xf32>
    %31 = vector.broadcast %1 : vector<1x32xf32> to vector<32x32xf32>
    %32 = arith.addf %30, %31 : vector<32x32xf32>
    %cst_17 = arith.constant dense<0.000000e+00> : vector<32x96xf32>
    %33 = tpu.matmul %32, %6, %cst_17 {dimension_numbers = #tpu.dot_dimension_numbers<[1], [0], [0], [1], [0, 0, 1, 1], [], []>} : vector<32x32xf32>, vector<32x96xf32>, vector<32x96xf32> -> vector<32x96xf32>
    %34 = vector.broadcast %2 : vector<1x96xf32> to vector<32x96xf32>
    %35 = arith.addf %33, %34 : vector<32x96xf32>
    %36 = vector.shape_cast %35 : vector<32x96xf32> to vector<2x16x96xf32>
    %37 = vector.extract_strided_slice %36 {offsets = [0, 0, 0], sizes = [2, 16, 8], strides = [1, 1, 1]} : vector<2x16x96xf32> to vector<2x16x8xf32>
    %38 = vector.extract_strided_slice %36 {offsets = [0, 0, 8], sizes = [2, 16, 8], strides = [1, 1, 1]} : vector<2x16x96xf32> to vector<2x16x8xf32>
    %39 = vector.extract_strided_slice %36 {offsets = [0, 0, 16], sizes = [2, 16, 8], strides = [1, 1, 1]} : vector<2x16x96xf32> to vector<2x16x8xf32>
    %40 = vector.extract_strided_slice %36 {offsets = [0, 0, 24], sizes = [2, 16, 8], strides = [1, 1, 1]} : vector<2x16x96xf32> to vector<2x16x8xf32>
    %41 = tpu.concatenate %37, %38, %39, %40 in 0 : vector<2x16x8xf32>, vector<2x16x8xf32>, vector<2x16x8xf32>, vector<2x16x8xf32> -> vector<8x16x8xf32>
    %42 = vector.shape_cast %35 : vector<32x96xf32> to vector<2x16x96xf32>
    %43 = vector.extract_strided_slice %42 {offsets = [0, 0, 32], sizes = [2, 16, 8], strides = [1, 1, 1]} : vector<2x16x96xf32> to vector<2x16x8xf32>
    %44 = vector.extract_strided_slice %42 {offsets = [0, 0, 40], sizes = [2, 16, 8], strides = [1, 1, 1]} : vector<2x16x96xf32> to vector<2x16x8xf32>
    %45 = vector.extract_strided_slice %42 {offsets = [0, 0, 48], sizes = [2, 16, 8], strides = [1, 1, 1]} : vector<2x16x96xf32> to vector<2x16x8xf32>
    %46 = vector.extract_strided_slice %42 {offsets = [0, 0, 56], sizes = [2, 16, 8], strides = [1, 1, 1]} : vector<2x16x96xf32> to vector<2x16x8xf32>
    %47 = tpu.concatenate %43, %44, %45, %46 in 0 : vector<2x16x8xf32>, vector<2x16x8xf32>, vector<2x16x8xf32>, vector<2x16x8xf32> -> vector<8x16x8xf32>
    %48 = vector.shape_cast %35 : vector<32x96xf32> to vector<2x16x96xf32>
    %49 = vector.extract_strided_slice %48 {offsets = [0, 0, 64], sizes = [2, 16, 8], strides = [1, 1, 1]} : vector<2x16x96xf32> to vector<2x16x8xf32>
    %50 = vector.extract_strided_slice %48 {offsets = [0, 0, 72], sizes = [2, 16, 8], strides = [1, 1, 1]} : vector<2x16x96xf32> to vector<2x16x8xf32>
    %51 = vector.extract_strided_slice %48 {offsets = [0, 0, 80], sizes = [2, 16, 8], strides = [1, 1, 1]} : vector<2x16x96xf32> to vector<2x16x8xf32>
    %52 = vector.extract_strided_slice %48 {offsets = [0, 0, 88], sizes = [2, 16, 8], strides = [1, 1, 1]} : vector<2x16x96xf32> to vector<2x16x8xf32>
    %53 = tpu.concatenate %49, %50, %51, %52 in 0 : vector<2x16x8xf32>, vector<2x16x8xf32>, vector<2x16x8xf32>, vector<2x16x8xf32> -> vector<8x16x8xf32>
    "tpu.trace_start"() <{level = 10 : i32, message = "nqd,nkd->nqk"}> : () -> ()
    %cst_18 = arith.constant dense<0.000000e+00> : vector<8x16x16xf32>
    %54 = tpu.matmul %41, %47, %cst_18 {dimension_numbers = #tpu.dot_dimension_numbers<[2], [2], [1], [1], [0, 0, 0, 1, 1, 1], [0], [0]>} : vector<8x16x8xf32>, vector<8x16x8xf32>, vector<8x16x16xf32> -> vector<8x16x16xf32>
    "tpu.trace_stop"() : () -> ()
    %cst_19 = arith.constant 0.353553385 : f32
    %55 = vector.broadcast %cst_19 : f32 to vector<8x16x16xf32>
    %56 = arith.mulf %54, %55 : vector<8x16x16xf32>
    %cst_20 = arith.constant dense<0xFF800000> : vector<8x16xf32>
    %57 = vector.multi_reduction <maximumf>, %56, %cst_20 [2] : vector<8x16x16xf32> to vector<8x16xf32>
    %58 = vector.shape_cast %57 : vector<8x16xf32> to vector<8x16x1xf32>
    %59 = vector.broadcast %58 : vector<8x16x1xf32> to vector<8x16x16xf32>
    %60 = arith.subf %56, %59 : vector<8x16x16xf32>
    %61 = math.exp %60 : vector<8x16x16xf32>
    %cst_21 = arith.constant dense<0.000000e+00> : vector<8x16xf32>
    %62 = vector.multi_reduction <add>, %61, %cst_21 [2] : vector<8x16x16xf32> to vector<8x16xf32>
    %63 = vector.shape_cast %62 : vector<8x16xf32> to vector<8x16x1xf32>
    %64 = vector.broadcast %63 : vector<8x16x1xf32> to vector<8x16x16xf32>
    %65 = arith.divf %61, %64 : vector<8x16x16xf32>
    "tpu.trace_start"() <{level = 10 : i32, message = "nqk,nkd->nqd"}> : () -> ()
    %cst_22 = arith.constant dense<0.000000e+00> : vector<8x16x8xf32>
    %66 = tpu.matmul %65, %53, %cst_22 {dimension_numbers = #tpu.dot_dimension_numbers<[2], [1], [1], [2], [0, 0, 0, 1, 1, 2], [0], [0]>} : vector<8x16x16xf32>, vector<8x16x8xf32>, vector<8x16x8xf32> -> vector<8x16x8xf32>
    "tpu.trace_stop"() : () -> ()
    %67 = vector.extract_strided_slice %66 {offsets = [0, 0, 0], sizes = [2, 16, 8], strides = [1, 1, 1]} : vector<8x16x8xf32> to vector<2x16x8xf32>
    %68 = vector.shape_cast %67 : vector<2x16x8xf32> to vector<32x8xf32>
    %69 = vector.extract_strided_slice %66 {offsets = [2, 0, 0], sizes = [2, 16, 8], strides = [1, 1, 1]} : vector<8x16x8xf32> to vector<2x16x8xf32>
    %70 = vector.shape_cast %69 : vector<2x16x8xf32> to vector<32x8xf32>
    %71 = vector.extract_strided_slice %66 {offsets = [4, 0, 0], sizes = [2, 16, 8], strides = [1, 1, 1]} : vector<8x16x8xf32> to vector<2x16x8xf32>
    %72 = vector.shape_cast %71 : vector<2x16x8xf32> to vector<32x8xf32>
    %73 = vector.extract_strided_slice %66 {offsets = [6, 0, 0], sizes = [2, 16, 8], strides = [1, 1, 1]} : vector<8x16x8xf32> to vector<2x16x8xf32>
    %74 = vector.shape_cast %73 : vector<2x16x8xf32> to vector<32x8xf32>
    %75 = tpu.concatenate %68, %70, %72, %74 in 1 : vector<32x8xf32>, vector<32x8xf32>, vector<32x8xf32>, vector<32x8xf32> -> vector<32x32xf32>
    %cst_23 = arith.constant dense<0.000000e+00> : vector<32x32xf32>
    %76 = tpu.matmul %75, %8, %cst_23 {dimension_numbers = #tpu.dot_dimension_numbers<[1], [0], [0], [1], [0, 0, 1, 1], [], []>} : vector<32x32xf32>, vector<32x32xf32>, vector<32x32xf32> -> vector<32x32xf32>
    %77 = vector.broadcast %4 : vector<1x32xf32> to vector<32x32xf32>
    %78 = arith.addf %76, %77 : vector<32x32xf32>
    %79 = arith.addf %10, %78 : vector<32x32xf32>
    %80 = vector.extract_strided_slice %79 {offsets = [0, 0], sizes = [8, 32], strides = [1, 1]} : vector<32x32xf32> to vector<8x32xf32>
    %81 = vector.extract_strided_slice %79 {offsets = [16, 0], sizes = [8, 32], strides = [1, 1]} : vector<32x32xf32> to vector<8x32xf32>
    %82 = tpu.concatenate %80, %81 in 0 : vector<8x32xf32>, vector<8x32xf32> -> vector<16x32xf32>
    %83 = vector.extract_strided_slice %79 {offsets = [8, 0], sizes = [8, 32], strides = [1, 1]} : vector<32x32xf32> to vector<8x32xf32>
    %84 = vector.extract_strided_slice %79 {offsets = [24, 0], sizes = [8, 32], strides = [1, 1]} : vector<32x32xf32> to vector<8x32xf32>
    %85 = tpu.concatenate %83, %84 in 0 : vector<8x32xf32>, vector<8x32xf32> -> vector<16x32xf32>
    %cst_24 = arith.constant dense<0.000000e+00> : vector<16xf32>
    %86 = vector.multi_reduction <add>, %82, %cst_24 [1] : vector<16x32xf32> to vector<16xf32>
    %87 = vector.shape_cast %86 : vector<16xf32> to vector<16x1xf32>
    %cst_25 = arith.constant 3.200000e+01 : f32
    %88 = vector.broadcast %cst_25 : f32 to vector<16x1xf32>
    %89 = arith.divf %87, %88 : vector<16x1xf32>
    %90 = vector.broadcast %89 : vector<16x1xf32> to vector<16x32xf32>
    %91 = arith.subf %82, %90 : vector<16x32xf32>
    %92 = arith.mulf %91, %91 : vector<16x32xf32>
    %cst_26 = arith.constant dense<0.000000e+00> : vector<16xf32>
    %93 = vector.multi_reduction <add>, %92, %cst_26 [1] : vector<16x32xf32> to vector<16xf32>
    %94 = vector.shape_cast %93 : vector<16xf32> to vector<16x1xf32>
    %cst_27 = arith.constant 3.200000e+01 : f32
    %95 = vector.broadcast %cst_27 : f32 to vector<16x1xf32>
    %96 = arith.divf %94, %95 : vector<16x1xf32>
    %97 = vector.broadcast %89 : vector<16x1xf32> to vector<16x32xf32>
    %98 = arith.subf %82, %97 : vector<16x32xf32>
    %cst_28 = arith.constant 9.99999997E-7 : f32
    %99 = vector.broadcast %cst_28 : f32 to vector<16x1xf32>
    %100 = arith.addf %96, %99 : vector<16x1xf32>
    %101 = math.rsqrt %100 : vector<16x1xf32>
    %102 = vector.broadcast %101 : vector<16x1xf32> to vector<16x32xf32>
    %103 = arith.mulf %98, %102 : vector<16x32xf32>
    %104 = vector.broadcast %0 : vector<1x32xf32> to vector<16x32xf32>
    %105 = arith.mulf %103, %104 : vector<16x32xf32>
    %106 = vector.broadcast %1 : vector<1x32xf32> to vector<16x32xf32>
    %107 = arith.addf %105, %106 : vector<16x32xf32>
    %cst_29 = arith.constant dense<0.000000e+00> : vector<16xf32>
    %108 = vector.multi_reduction <add>, %85, %cst_29 [1] : vector<16x32xf32> to vector<16xf32>
    %109 = vector.shape_cast %108 : vector<16xf32> to vector<16x1xf32>
    %cst_30 = arith.constant 3.200000e+01 : f32
    %110 = vector.broadcast %cst_30 : f32 to vector<16x1xf32>
    %111 = arith.divf %109, %110 : vector<16x1xf32>
    %112 = vector.broadcast %111 : vector<16x1xf32> to vector<16x32xf32>
    %113 = arith.subf %85, %112 : vector<16x32xf32>
    %114 = arith.mulf %113, %113 : vector<16x32xf32>
    %cst_31 = arith.constant dense<0.000000e+00> : vector<16xf32>
    %115 = vector.multi_reduction <add>, %114, %cst_31 [1] : vector<16x32xf32> to vector<16xf32>
    %116 = vector.shape_cast %115 : vector<16xf32> to vector<16x1xf32>
    %cst_32 = arith.constant 3.200000e+01 : f32
    %117 = vector.broadcast %cst_32 : f32 to vector<16x1xf32>
    %118 = arith.divf %116, %117 : vector<16x1xf32>
    %119 = vector.broadcast %111 : vector<16x1xf32> to vector<16x32xf32>
    %120 = arith.subf %85, %119 : vector<16x32xf32>
    %cst_33 = arith.constant 9.99999997E-7 : f32
    %121 = vector.broadcast %cst_33 : f32 to vector<16x1xf32>
    %122 = arith.addf %118, %121 : vector<16x1xf32>
    %123 = math.rsqrt %122 : vector<16x1xf32>
    %124 = vector.broadcast %123 : vector<16x1xf32> to vector<16x32xf32>
    %125 = arith.mulf %120, %124 : vector<16x32xf32>
    %126 = vector.broadcast %0 : vector<1x32xf32> to vector<16x32xf32>
    %127 = arith.mulf %125, %126 : vector<16x32xf32>
    %128 = vector.broadcast %1 : vector<1x32xf32> to vector<16x32xf32>
    %129 = arith.addf %127, %128 : vector<16x32xf32>
    %130 = tpu.concatenate %129, %107 in 0 : vector<16x32xf32>, vector<16x32xf32> -> vector<32x32xf32>
    %cst_34 = arith.constant dense<0.000000e+00> : vector<32x96xf32>
    %131 = tpu.matmul %130, %7, %cst_34 {dimension_numbers = #tpu.dot_dimension_numbers<[1], [0], [0], [1], [0, 0, 1, 1], [], []>} : vector<32x32xf32>, vector<32x96xf32>, vector<32x96xf32> -> vector<32x96xf32>
    %132 = vector.broadcast %3 : vector<1x96xf32> to vector<32x96xf32>
    %133 = arith.addf %131, %132 : vector<32x96xf32>
    %134 = vector.extract_strided_slice %133 {offsets = [0, 0], sizes = [16, 96], strides = [1, 1]} : vector<32x96xf32> to vector<16x96xf32>
    %135 = vector.extract_strided_slice %133 {offsets = [16, 0], sizes = [16, 96], strides = [1, 1]} : vector<32x96xf32> to vector<16x96xf32>
    %136 = vector.shape_cast %134 : vector<16x96xf32> to vector<2x8x96xf32>
    %137 = vector.extract_strided_slice %136 {offsets = [0, 0, 0], sizes = [2, 8, 8], strides = [1, 1, 1]} : vector<2x8x96xf32> to vector<2x8x8xf32>
    %138 = vector.extract_strided_slice %136 {offsets = [0, 0, 8], sizes = [2, 8, 8], strides = [1, 1, 1]} : vector<2x8x96xf32> to vector<2x8x8xf32>
    %139 = vector.extract_strided_slice %136 {offsets = [0, 0, 16], sizes = [2, 8, 8], strides = [1, 1, 1]} : vector<2x8x96xf32> to vector<2x8x8xf32>
    %140 = vector.extract_strided_slice %136 {offsets = [0, 0, 24], sizes = [2, 8, 8], strides = [1, 1, 1]} : vector<2x8x96xf32> to vector<2x8x8xf32>
    %141 = tpu.concatenate %137, %138, %139, %140 in 0 : vector<2x8x8xf32>, vector<2x8x8xf32>, vector<2x8x8xf32>, vector<2x8x8xf32> -> vector<8x8x8xf32>
    %142 = vector.shape_cast %135 : vector<16x96xf32> to vector<2x8x96xf32>
    %143 = vector.extract_strided_slice %142 {offsets = [0, 0, 32], sizes = [2, 8, 8], strides = [1, 1, 1]} : vector<2x8x96xf32> to vector<2x8x8xf32>
    %144 = vector.extract_strided_slice %142 {offsets = [0, 0, 40], sizes = [2, 8, 8], strides = [1, 1, 1]} : vector<2x8x96xf32> to vector<2x8x8xf32>
    %145 = vector.extract_strided_slice %142 {offsets = [0, 0, 48], sizes = [2, 8, 8], strides = [1, 1, 1]} : vector<2x8x96xf32> to vector<2x8x8xf32>
    %146 = vector.extract_strided_slice %142 {offsets = [0, 0, 56], sizes = [2, 8, 8], strides = [1, 1, 1]} : vector<2x8x96xf32> to vector<2x8x8xf32>
    %147 = tpu.concatenate %143, %144, %145, %146 in 0 : vector<2x8x8xf32>, vector<2x8x8xf32>, vector<2x8x8xf32>, vector<2x8x8xf32> -> vector<8x8x8xf32>
    %148 = vector.shape_cast %135 : vector<16x96xf32> to vector<2x8x96xf32>
    %149 = vector.extract_strided_slice %148 {offsets = [0, 0, 64], sizes = [2, 8, 8], strides = [1, 1, 1]} : vector<2x8x96xf32> to vector<2x8x8xf32>
    %150 = vector.extract_strided_slice %148 {offsets = [0, 0, 72], sizes = [2, 8, 8], strides = [1, 1, 1]} : vector<2x8x96xf32> to vector<2x8x8xf32>
    %151 = vector.extract_strided_slice %148 {offsets = [0, 0, 80], sizes = [2, 8, 8], strides = [1, 1, 1]} : vector<2x8x96xf32> to vector<2x8x8xf32>
    %152 = vector.extract_strided_slice %148 {offsets = [0, 0, 88], sizes = [2, 8, 8], strides = [1, 1, 1]} : vector<2x8x96xf32> to vector<2x8x8xf32>
    %153 = tpu.concatenate %149, %150, %151, %152 in 0 : vector<2x8x8xf32>, vector<2x8x8xf32>, vector<2x8x8xf32>, vector<2x8x8xf32> -> vector<8x8x8xf32>
    "tpu.trace_start"() <{level = 10 : i32, message = "nqd,nkd->nqk"}> : () -> ()
    %cst_35 = arith.constant dense<0.000000e+00> : vector<8x8x8xf32>
    %154 = tpu.matmul %141, %147, %cst_35 {dimension_numbers = #tpu.dot_dimension_numbers<[2], [2], [1], [1], [0, 0, 0, 1, 1, 1], [0], [0]>} : vector<8x8x8xf32>, vector<8x8x8xf32>, vector<8x8x8xf32> -> vector<8x8x8xf32>
    "tpu.trace_stop"() : () -> ()
    %cst_36 = arith.constant 0.353553385 : f32
    %155 = vector.broadcast %cst_36 : f32 to vector<8x8x8xf32>
    %156 = arith.mulf %154, %155 : vector<8x8x8xf32>
    %cst_37 = arith.constant dense<0xFF800000> : vector<8x8xf32>
    %157 = vector.multi_reduction <maximumf>, %156, %cst_37 [2] : vector<8x8x8xf32> to vector<8x8xf32>
    %158 = vector.shape_cast %157 : vector<8x8xf32> to vector<8x8x1xf32>
    %159 = vector.broadcast %158 : vector<8x8x1xf32> to vector<8x8x8xf32>
    %160 = arith.subf %156, %159 : vector<8x8x8xf32>
    %161 = math.exp %160 : vector<8x8x8xf32>
    %cst_38 = arith.constant dense<0.000000e+00> : vector<8x8xf32>
    %162 = vector.multi_reduction <add>, %161, %cst_38 [2] : vector<8x8x8xf32> to vector<8x8xf32>
    %163 = vector.shape_cast %162 : vector<8x8xf32> to vector<8x8x1xf32>
    %164 = vector.broadcast %163 : vector<8x8x1xf32> to vector<8x8x8xf32>
    %165 = arith.divf %161, %164 : vector<8x8x8xf32>
    "tpu.trace_start"() <{level = 10 : i32, message = "nqk,nkd->nqd"}> : () -> ()
    %cst_39 = arith.constant dense<0.000000e+00> : vector<8x8x8xf32>
    %166 = tpu.matmul %165, %153, %cst_39 {dimension_numbers = #tpu.dot_dimension_numbers<[2], [1], [1], [2], [0, 0, 0, 1, 1, 2], [0], [0]>} : vector<8x8x8xf32>, vector<8x8x8xf32>, vector<8x8x8xf32> -> vector<8x8x8xf32>
    "tpu.trace_stop"() : () -> ()
    %167 = vector.extract_strided_slice %166 {offsets = [0, 0, 0], sizes = [2, 8, 8], strides = [1, 1, 1]} : vector<8x8x8xf32> to vector<2x8x8xf32>
    %168 = vector.shape_cast %167 : vector<2x8x8xf32> to vector<16x8xf32>
    %169 = vector.extract_strided_slice %166 {offsets = [2, 0, 0], sizes = [2, 8, 8], strides = [1, 1, 1]} : vector<8x8x8xf32> to vector<2x8x8xf32>
    %170 = vector.shape_cast %169 : vector<2x8x8xf32> to vector<16x8xf32>
    %171 = vector.extract_strided_slice %166 {offsets = [4, 0, 0], sizes = [2, 8, 8], strides = [1, 1, 1]} : vector<8x8x8xf32> to vector<2x8x8xf32>
    %172 = vector.shape_cast %171 : vector<2x8x8xf32> to vector<16x8xf32>
    %173 = vector.extract_strided_slice %166 {offsets = [6, 0, 0], sizes = [2, 8, 8], strides = [1, 1, 1]} : vector<8x8x8xf32> to vector<2x8x8xf32>
    %174 = vector.shape_cast %173 : vector<2x8x8xf32> to vector<16x8xf32>
    %175 = tpu.concatenate %168, %170, %172, %174 in 1 : vector<16x8xf32>, vector<16x8xf32>, vector<16x8xf32>, vector<16x8xf32> -> vector<16x32xf32>
    %cst_40 = arith.constant dense<0.000000e+00> : vector<16x32xf32>
    %176 = tpu.matmul %175, %9, %cst_40 {dimension_numbers = #tpu.dot_dimension_numbers<[1], [0], [0], [1], [0, 0, 1, 1], [], []>} : vector<16x32xf32>, vector<32x32xf32>, vector<16x32xf32> -> vector<16x32xf32>
    %177 = vector.broadcast %5 : vector<1x32xf32> to vector<16x32xf32>
    %178 = arith.addf %176, %177 : vector<16x32xf32>
    %179 = arith.addf %85, %178 : vector<16x32xf32>
    %cst_41 = arith.constant dense<0.000000e+00> : vector<16xf32>
    %180 = vector.multi_reduction <add>, %179, %cst_41 [1] : vector<16x32xf32> to vector<16xf32>
    %181 = vector.shape_cast %180 : vector<16xf32> to vector<16x1xf32>
    %cst_42 = arith.constant 3.200000e+01 : f32
    %182 = vector.broadcast %cst_42 : f32 to vector<16x1xf32>
    %183 = arith.divf %181, %182 : vector<16x1xf32>
    %184 = vector.broadcast %183 : vector<16x1xf32> to vector<16x32xf32>
    %185 = arith.subf %179, %184 : vector<16x32xf32>
    %186 = arith.mulf %185, %185 : vector<16x32xf32>
    %cst_43 = arith.constant dense<0.000000e+00> : vector<16xf32>
    %187 = vector.multi_reduction <add>, %186, %cst_43 [1] : vector<16x32xf32> to vector<16xf32>
    %188 = vector.shape_cast %187 : vector<16xf32> to vector<16x1xf32>
    %cst_44 = arith.constant 3.200000e+01 : f32
    %189 = vector.broadcast %cst_44 : f32 to vector<16x1xf32>
    %190 = arith.divf %188, %189 : vector<16x1xf32>
    %191 = vector.broadcast %183 : vector<16x1xf32> to vector<16x32xf32>
    %192 = arith.subf %179, %191 : vector<16x32xf32>
    %cst_45 = arith.constant 9.99999997E-7 : f32
    %193 = vector.broadcast %cst_45 : f32 to vector<16x1xf32>
    %194 = arith.addf %190, %193 : vector<16x1xf32>
    %195 = math.rsqrt %194 : vector<16x1xf32>
    %196 = vector.broadcast %195 : vector<16x1xf32> to vector<16x32xf32>
    %197 = arith.mulf %192, %196 : vector<16x32xf32>
    %198 = vector.broadcast %0 : vector<1x32xf32> to vector<16x32xf32>
    %199 = arith.mulf %197, %198 : vector<16x32xf32>
    %200 = vector.broadcast %1 : vector<1x32xf32> to vector<16x32xf32>
    %201 = arith.addf %199, %200 : vector<16x32xf32>
    %cst_46 = arith.constant dense<0.000000e+00> : vector<16x96xf32>
    %202 = tpu.matmul %201, %7, %cst_46 {dimension_numbers = #tpu.dot_dimension_numbers<[1], [0], [0], [1], [0, 0, 1, 1], [], []>} : vector<16x32xf32>, vector<32x96xf32>, vector<16x96xf32> -> vector<16x96xf32>
    %203 = vector.broadcast %3 : vector<1x96xf32> to vector<16x96xf32>
    %204 = arith.addf %202, %203 : vector<16x96xf32>
    %205 = vector.shape_cast %135 : vector<16x96xf32> to vector<2x8x96xf32>
    %206 = vector.extract_strided_slice %205 {offsets = [0, 0, 0], sizes = [2, 8, 8], strides = [1, 1, 1]} : vector<2x8x96xf32> to vector<2x8x8xf32>
    %207 = vector.extract_strided_slice %205 {offsets = [0, 0, 8], sizes = [2, 8, 8], strides = [1, 1, 1]} : vector<2x8x96xf32> to vector<2x8x8xf32>
    %208 = vector.extract_strided_slice %205 {offsets = [0, 0, 16], sizes = [2, 8, 8], strides = [1, 1, 1]} : vector<2x8x96xf32> to vector<2x8x8xf32>
    %209 = vector.extract_strided_slice %205 {offsets = [0, 0, 24], sizes = [2, 8, 8], strides = [1, 1, 1]} : vector<2x8x96xf32> to vector<2x8x8xf32>
    %210 = tpu.concatenate %206, %207, %208, %209 in 0 : vector<2x8x8xf32>, vector<2x8x8xf32>, vector<2x8x8xf32>, vector<2x8x8xf32> -> vector<8x8x8xf32>
    %211 = vector.shape_cast %204 : vector<16x96xf32> to vector<2x8x96xf32>
    %212 = vector.extract_strided_slice %211 {offsets = [0, 0, 32], sizes = [2, 8, 8], strides = [1, 1, 1]} : vector<2x8x96xf32> to vector<2x8x8xf32>
    %213 = vector.extract_strided_slice %211 {offsets = [0, 0, 40], sizes = [2, 8, 8], strides = [1, 1, 1]} : vector<2x8x96xf32> to vector<2x8x8xf32>
    %214 = vector.extract_strided_slice %211 {offsets = [0, 0, 48], sizes = [2, 8, 8], strides = [1, 1, 1]} : vector<2x8x96xf32> to vector<2x8x8xf32>
    %215 = vector.extract_strided_slice %211 {offsets = [0, 0, 56], sizes = [2, 8, 8], strides = [1, 1, 1]} : vector<2x8x96xf32> to vector<2x8x8xf32>
    %216 = tpu.concatenate %212, %213, %214, %215 in 0 : vector<2x8x8xf32>, vector<2x8x8xf32>, vector<2x8x8xf32>, vector<2x8x8xf32> -> vector<8x8x8xf32>
    %217 = vector.shape_cast %204 : vector<16x96xf32> to vector<2x8x96xf32>
    %218 = vector.extract_strided_slice %217 {offsets = [0, 0, 64], sizes = [2, 8, 8], strides = [1, 1, 1]} : vector<2x8x96xf32> to vector<2x8x8xf32>
    %219 = vector.extract_strided_slice %217 {offsets = [0, 0, 72], sizes = [2, 8, 8], strides = [1, 1, 1]} : vector<2x8x96xf32> to vector<2x8x8xf32>
    %220 = vector.extract_strided_slice %217 {offsets = [0, 0, 80], sizes = [2, 8, 8], strides = [1, 1, 1]} : vector<2x8x96xf32> to vector<2x8x8xf32>
    %221 = vector.extract_strided_slice %217 {offsets = [0, 0, 88], sizes = [2, 8, 8], strides = [1, 1, 1]} : vector<2x8x96xf32> to vector<2x8x8xf32>
    %222 = tpu.concatenate %218, %219, %220, %221 in 0 : vector<2x8x8xf32>, vector<2x8x8xf32>, vector<2x8x8xf32>, vector<2x8x8xf32> -> vector<8x8x8xf32>
    "tpu.trace_start"() <{level = 10 : i32, message = "nqd,nkd->nqk"}> : () -> ()
    %cst_47 = arith.constant dense<0.000000e+00> : vector<8x8x8xf32>
    %223 = tpu.matmul %210, %216, %cst_47 {dimension_numbers = #tpu.dot_dimension_numbers<[2], [2], [1], [1], [0, 0, 0, 1, 1, 1], [0], [0]>} : vector<8x8x8xf32>, vector<8x8x8xf32>, vector<8x8x8xf32> -> vector<8x8x8xf32>
    "tpu.trace_stop"() : () -> ()
    %cst_48 = arith.constant 0.353553385 : f32
    %224 = vector.broadcast %cst_48 : f32 to vector<8x8x8xf32>
    %225 = arith.mulf %223, %224 : vector<8x8x8xf32>
    %cst_49 = arith.constant dense<0xFF800000> : vector<8x8xf32>
    %226 = vector.multi_reduction <maximumf>, %225, %cst_49 [2] : vector<8x8x8xf32> to vector<8x8xf32>
    %227 = vector.shape_cast %226 : vector<8x8xf32> to vector<8x8x1xf32>
    %228 = vector.broadcast %227 : vector<8x8x1xf32> to vector<8x8x8xf32>
    %229 = arith.subf %225, %228 : vector<8x8x8xf32>
    %230 = math.exp %229 : vector<8x8x8xf32>
    %cst_50 = arith.constant dense<0.000000e+00> : vector<8x8xf32>
    %231 = vector.multi_reduction <add>, %230, %cst_50 [2] : vector<8x8x8xf32> to vector<8x8xf32>
    %232 = vector.shape_cast %231 : vector<8x8xf32> to vector<8x8x1xf32>
    %233 = vector.broadcast %232 : vector<8x8x1xf32> to vector<8x8x8xf32>
    %234 = arith.divf %230, %233 : vector<8x8x8xf32>
    "tpu.trace_start"() <{level = 10 : i32, message = "nqk,nkd->nqd"}> : () -> ()
    %cst_51 = arith.constant dense<0.000000e+00> : vector<8x8x8xf32>
    %235 = tpu.matmul %234, %222, %cst_51 {dimension_numbers = #tpu.dot_dimension_numbers<[2], [1], [1], [2], [0, 0, 0, 1, 1, 2], [0], [0]>} : vector<8x8x8xf32>, vector<8x8x8xf32>, vector<8x8x8xf32> -> vector<8x8x8xf32>
    "tpu.trace_stop"() : () -> ()
    %236 = vector.extract_strided_slice %235 {offsets = [0, 0, 0], sizes = [2, 8, 8], strides = [1, 1, 1]} : vector<8x8x8xf32> to vector<2x8x8xf32>
    %237 = vector.shape_cast %236 : vector<2x8x8xf32> to vector<16x8xf32>
    %238 = vector.extract_strided_slice %235 {offsets = [2, 0, 0], sizes = [2, 8, 8], strides = [1, 1, 1]} : vector<8x8x8xf32> to vector<2x8x8xf32>
    %239 = vector.shape_cast %238 : vector<2x8x8xf32> to vector<16x8xf32>
    %240 = vector.extract_strided_slice %235 {offsets = [4, 0, 0], sizes = [2, 8, 8], strides = [1, 1, 1]} : vector<8x8x8xf32> to vector<2x8x8xf32>
    %241 = vector.shape_cast %240 : vector<2x8x8xf32> to vector<16x8xf32>
    %242 = vector.extract_strided_slice %235 {offsets = [6, 0, 0], sizes = [2, 8, 8], strides = [1, 1, 1]} : vector<8x8x8xf32> to vector<2x8x8xf32>
    %243 = vector.shape_cast %242 : vector<2x8x8xf32> to vector<16x8xf32>
    %244 = tpu.concatenate %237, %239, %241, %243 in 1 : vector<16x8xf32>, vector<16x8xf32>, vector<16x8xf32>, vector<16x8xf32> -> vector<16x32xf32>
    %cst_52 = arith.constant dense<0.000000e+00> : vector<16x32xf32>
    %245 = tpu.matmul %244, %9, %cst_52 {dimension_numbers = #tpu.dot_dimension_numbers<[1], [0], [0], [1], [0, 0, 1, 1], [], []>} : vector<16x32xf32>, vector<32x32xf32>, vector<16x32xf32> -> vector<16x32xf32>
    %246 = vector.broadcast %5 : vector<1x32xf32> to vector<16x32xf32>
    %247 = arith.addf %245, %246 : vector<16x32xf32>
    %248 = arith.addf %82, %247 : vector<16x32xf32>
    %249 = vector.extract_strided_slice %248 {offsets = [0, 0], sizes = [8, 32], strides = [1, 1]} : vector<16x32xf32> to vector<8x32xf32>
    %250 = vector.extract_strided_slice %179 {offsets = [0, 0], sizes = [8, 32], strides = [1, 1]} : vector<16x32xf32> to vector<8x32xf32>
    %251 = vector.extract_strided_slice %248 {offsets = [8, 0], sizes = [8, 32], strides = [1, 1]} : vector<16x32xf32> to vector<8x32xf32>
    %252 = vector.extract_strided_slice %179 {offsets = [8, 0], sizes = [8, 32], strides = [1, 1]} : vector<16x32xf32> to vector<8x32xf32>
    %253 = tpu.concatenate %249, %250, %251, %252 in 1 : vector<8x32xf32>, vector<8x32xf32>, vector<8x32xf32>, vector<8x32xf32> -> vector<8x128xf32>
    %c0_53 = arith.constant 0 : index
    %c0_54 = arith.constant 0 : index
    %254 = vector.load %arg3[%c0_53, %c0_54] : memref<8x128xf32, #tpu.memory_space<vmem>>, vector<8x128xf32>
    tpu.vector_store %arg3[%c0_53, %c0_54], %253 {strides = array<i32>} : memref<8x128xf32, #tpu.memory_space<vmem>>, vector<8x128xf32>,
    return
  }
}

</mosaic_0001>

<llo_original>
// kernel: block_forward.1
$region0: #{block_forward.1}
  #allocation0 [shape = 'u32[]', space=smem, size = 0x4, offset = 0x4, fixed_abs, tag = 'smem constant byte address 0x4 - core index']
  #allocation1 [shape = 'u32[144,128]{1,0:T(1,128)}', space=vmem, size = 0x12000, scoped, tag = 'internal scratch']
  %s0 = inlined_call_operand.vmem [shape: f32[32,32], index: 0, kind: input, shape index: {}]
  %s1 = inlined_call_operand.vmem [shape: f32[128,96], index: 1, kind: input, shape index: {}]
  %s2 = inlined_call_operand.vmem [shape: f32[8,96], index: 2, kind: input, shape index: {}]
  %s3 = inlined_call_operand.vmem [shape: f32[8,128], index: 3, kind: output, shape index: {}]
  %s4 = sld [smem:[#allocation0]]
  $region22: #{block_forward.1} parent=0
    _
  %s6 = ssub.s32 1, %s4
  %s7 = scalar_select 0, %s6, %s4
  // Predicated region
  $region2: #{block_forward.1} parent=0 // pred_check
    _
  $region3: #{block_forward.1} parent=0 // pred_check_branch
    %9 = sbr.rel (0) target = $region5
  $region4: #{block_forward.1} parent=0 // pred_region
    _
  $region5: #{block_forward.1} parent=0 // pred_fallthru
    _
  // Predicated region
  $region6: #{block_forward.1} parent=0 // pred_check
    _
  $region7: #{block_forward.1} parent=0 // pred_check_branch
    %11 = sbr.rel (0) target = $region9
  $region8: #{block_forward.1} parent=0 // pred_region
    _
  $region9: #{block_forward.1} parent=0 // pred_fallthru
    _
  // Predicated region
  $region10: #{block_forward.1} parent=0 // pred_check
    _
  $region11: #{block_forward.1} parent=0 // pred_check_branch
    %13 = sbr.rel (0) target = $region13
  $region12: #{block_forward.1} parent=0 // pred_region
    _
  $region13: #{block_forward.1} parent=0 // pred_fallthru
    _
  %v14 = vld [vmem:[%s2] sm:$0x1]
  %v15 = vld [vmem:[%s2 + $0x1] sm:$0x1]
  %v16 = vld [vmem:[%s2 + $0x2] sm:$0x1]
  %v17 = vld [vmem:[%s2 + $0x3] sm:$0x1]
  %v18 = vld [vmem:[%s2 + $0x4] sm:$0x1]
  %v19 = vld [vmem:[%s2 + $0x5] sm:$0x1]
  %v20 = vld [vmem:[%s1] sm:$0xff]
  %v21 = vld [vmem:[%s1 + $0x8] sm:$0xff]
  %v22 = vld [vmem:[%s1 + $0x10] sm:$0xff]
  %v23 = vld [vmem:[%s1 + $0x18] sm:$0xff]
  %v24 = vld [vmem:[%s1 + $0x20] sm:$0xff]
  %v25 = vld [vmem:[%s1 + $0x28] sm:$0xff]
  %v26 = vld [vmem:[%s1 + $0x30] sm:$0xff]
  %v27 = vld [vmem:[%s1 + $0x38] sm:$0xff]
  %v28 = vld [vmem:[%s1 + $0x40] sm:$0xff]
  %v29 = vld [vmem:[%s1 + $0x48] sm:$0xff]
  %v30 = vld [vmem:[%s1 + $0x50] sm:$0xff]
  %v31 = vld [vmem:[%s1 + $0x58] sm:$0xff]
  %v32 = vld [vmem:[%s1 + $0x60] sm:$0xff]
  %v33 = vld [vmem:[%s1 + $0x68] sm:$0xff]
  %v34 = vld [vmem:[%s1 + $0x70] sm:$0xff]
  %v35 = vld [vmem:[%s1 + $0x78] sm:$0xff]
  %v36 = vld [vmem:[%s0] sm:$0xff]
  %v37 = vld [vmem:[%s0 + $0x8] sm:$0xff]
  %v38 = vld [vmem:[%s0 + $0x10] sm:$0xff]
  %v39 = vld [vmem:[%s0 + $0x18] sm:$0xff]
  %vm40 = vcmask 261120
  %v41 = vsel %vm40, %v36, 0.0
  %42 = vadd.xlane.f32.xlu0 %v41
  %v43 = vpop.xlane.xlu0 %42
  %v44 = vsel %vm40, %v37, 0.0
  %45 = vadd.xlane.f32.xlu0 %v44
  %v46 = vpop.xlane.xlu0 %45
  %v47 = vsel %vm40, %v38, 0.0
  %48 = vadd.xlane.f32.xlu0 %v47
  %v49 = vpop.xlane.xlu0 %48
  %v50 = vsel %vm40, %v39, 0.0
  %51 = vadd.xlane.f32.xlu0 %v50
  %v52 = vpop.xlane.xlu0 %51
  %v53 = vrcp.pop 32.0
  %v54 = vmul.f32 %v43, %v53
  %v55 = vmul.f32 %v46, %v53
  %v56 = vmul.f32 %v49, %v53
  %v57 = vmul.f32 %v52, %v53
  %v58 = vsub.f32 %v36, %v54
  %v59 = vsub.f32 %v37, %v55
  %v60 = vsub.f32 %v38, %v56
  %v61 = vsub.f32 %v39, %v57
  %v62 = vmul.f32 %v58, %v58
  %v63 = vmul.f32 %v59, %v59
  %v64 = vmul.f32 %v60, %v60
  %v65 = vmul.f32 %v61, %v61
  %v66 = vsel %vm40, %v62, 0.0
  %67 = vadd.xlane.f32.xlu0 %v66
  %v68 = vpop.xlane.xlu0 %67
  %v69 = vsel %vm40, %v63, 0.0
  %70 = vadd.xlane.f32.xlu0 %v69
  %v71 = vpop.xlane.xlu0 %70
  %v72 = vsel %vm40, %v64, 0.0
  %73 = vadd.xlane.f32.xlu0 %v72
  %v74 = vpop.xlane.xlu0 %73
  %v75 = vsel %vm40, %v65, 0.0
  %76 = vadd.xlane.f32.xlu0 %v75
  %v77 = vpop.xlane.xlu0 %76
  %v78 = vmul.f32 %v68, %v53
  %v79 = vmul.f32 %v71, %v53
  %v80 = vmul.f32 %v74, %v53
  %v81 = vmul.f32 %v77, %v53
  %v82 = vadd.f32 %v78, 1e-06
  %v83 = vadd.f32 %v79, 1e-06
  %v84 = vadd.f32 %v80, 1e-06
  %v85 = vadd.f32 %v81, 1e-06
  %v86 = vrsqrt.pop %v82
  %v87 = vrsqrt.pop %v83
  %v88 = vrsqrt.pop %v84
  %v89 = vrsqrt.pop %v85
  %v90 = vmul.f32 %v58, %v86
  %v91 = vmul.f32 %v59, %v87
  %v92 = vmul.f32 %v60, %v88
  %v93 = vmul.f32 %v61, %v89
  %v94 = vlaneseq
  %v95 = vshrl.u32 %v94, 7
  %v96 = vsub.s32 0, %v95
  %v97 = vrot.slane %v14, %v96
  %v98 = vmul.f32 %v90, %v97
  %v99 = vmul.f32 %v91, %v97
  %v100 = vmul.f32 %v92, %v97
  %v101 = vmul.f32 %v93, %v97
  %v102 = vlaneseq
  %v103 = vshrl.u32 %v102, 7
  %v104 = vsub.s32 0, %v103
  %v105 = vrot.slane %v15, %v104
  %v106 = vadd.f32 %v98, %v105
  %v107 = vadd.f32 %v99, %v105
  %v108 = vadd.f32 %v100, %v105
  %v109 = vadd.f32 %v101, %v105
  %v110 = vlaneseq
  %v111 = vshrl.u32 %v110, 7
  %v112 = vsub.s32 0, %v111
  %v113 = vrot.slane %v16, %v112
  %v115 = vsel %vm40, %v106, 0
  %v118 = vsel %vm40, %v107, 0
  %v121 = vsel %vm40, %v108, 0
  %v124 = vsel %vm40, %v109, 0
  %126 = vmatprep.subr.mxu0 0.0
  %127 = vmatpush1.msra.mxu0 %v20
  %128 = vmatprep.subr.mxu0 0.0
  %129 = vmatpush1.msra.mxu0 %v21
  %130 = vmatprep.subr.mxu0 0.0
  %131 = vmatpush1.msra.mxu0 %v22
  %132 = vmatprep.subr.mxu0 0.0
  %133 = vmatpush1.msra.mxu0 %v23
  %134 = vmatprep.subr.mxu0 0.0
  %135 = vmatpush1.msra.mxu0 0.0
  %136 = vmatprep.subr.mxu0 0.0
  %137 = vmatpush1.msra.mxu0 0.0
  %138 = vmatprep.subr.mxu0 0.0
  %139 = vmatpush1.msra.mxu0 0.0
  %140 = vmatprep.subr.mxu0 0.0
  %141 = vmatpush1.msra.mxu0 0.0
  %142 = vmatprep.subr.mxu0 0.0
  %143 = vmatpush1.msra.mxu0 0.0
  %144 = vmatprep.subr.mxu0 0.0
  %145 = vmatpush1.msra.mxu0 0.0
  %146 = vmatprep.subr.mxu0 0.0
  %147 = vmatpush1.msra.mxu0 0.0
  %148 = vmatprep.subr.mxu0 0.0
  %149 = vmatpush1.msra.mxu0 0.0
  %150 = vmatprep.subr.mxu0 0.0
  %151 = vmatpush1.msra.mxu0 0.0
  %152 = vmatprep.subr.mxu0 0.0
  %153 = vmatpush1.msra.mxu0 0.0
  %154 = vmatprep.subr.mxu0 0.0
  %155 = vmatpush1.msra.mxu0 0.0
  %156 = vmatprep.subr.mxu0 0.0
  %157 = vmatpush1.msra.mxu0 0.0
  %158 = vmatprep.subr.mxu0 0.0
  %159 = vmatpush1.msra.mxu0 0.0
  %160 = vmatprep.subr.mxu0 0.0
  %161 = vmatpush1.msra.mxu0 0.0
  %162 = vmatprep.subr.mxu0 0.0
  %163 = vmatpush1.msra.mxu0 0.0
  %164 = vmatprep.subr.mxu0 0.0
  %165 = vmatpush1.msra.mxu0 0.0
  %166 = vmatprep.subr.mxu0 0.0
  %167 = vmatpush1.msra.mxu0 0.0
  %168 = vmatprep.subr.mxu0 0.0
  %169 = vmatpush1.msra.mxu0 0.0
  %170 = vmatprep.subr.mxu0 0.0
  %171 = vmatpush1.msra.mxu0 0.0
  %172 = vmatprep.subr.mxu0 0.0
  %173 = vmatpush1.msra.mxu0 0.0
  %174 = vmatprep.subr.mxu0 0.0
  %175 = vmatpush1.msra.mxu0 0.0
  %176 = vmatprep.subr.mxu0 0.0
  %177 = vmatpush1.msra.mxu0 0.0
  %178 = vmatprep.subr.mxu0 0.0
  %179 = vmatpush1.msra.mxu0 0.0
  %180 = vmatprep.subr.mxu0 0.0
  %181 = vmatpush1.msra.mxu0 0.0
  %182 = vmatprep.subr.mxu0 0.0
  %183 = vmatpush1.msra.mxu0 0.0
  %184 = vmatprep.subr.mxu0 0.0
  %185 = vmatpush1.msra.mxu0 0.0
  %186 = vmatprep.subr.mxu0 0.0
  %187 = vmatpush1.msra.mxu0 0.0
  %188 = vmatprep.subr.mxu0 0.0
  %189 = vmatpush1.msra.mxu0 0.0
  %190 = vmatprep.mubr.f32.mxu0 0.0
  %191 = vmatmul.mubr.f32.gmra.mrb[0].mxu0 %v115
  %v192 = vpop.f32.mrb[0].mxu0
  %v193 = vadd.f32 %v113, %v192
  %v194 = vpop.f32.mrb[0].mxu0
  %195 = vmatprep.mubr.f32.mxu0 0.0
  %196 = vmatmul.mubr.f32.gmra.mrb[0].mxu0 %v118
  %v197 = vpop.f32.mrb[0].mxu0
  %v198 = vadd.f32 %v113, %v197
  %v199 = vpop.f32.mrb[0].mxu0
  %200 = vmatprep.mubr.f32.mxu0 0.0
  %201 = vmatmul.mubr.f32.gmra.mrb[0].mxu0 %v121
  %v202 = vpop.f32.mrb[0].mxu0
  %v203 = vadd.f32 %v113, %v202
  %v204 = vpop.f32.mrb[0].mxu0
  %205 = vmatprep.mubr.f32.mxu0 0.0
  %206 = vmatmul.mubr.f32.gmra.mrb[0].mxu0 %v124
  %v207 = vpop.f32.mrb[0].mxu0
  %v208 = vadd.f32 %v113, %v207
  %v209 = vpop.f32.mrb[0].mxu0
  %210 = vdwg.mxu0
  %215 = vrot.lane.b32.xlu0 %v193, 120
  %v216 = vpop.permute.xlu0 %215
  %217 = vrot.lane.b32.xlu0 %v198, 120
  %v218 = vpop.permute.xlu0 %217
  %219 = vrot.lane.b32.xlu0 %v203, 120
  %v220 = vpop.permute.xlu0 %219
  %221 = vrot.lane.b32.xlu0 %v208, 120
  %v222 = vpop.permute.xlu0 %221
  %223 = vrot.lane.b32.xlu0 %v193, 112
  %v224 = vpop.permute.xlu0 %223
  %225 = vrot.lane.b32.xlu0 %v198, 112
  %v226 = vpop.permute.xlu0 %225
  %227 = vrot.lane.b32.xlu0 %v203, 112
  %v228 = vpop.permute.xlu0 %227
  %229 = vrot.lane.b32.xlu0 %v208, 112
  %v230 = vpop.permute.xlu0 %229
  %231 = vrot.lane.b32.xlu0 %v193, 104
  %v232 = vpop.permute.xlu0 %231
  %233 = vrot.lane.b32.xlu0 %v198, 104
  %v234 = vpop.permute.xlu0 %233
  %235 = vrot.lane.b32.xlu0 %v203, 104
  %v236 = vpop.permute.xlu0 %235
  %237 = vrot.lane.b32.xlu0 %v208, 104
  %v238 = vpop.permute.xlu0 %237
  %239 = vrot.lane.b32.xlu0 %v193, 96
  %v240 = vpop.permute.xlu0 %239
  %241 = vrot.lane.b32.xlu0 %v198, 96
  %v242 = vpop.permute.xlu0 %241
  %vm243 = vcmask 64512
  %v244 = vsel %vm243, %v193, 0
  %v246 = vsel %vm243, %v198, 0
  %v248 = vsel %vm243, %v240, 0
  %v250 = vsel %vm243, %v242, 0
  %252 = vmatprep.subr.mxu0 0.0
  %253 = vmatpush1.xpose.msra.mxu0 %v248
  %254 = vmatprep.subr.mxu0 0.0
  %255 = vmatpush1.xpose.msra.mxu0 %v250
  %256 = vmatprep.subr.mxu0 0.0
  %257 = vmatpush1.xpose.msra.mxu0 0.0
  %258 = vmatprep.subr.mxu0 0.0
  %259 = vmatpush1.xpose.msra.mxu0 0.0
  %260 = vmatprep.subr.mxu0 0.0
  %261 = vmatpush1.xpose.msra.mxu0 0.0
  %262 = vmatprep.subr.mxu0 0.0
  %263 = vmatpush1.xpose.msra.mxu0 0.0
  %264 = vmatprep.subr.mxu0 0.0
  %265 = vmatpush1.xpose.msra.mxu0 0.0
  %266 = vmatprep.subr.mxu0 0.0
  %267 = vmatpush1.xpose.msra.mxu0 0.0
  %268 = vmatprep.subr.mxu0 0.0
  %269 = vmatpush1.xpose.msra.mxu0 0.0
  %270 = vmatprep.subr.mxu0 0.0
  %271 = vmatpush1.xpose.msra.mxu0 0.0
  %272 = vmatprep.subr.mxu0 0.0
  %273 = vmatpush1.xpose.msra.mxu0 0.0
  %274 = vmatprep.subr.mxu0 0.0
  %275 = vmatpush1.xpose.msra.mxu0 0.0
  %276 = vmatprep.subr.mxu0 0.0
  %277 = vmatpush1.xpose.msra.mxu0 0.0
  %278 = vmatprep.subr.mxu0 0.0
  %279 = vmatpush1.xpose.msra.mxu0 0.0
  %280 = vmatprep.subr.mxu0 0.0
  %281 = vmatpush1.xpose.msra.mxu0 0.0
  %282 = vmatprep.subr.mxu0 0.0
  %283 = vmatpush1.xpose.msra.mxu0 0.0
  %284 = vmatprep.subr.mxu0 0.0
  %285 = vmatpush1.xpose.msra.mxu0 0.0
  %286 = vmatprep.subr.mxu0 0.0
  %287 = vmatpush1.xpose.msra.mxu0 0.0
  %288 = vmatprep.subr.mxu0 0.0
  %289 = vmatpush1.xpose.msra.mxu0 0.0
  %290 = vmatprep.subr.mxu0 0.0
  %291 = vmatpush1.xpose.msra.mxu0 0.0
  %292 = vmatprep.subr.mxu0 0.0
  %293 = vmatpush1.xpose.msra.mxu0 0.0
  %294 = vmatprep.subr.mxu0 0.0
  %295 = vmatpush1.xpose.msra.mxu0 0.0
  %296 = vmatprep.subr.mxu0 0.0
  %297 = vmatpush1.xpose.msra.mxu0 0.0
  %298 = vmatprep.subr.mxu0 0.0
  %299 = vmatpush1.xpose.msra.mxu0 0.0
  %300 = vmatprep.subr.mxu0 0.0
  %301 = vmatpush1.xpose.msra.mxu0 0.0
  %302 = vmatprep.subr.mxu0 0.0
  %303 = vmatpush1.xpose.msra.mxu0 0.0
  %304 = vmatprep.subr.mxu0 0.0
  %305 = vmatpush1.xpose.msra.mxu0 0.0
  %306 = vmatprep.subr.mxu0 0.0
  %307 = vmatpush1.xpose.msra.mxu0 0.0
  %308 = vmatprep.subr.mxu0 0.0
  %309 = vmatpush1.xpose.msra.mxu0 0.0
  %310 = vmatprep.subr.mxu0 0.0
  %311 = vmatpush1.xpose.msra.mxu0 0.0
  %312 = vmatprep.subr.mxu0 0.0
  %313 = vmatpush1.xpose.msra.mxu0 0.0
  %314 = vmatprep.subr.mxu0 0.0
  %315 = vmatpush1.xpose.msra.mxu0 0.0
  %316 = vmatprep.mubr.f32.mxu0 0.0
  %317 = vmatmul.mubr.f32.gmra.mrb[0].mxu0 %v244
  %v318 = vpop.f32.mrb[0].mxu0
  %v319 = vadd.f32 0.0, %v318
  %v320 = vpop.f32.mrb[0].mxu0
  %321 = vmatprep.mubr.f32.mxu0 0.0
  %322 = vmatmul.mubr.f32.gmra.mrb[0].mxu0 %v246
  %v323 = vpop.f32.mrb[0].mxu0
  %v324 = vadd.f32 0.0, %v323
  %v325 = vpop.f32.mrb[0].mxu0
  %326 = vdwg.mxu0
  %327 = vrot.lane.b32.xlu0 %v203, 96
  %v328 = vpop.permute.xlu0 %327
  %329 = vrot.lane.b32.xlu0 %v208, 96
  %v330 = vpop.permute.xlu0 %329
  %v331 = vsel %vm243, %v203, 0
  %v333 = vsel %vm243, %v208, 0
  %v335 = vsel %vm243, %v328, 0
  %v337 = vsel %vm243, %v330, 0
  %339 = vmatprep.subr.mxu0 0.0
  %340 = vmatpush1.xpose.msra.mxu0 %v335
  %341 = vmatprep.subr.mxu0 0.0
  %342 = vmatpush1.xpose.msra.mxu0 %v337
  %343 = vmatprep.subr.mxu0 0.0
  %344 = vmatpush1.xpose.msra.mxu0 0.0
  %345 = vmatprep.subr.mxu0 0.0
  %346 = vmatpush1.xpose.msra.mxu0 0.0
  %347 = vmatprep.subr.mxu0 0.0
  %348 = vmatpush1.xpose.msra.mxu0 0.0
  %349 = vmatprep.subr.mxu0 0.0
  %350 = vmatpush1.xpose.msra.mxu0 0.0
  %351 = vmatprep.subr.mxu0 0.0
  %352 = vmatpush1.xpose.msra.mxu0 0.0
  %353 = vmatprep.subr.mxu0 0.0
  %354 = vmatpush1.xpose.msra.mxu0 0.0
  %355 = vmatprep.subr.mxu0 0.0
  %356 = vmatpush1.xpose.msra.mxu0 0.0
  %357 = vmatprep.subr.mxu0 0.0
  %358 = vmatpush1.xpose.msra.mxu0 0.0
  %359 = vmatprep.subr.mxu0 0.0
  %360 = vmatpush1.xpose.msra.mxu0 0.0
  %361 = vmatprep.subr.mxu0 0.0
  %362 = vmatpush1.xpose.msra.mxu0 0.0
  %363 = vmatprep.subr.mxu0 0.0
  %364 = vmatpush1.xpose.msra.mxu0 0.0
  %365 = vmatprep.subr.mxu0 0.0
  %366 = vmatpush1.xpose.msra.mxu0 0.0
  %367 = vmatprep.subr.mxu0 0.0
  %368 = vmatpush1.xpose.msra.mxu0 0.0
  %369 = vmatprep.subr.mxu0 0.0
  %370 = vmatpush1.xpose.msra.mxu0 0.0
  %371 = vmatprep.subr.mxu0 0.0
  %372 = vmatpush1.xpose.msra.mxu0 0.0
  %373 = vmatprep.subr.mxu0 0.0
  %374 = vmatpush1.xpose.msra.mxu0 0.0
  %375 = vmatprep.subr.mxu0 0.0
  %376 = vmatpush1.xpose.msra.mxu0 0.0
  %377 = vmatprep.subr.mxu0 0.0
  %378 = vmatpush1.xpose.msra.mxu0 0.0
  %379 = vmatprep.subr.mxu0 0.0
  %380 = vmatpush1.xpose.msra.mxu0 0.0
  %381 = vmatprep.subr.mxu0 0.0
  %382 = vmatpush1.xpose.msra.mxu0 0.0
  %383 = vmatprep.subr.mxu0 0.0
  %384 = vmatpush1.xpose.msra.mxu0 0.0
  %385 = vmatprep.subr.mxu0 0.0
  %386 = vmatpush1.xpose.msra.mxu0 0.0
  %387 = vmatprep.subr.mxu0 0.0
  %388 = vmatpush1.xpose.msra.mxu0 0.0
  %389 = vmatprep.subr.mxu0 0.0
  %390 = vmatpush1.xpose.msra.mxu0 0.0
  %391 = vmatprep.subr.mxu0 0.0
  %392 = vmatpush1.xpose.msra.mxu0 0.0
  %393 = vmatprep.subr.mxu0 0.0
  %394 = vmatpush1.xpose.msra.mxu0 0.0
  %395 = vmatprep.subr.mxu0 0.0
  %396 = vmatpush1.xpose.msra.mxu0 0.0
  %397 = vmatprep.subr.mxu0 0.0
  %398 = vmatpush1.xpose.msra.mxu0 0.0
  %399 = vmatprep.subr.mxu0 0.0
  %400 = vmatpush1.xpose.msra.mxu0 0.0
  %401 = vmatprep.subr.mxu0 0.0
  %402 = vmatpush1.xpose.msra.mxu0 0.0
  %403 = vmatprep.mubr.f32.mxu0 0.0
  %404 = vmatmul.mubr.f32.gmra.mrb[0].mxu0 %v331
  %v405 = vpop.f32.mrb[0].mxu0
  %v406 = vadd.f32 0.0, %v405
  %v407 = vpop.f32.mrb[0].mxu0
  %408 = vmatprep.mubr.f32.mxu0 0.0
  %409 = vmatmul.mubr.f32.gmra.mrb[0].mxu0 %v333
  %v410 = vpop.f32.mrb[0].mxu0
  %v411 = vadd.f32 0.0, %v410
  %v412 = vpop.f32.mrb[0].mxu0
  %413 = vdwg.mxu0
  %414 = vrot.lane.b32.xlu0 %v216, 96
  %v415 = vpop.permute.xlu0 %414
  %416 = vrot.lane.b32.xlu0 %v218, 96
  %v417 = vpop.permute.xlu0 %416
  %v418 = vsel %vm243, %v216, 0
  %v420 = vsel %vm243, %v218, 0
  %v422 = vsel %vm243, %v415, 0
  %v424 = vsel %vm243, %v417, 0
  %426 = vmatprep.subr.mxu0 0.0
  %427 = vmatpush1.xpose.msra.mxu0 %v422
  %428 = vmatprep.subr.mxu0 0.0
  %429 = vmatpush1.xpose.msra.mxu0 %v424
  %430 = vmatprep.subr.mxu0 0.0
  %431 = vmatpush1.xpose.msra.mxu0 0.0
  %432 = vmatprep.subr.mxu0 0.0
  %433 = vmatpush1.xpose.msra.mxu0 0.0
  %434 = vmatprep.subr.mxu0 0.0
  %435 = vmatpush1.xpose.msra.mxu0 0.0
  %436 = vmatprep.subr.mxu0 0.0
  %437 = vmatpush1.xpose.msra.mxu0 0.0
  %438 = vmatprep.subr.mxu0 0.0
  %439 = vmatpush1.xpose.msra.mxu0 0.0
  %440 = vmatprep.subr.mxu0 0.0
  %441 = vmatpush1.xpose.msra.mxu0 0.0
  %442 = vmatprep.subr.mxu0 0.0
  %443 = vmatpush1.xpose.msra.mxu0 0.0
  %444 = vmatprep.subr.mxu0 0.0
  %445 = vmatpush1.xpose.msra.mxu0 0.0
  %446 = vmatprep.subr.mxu0 0.0
  %447 = vmatpush1.xpose.msra.mxu0 0.0
  %448 = vmatprep.subr.mxu0 0.0
  %449 = vmatpush1.xpose.msra.mxu0 0.0
  %450 = vmatprep.subr.mxu0 0.0
  %451 = vmatpush1.xpose.msra.mxu0 0.0
  %452 = vmatprep.subr.mxu0 0.0
  %453 = vmatpush1.xpose.msra.mxu0 0.0
  %454 = vmatprep.subr.mxu0 0.0
  %455 = vmatpush1.xpose.msra.mxu0 0.0
  %456 = vmatprep.subr.mxu0 0.0
  %457 = vmatpush1.xpose.msra.mxu0 0.0
  %458 = vmatprep.subr.mxu0 0.0
  %459 = vmatpush1.xpose.msra.mxu0 0.0
  %460 = vmatprep.subr.mxu0 0.0
  %461 = vmatpush1.xpose.msra.mxu0 0.0
  %462 = vmatprep.subr.mxu0 0.0
  %463 = vmatpush1.xpose.msra.mxu0 0.0
  %464 = vmatprep.subr.mxu0 0.0
  %465 = vmatpush1.xpose.msra.mxu0 0.0
  %466 = vmatprep.subr.mxu0 0.0
  %467 = vmatpush1.xpose.msra.mxu0 0.0
  %468 = vmatprep.subr.mxu0 0.0
  %469 = vmatpush1.xpose.msra.mxu0 0.0
  %470 = vmatprep.subr.mxu0 0.0
  %471 = vmatpush1.xpose.msra.mxu0 0.0
  %472 = vmatprep.subr.mxu0 0.0
  %473 = vmatpush1.xpose.msra.mxu0 0.0
  %474 = vmatprep.subr.mxu0 0.0
  %475 = vmatpush1.xpose.msra.mxu0 0.0
  %476 = vmatprep.subr.mxu0 0.0
  %477 = vmatpush1.xpose.msra.mxu0 0.0
  %478 = vmatprep.subr.mxu0 0.0
  %479 = vmatpush1.xpose.msra.mxu0 0.0
  %480 = vmatprep.subr.mxu0 0.0
  %481 = vmatpush1.xpose.msra.mxu0 0.0
  %482 = vmatprep.subr.mxu0 0.0
  %483 = vmatpush1.xpose.msra.mxu0 0.0
  %484 = vmatprep.subr.mxu0 0.0
  %485 = vmatpush1.xpose.msra.mxu0 0.0
  %486 = vmatprep.subr.mxu0 0.0
  %487 = vmatpush1.xpose.msra.mxu0 0.0
  %488 = vmatprep.subr.mxu0 0.0
  %489 = vmatpush1.xpose.msra.mxu0 0.0
  %490 = vmatprep.mubr.f32.mxu0 0.0
  %491 = vmatmul.mubr.f32.gmra.mrb[0].mxu0 %v418
  %v492 = vpop.f32.mrb[0].mxu0
  %v493 = vadd.f32 0.0, %v492
  %v494 = vpop.f32.mrb[0].mxu0
  %495 = vmatprep.mubr.f32.mxu0 0.0
  %496 = vmatmul.mubr.f32.gmra.mrb[0].mxu0 %v420
  %v497 = vpop.f32.mrb[0].mxu0
  %v498 = vadd.f32 0.0, %v497
  %v499 = vpop.f32.mrb[0].mxu0
  %500 = vdwg.mxu0
  %501 = vrot.lane.b32.xlu0 %v220, 96
  %v502 = vpop.permute.xlu0 %501
  %503 = vrot.lane.b32.xlu0 %v222, 96
  %v504 = vpop.permute.xlu0 %503
  %v505 = vsel %vm243, %v220, 0
  %v507 = vsel %vm243, %v222, 0
  %v509 = vsel %vm243, %v502, 0
  %v511 = vsel %vm243, %v504, 0
  %513 = vmatprep.subr.mxu0 0.0
  %514 = vmatpush1.xpose.msra.mxu0 %v509
  %515 = vmatprep.subr.mxu0 0.0
  %516 = vmatpush1.xpose.msra.mxu0 %v511
  %517 = vmatprep.subr.mxu0 0.0
  %518 = vmatpush1.xpose.msra.mxu0 0.0
  %519 = vmatprep.subr.mxu0 0.0
  %520 = vmatpush1.xpose.msra.mxu0 0.0
  %521 = vmatprep.subr.mxu0 0.0
  %522 = vmatpush1.xpose.msra.mxu0 0.0
  %523 = vmatprep.subr.mxu0 0.0
  %524 = vmatpush1.xpose.msra.mxu0 0.0
  %525 = vmatprep.subr.mxu0 0.0
  %526 = vmatpush1.xpose.msra.mxu0 0.0
  %527 = vmatprep.subr.mxu0 0.0
  %528 = vmatpush1.xpose.msra.mxu0 0.0
  %529 = vmatprep.subr.mxu0 0.0
  %530 = vmatpush1.xpose.msra.mxu0 0.0
  %531 = vmatprep.subr.mxu0 0.0
  %532 = vmatpush1.xpose.msra.mxu0 0.0
  %533 = vmatprep.subr.mxu0 0.0
  %534 = vmatpush1.xpose.msra.mxu0 0.0
  %535 = vmatprep.subr.mxu0 0.0
  %536 = vmatpush1.xpose.msra.mxu0 0.0
  %537 = vmatprep.subr.mxu0 0.0
  %538 = vmatpush1.xpose.msra.mxu0 0.0
  %539 = vmatprep.subr.mxu0 0.0
  %540 = vmatpush1.xpose.msra.mxu0 0.0
  %541 = vmatprep.subr.mxu0 0.0
  %542 = vmatpush1.xpose.msra.mxu0 0.0
  %543 = vmatprep.subr.mxu0 0.0
  %544 = vmatpush1.xpose.msra.mxu0 0.0
  %545 = vmatprep.subr.mxu0 0.0
  %546 = vmatpush1.xpose.msra.mxu0 0.0
  %547 = vmatprep.subr.mxu0 0.0
  %548 = vmatpush1.xpose.msra.mxu0 0.0
  %549 = vmatprep.subr.mxu0 0.0
  %550 = vmatpush1.xpose.msra.mxu0 0.0
  %551 = vmatprep.subr.mxu0 0.0
  %552 = vmatpush1.xpose.msra.mxu0 0.0
  %553 = vmatprep.subr.mxu0 0.0
  %554 = vmatpush1.xpose.msra.mxu0 0.0
  %555 = vmatprep.subr.mxu0 0.0
  %556 = vmatpush1.xpose.msra.mxu0 0.0
  %557 = vmatprep.subr.mxu0 0.0
  %558 = vmatpush1.xpose.msra.mxu0 0.0
  %559 = vmatprep.subr.mxu0 0.0
  %560 = vmatpush1.xpose.msra.mxu0 0.0
  %561 = vmatprep.subr.mxu0 0.0
  %562 = vmatpush1.xpose.msra.mxu0 0.0
  %563 = vmatprep.subr.mxu0 0.0
  %564 = vmatpush1.xpose.msra.mxu0 0.0
  %565 = vmatprep.subr.mxu0 0.0
  %566 = vmatpush1.xpose.msra.mxu0 0.0
  %567 = vmatprep.subr.mxu0 0.0
  %568 = vmatpush1.xpose.msra.mxu0 0.0
  %569 = vmatprep.subr.mxu0 0.0
  %570 = vmatpush1.xpose.msra.mxu0 0.0
  %571 = vmatprep.subr.mxu0 0.0
  %572 = vmatpush1.xpose.msra.mxu0 0.0
  %573 = vmatprep.subr.mxu0 0.0
  %574 = vmatpush1.xpose.msra.mxu0 0.0
  %575 = vmatprep.subr.mxu0 0.0
  %576 = vmatpush1.xpose.msra.mxu0 0.0
  %577 = vmatprep.mubr.f32.mxu0 0.0
  %578 = vmatmul.mubr.f32.gmra.mrb[0].mxu0 %v505
  %v579 = vpop.f32.mrb[0].mxu0
  %v580 = vadd.f32 0.0, %v579
  %v581 = vpop.f32.mrb[0].mxu0
  %582 = vmatprep.mubr.f32.mxu0 0.0
  %583 = vmatmul.mubr.f32.gmra.mrb[0].mxu0 %v507
  %v584 = vpop.f32.mrb[0].mxu0
  %v585 = vadd.f32 0.0, %v584
  %v586 = vpop.f32.mrb[0].mxu0
  %587 = vdwg.mxu0
  %588 = vrot.lane.b32.xlu0 %v224, 96
  %v589 = vpop.permute.xlu0 %588
  %590 = vrot.lane.b32.xlu0 %v226, 96
  %v591 = vpop.permute.xlu0 %590
  %v592 = vsel %vm243, %v224, 0
  %v594 = vsel %vm243, %v226, 0
  %v596 = vsel %vm243, %v589, 0
  %v598 = vsel %vm243, %v591, 0
  %600 = vmatprep.subr.mxu0 0.0
  %601 = vmatpush1.xpose.msra.mxu0 %v596
  %602 = vmatprep.subr.mxu0 0.0
  %603 = vmatpush1.xpose.msra.mxu0 %v598
  %604 = vmatprep.subr.mxu0 0.0
  %605 = vmatpush1.xpose.msra.mxu0 0.0
  %606 = vmatprep.subr.mxu0 0.0
  %607 = vmatpush1.xpose.msra.mxu0 0.0
  %608 = vmatprep.subr.mxu0 0.0
  %609 = vmatpush1.xpose.msra.mxu0 0.0
  %610 = vmatprep.subr.mxu0 0.0
  %611 = vmatpush1.xpose.msra.mxu0 0.0
  %612 = vmatprep.subr.mxu0 0.0
  %613 = vmatpush1.xpose.msra.mxu0 0.0
  %614 = vmatprep.subr.mxu0 0.0
  %615 = vmatpush1.xpose.msra.mxu0 0.0
  %616 = vmatprep.subr.mxu0 0.0
  %617 = vmatpush1.xpose.msra.mxu0 0.0
  %618 = vmatprep.subr.mxu0 0.0
  %619 = vmatpush1.xpose.msra.mxu0 0.0
  %620 = vmatprep.subr.mxu0 0.0
  %621 = vmatpush1.xpose.msra.mxu0 0.0
  %622 = vmatprep.subr.mxu0 0.0
  %623 = vmatpush1.xpose.msra.mxu0 0.0
  %624 = vmatprep.subr.mxu0 0.0
  %625 = vmatpush1.xpose.msra.mxu0 0.0
  %626 = vmatprep.subr.mxu0 0.0
  %627 = vmatpush1.xpose.msra.mxu0 0.0
  %628 = vmatprep.subr.mxu0 0.0
  %629 = vmatpush1.xpose.msra.mxu0 0.0
  %630 = vmatprep.subr.mxu0 0.0
  %631 = vmatpush1.xpose.msra.mxu0 0.0
  %632 = vmatprep.subr.mxu0 0.0
  %633 = vmatpush1.xpose.msra.mxu0 0.0
  %634 = vmatprep.subr.mxu0 0.0
  %635 = vmatpush1.xpose.msra.mxu0 0.0
  %636 = vmatprep.subr.mxu0 0.0
  %637 = vmatpush1.xpose.msra.mxu0 0.0
  %638 = vmatprep.subr.mxu0 0.0
  %639 = vmatpush1.xpose.msra.mxu0 0.0
  %640 = vmatprep.subr.mxu0 0.0
  %641 = vmatpush1.xpose.msra.mxu0 0.0
  %642 = vmatprep.subr.mxu0 0.0
  %643 = vmatpush1.xpose.msra.mxu0 0.0
  %644 = vmatprep.subr.mxu0 0.0
  %645 = vmatpush1.xpose.msra.mxu0 0.0
  %646 = vmatprep.subr.mxu0 0.0
  %647 = vmatpush1.xpose.msra.mxu0 0.0
  %648 = vmatprep.subr.mxu0 0.0
  %649 = vmatpush1.xpose.msra.mxu0 0.0
  %650 = vmatprep.subr.mxu0 0.0
  %651 = vmatpush1.xpose.msra.mxu0 0.0
  %652 = vmatprep.subr.mxu0 0.0
  %653 = vmatpush1.xpose.msra.mxu0 0.0
  %654 = vmatprep.subr.mxu0 0.0
  %655 = vmatpush1.xpose.msra.mxu0 0.0
  %656 = vmatprep.subr.mxu0 0.0
  %657 = vmatpush1.xpose.msra.mxu0 0.0
  %658 = vmatprep.subr.mxu0 0.0
  %659 = vmatpush1.xpose.msra.mxu0 0.0
  %660 = vmatprep.subr.mxu0 0.0
  %661 = vmatpush1.xpose.msra.mxu0 0.0
  %662 = vmatprep.subr.mxu0 0.0
  %663 = vmatpush1.xpose.msra.mxu0 0.0
  %664 = vmatprep.mubr.f32.mxu0 0.0
  %665 = vmatmul.mubr.f32.gmra.mrb[0].mxu0 %v592
  %v666 = vpop.f32.mrb[0].mxu0
  %v667 = vadd.f32 0.0, %v666
  %v668 = vpop.f32.mrb[0].mxu0
  %669 = vmatprep.mubr.f32.mxu0 0.0
  %670 = vmatmul.mubr.f32.gmra.mrb[0].mxu0 %v594
  %v671 = vpop.f32.mrb[0].mxu0
  %v672 = vadd.f32 0.0, %v671
  %v673 = vpop.f32.mrb[0].mxu0
  %674 = vdwg.mxu0
  %675 = vrot.lane.b32.xlu0 %v228, 96
  %v676 = vpop.permute.xlu0 %675
  %677 = vrot.lane.b32.xlu0 %v230, 96
  %v678 = vpop.permute.xlu0 %677
  %v679 = vsel %vm243, %v228, 0
  %v681 = vsel %vm243, %v230, 0
  %v683 = vsel %vm243, %v676, 0
  %v685 = vsel %vm243, %v678, 0
  %687 = vmatprep.subr.mxu0 0.0
  %688 = vmatpush1.xpose.msra.mxu0 %v683
  %689 = vmatprep.subr.mxu0 0.0
  %690 = vmatpush1.xpose.msra.mxu0 %v685
  %691 = vmatprep.subr.mxu0 0.0
  %692 = vmatpush1.xpose.msra.mxu0 0.0
  %693 = vmatprep.subr.mxu0 0.0
  %694 = vmatpush1.xpose.msra.mxu0 0.0
  %695 = vmatprep.subr.mxu0 0.0
  %696 = vmatpush1.xpose.msra.mxu0 0.0
  %697 = vmatprep.subr.mxu0 0.0
  %698 = vmatpush1.xpose.msra.mxu0 0.0
  %699 = vmatprep.subr.mxu0 0.0
  %700 = vmatpush1.xpose.msra.mxu0 0.0
  %701 = vmatprep.subr.mxu0 0.0
  %702 = vmatpush1.xpose.msra.mxu0 0.0
  %703 = vmatprep.subr.mxu0 0.0
  %704 = vmatpush1.xpose.msra.mxu0 0.0
  %705 = vmatprep.subr.mxu0 0.0
  %706 = vmatpush1.xpose.msra.mxu0 0.0
  %707 = vmatprep.subr.mxu0 0.0
  %708 = vmatpush1.xpose.msra.mxu0 0.0
  %709 = vmatprep.subr.mxu0 0.0
  %710 = vmatpush1.xpose.msra.mxu0 0.0
  %711 = vmatprep.subr.mxu0 0.0
  %712 = vmatpush1.xpose.msra.mxu0 0.0
  %713 = vmatprep.subr.mxu0 0.0
  %714 = vmatpush1.xpose.msra.mxu0 0.0
  %715 = vmatprep.subr.mxu0 0.0
  %716 = vmatpush1.xpose.msra.mxu0 0.0
  %717 = vmatprep.subr.mxu0 0.0
  %718 = vmatpush1.xpose.msra.mxu0 0.0
  %719 = vmatprep.subr.mxu0 0.0
  %720 = vmatpush1.xpose.msra.mxu0 0.0
  %721 = vmatprep.subr.mxu0 0.0
  %722 = vmatpush1.xpose.msra.mxu0 0.0
  %723 = vmatprep.subr.mxu0 0.0
  %724 = vmatpush1.xpose.msra.mxu0 0.0
  %725 = vmatprep.subr.mxu0 0.0
  %726 = vmatpush1.xpose.msra.mxu0 0.0
  %727 = vmatprep.subr.mxu0 0.0
  %728 = vmatpush1.xpose.msra.mxu0 0.0
  %729 = vmatprep.subr.mxu0 0.0
  %730 = vmatpush1.xpose.msra.mxu0 0.0
  %731 = vmatprep.subr.mxu0 0.0
  %732 = vmatpush1.xpose.msra.mxu0 0.0
  %733 = vmatprep.subr.mxu0 0.0
  %734 = vmatpush1.xpose.msra.mxu0 0.0
  %735 = vmatprep.subr.mxu0 0.0
  %736 = vmatpush1.xpose.msra.mxu0 0.0
  %737 = vmatprep.subr.mxu0 0.0
  %738 = vmatpush1.xpose.msra.mxu0 0.0
  %739 = vmatprep.subr.mxu0 0.0
  %740 = vmatpush1.xpose.msra.mxu0 0.0
  %741 = vmatprep.subr.mxu0 0.0
  %742 = vmatpush1.xpose.msra.mxu0 0.0
  %743 = vmatprep.subr.mxu0 0.0
  %744 = vmatpush1.xpose.msra.mxu0 0.0
  %745 = vmatprep.subr.mxu0 0.0
  %746 = vmatpush1.xpose.msra.mxu0 0.0
  %747 = vmatprep.subr.mxu0 0.0
  %748 = vmatpush1.xpose.msra.mxu0 0.0
  %749 = vmatprep.subr.mxu0 0.0
  %750 = vmatpush1.xpose.msra.mxu0 0.0
  %751 = vmatprep.mubr.f32.mxu0 0.0
  %752 = vmatmul.mubr.f32.gmra.mrb[0].mxu0 %v679
  %v753 = vpop.f32.mrb[0].mxu0
  %v754 = vadd.f32 0.0, %v753
  %v755 = vpop.f32.mrb[0].mxu0
  %756 = vmatprep.mubr.f32.mxu0 0.0
  %757 = vmatmul.mubr.f32.gmra.mrb[0].mxu0 %v681
  %v758 = vpop.f32.mrb[0].mxu0
  %v759 = vadd.f32 0.0, %v758
  %v760 = vpop.f32.mrb[0].mxu0
  %761 = vdwg.mxu0
  %762 = vrot.lane.b32.xlu0 %v232, 96
  %v763 = vpop.permute.xlu0 %762
  %764 = vrot.lane.b32.xlu0 %v234, 96
  %v765 = vpop.permute.xlu0 %764
  %v766 = vsel %vm243, %v232, 0
  %v768 = vsel %vm243, %v234, 0
  %v770 = vsel %vm243, %v763, 0
  %v772 = vsel %vm243, %v765, 0
  %774 = vmatprep.subr.mxu0 0.0
  %775 = vmatpush1.xpose.msra.mxu0 %v770
  %776 = vmatprep.subr.mxu0 0.0
  %777 = vmatpush1.xpose.msra.mxu0 %v772
  %778 = vmatprep.subr.mxu0 0.0
  %779 = vmatpush1.xpose.msra.mxu0 0.0
  %780 = vmatprep.subr.mxu0 0.0
  %781 = vmatpush1.xpose.msra.mxu0 0.0
  %782 = vmatprep.subr.mxu0 0.0
  %783 = vmatpush1.xpose.msra.mxu0 0.0
  %784 = vmatprep.subr.mxu0 0.0
  %785 = vmatpush1.xpose.msra.mxu0 0.0
  %786 = vmatprep.subr.mxu0 0.0
  %787 = vmatpush1.xpose.msra.mxu0 0.0
  %788 = vmatprep.subr.mxu0 0.0
  %789 = vmatpush1.xpose.msra.mxu0 0.0
  %790 = vmatprep.subr.mxu0 0.0
  %791 = vmatpush1.xpose.msra.mxu0 0.0
  %792 = vmatprep.subr.mxu0 0.0
  %793 = vmatpush1.xpose.msra.mxu0 0.0
  %794 = vmatprep.subr.mxu0 0.0
  %795 = vmatpush1.xpose.msra.mxu0 0.0
  %796 = vmatprep.subr.mxu0 0.0
  %797 = vmatpush1.xpose.msra.mxu0 0.0
  %798 = vmatprep.subr.mxu0 0.0
  %799 = vmatpush1.xpose.msra.mxu0 0.0
  %800 = vmatprep.subr.mxu0 0.0
  %801 = vmatpush1.xpose.msra.mxu0 0.0
  %802 = vmatprep.subr.mxu0 0.0
  %803 = vmatpush1.xpose.msra.mxu0 0.0
  %804 = vmatprep.subr.mxu0 0.0
  %805 = vmatpush1.xpose.msra.mxu0 0.0
  %806 = vmatprep.subr.mxu0 0.0
  %807 = vmatpush1.xpose.msra.mxu0 0.0
  %808 = vmatprep.subr.mxu0 0.0
  %809 = vmatpush1.xpose.msra.mxu0 0.0
  %810 = vmatprep.subr.mxu0 0.0
  %811 = vmatpush1.xpose.msra.mxu0 0.0
  %812 = vmatprep.subr.mxu0 0.0
  %813 = vmatpush1.xpose.msra.mxu0 0.0
  %814 = vmatprep.subr.mxu0 0.0
  %815 = vmatpush1.xpose.msra.mxu0 0.0
  %816 = vmatprep.subr.mxu0 0.0
  %817 = vmatpush1.xpose.msra.mxu0 0.0
  %818 = vmatprep.subr.mxu0 0.0
  %819 = vmatpush1.xpose.msra.mxu0 0.0
  %820 = vmatprep.subr.mxu0 0.0
  %821 = vmatpush1.xpose.msra.mxu0 0.0
  %822 = vmatprep.subr.mxu0 0.0
  %823 = vmatpush1.xpose.msra.mxu0 0.0
  %824 = vmatprep.subr.mxu0 0.0
  %825 = vmatpush1.xpose.msra.mxu0 0.0
  %826 = vmatprep.subr.mxu0 0.0
  %827 = vmatpush1.xpose.msra.mxu0 0.0
  %828 = vmatprep.subr.mxu0 0.0
  %829 = vmatpush1.xpose.msra.mxu0 0.0
  %830 = vmatprep.subr.mxu0 0.0
  %831 = vmatpush1.xpose.msra.mxu0 0.0
  %832 = vmatprep.subr.mxu0 0.0
  %833 = vmatpush1.xpose.msra.mxu0 0.0
  %834 = vmatprep.subr.mxu0 0.0
  %835 = vmatpush1.xpose.msra.mxu0 0.0
  %836 = vmatprep.subr.mxu0 0.0
  %837 = vmatpush1.xpose.msra.mxu0 0.0
  %838 = vmatprep.mubr.f32.mxu0 0.0
  %839 = vmatmul.mubr.f32.gmra.mrb[0].mxu0 %v766
  %v840 = vpop.f32.mrb[0].mxu0
  %v841 = vadd.f32 0.0, %v840
  %v842 = vpop.f32.mrb[0].mxu0
  %843 = vmatprep.mubr.f32.mxu0 0.0
  %844 = vmatmul.mubr.f32.gmra.mrb[0].mxu0 %v768
  %v845 = vpop.f32.mrb[0].mxu0
  %v846 = vadd.f32 0.0, %v845
  %v847 = vpop.f32.mrb[0].mxu0
  %848 = vdwg.mxu0
  %849 = vrot.lane.b32.xlu0 %v236, 96
  %v850 = vpop.permute.xlu0 %849
  %851 = vrot.lane.b32.xlu0 %v238, 96
  %v852 = vpop.permute.xlu0 %851
  %v853 = vsel %vm243, %v236, 0
  %v855 = vsel %vm243, %v238, 0
  %v857 = vsel %vm243, %v850, 0
  %v859 = vsel %vm243, %v852, 0
  %861 = vmatprep.subr.mxu0 0.0
  %862 = vmatpush1.xpose.msra.mxu0 %v857
  %863 = vmatprep.subr.mxu0 0.0
  %864 = vmatpush1.xpose.msra.mxu0 %v859
  %865 = vmatprep.subr.mxu0 0.0
  %866 = vmatpush1.xpose.msra.mxu0 0.0
  %867 = vmatprep.subr.mxu0 0.0
  %868 = vmatpush1.xpose.msra.mxu0 0.0
  %869 = vmatprep.subr.mxu0 0.0
  %870 = vmatpush1.xpose.msra.mxu0 0.0
  %871 = vmatprep.subr.mxu0 0.0
  %872 = vmatpush1.xpose.msra.mxu0 0.0
  %873 = vmatprep.subr.mxu0 0.0
  %874 = vmatpush1.xpose.msra.mxu0 0.0
  %875 = vmatprep.subr.mxu0 0.0
  %876 = vmatpush1.xpose.msra.mxu0 0.0
  %877 = vmatprep.subr.mxu0 0.0
  %878 = vmatpush1.xpose.msra.mxu0 0.0
  %879 = vmatprep.subr.mxu0 0.0
  %880 = vmatpush1.xpose.msra.mxu0 0.0
  %881 = vmatprep.subr.mxu0 0.0
  %882 = vmatpush1.xpose.msra.mxu0 0.0
  %883 = vmatprep.subr.mxu0 0.0
  %884 = vmatpush1.xpose.msra.mxu0 0.0
  %885 = vmatprep.subr.mxu0 0.0
  %886 = vmatpush1.xpose.msra.mxu0 0.0
  %887 = vmatprep.subr.mxu0 0.0
  %888 = vmatpush1.xpose.msra.mxu0 0.0
  %889 = vmatprep.subr.mxu0 0.0
  %890 = vmatpush1.xpose.msra.mxu0 0.0
  %891 = vmatprep.subr.mxu0 0.0
  %892 = vmatpush1.xpose.msra.mxu0 0.0
  %893 = vmatprep.subr.mxu0 0.0
  %894 = vmatpush1.xpose.msra.mxu0 0.0
  %895 = vmatprep.subr.mxu0 0.0
  %896 = vmatpush1.xpose.msra.mxu0 0.0
  %897 = vmatprep.subr.mxu0 0.0
  %898 = vmatpush1.xpose.msra.mxu0 0.0
  %899 = vmatprep.subr.mxu0 0.0
  %900 = vmatpush1.xpose.msra.mxu0 0.0
  %901 = vmatprep.subr.mxu0 0.0
  %902 = vmatpush1.xpose.msra.mxu0 0.0
  %903 = vmatprep.subr.mxu0 0.0
  %904 = vmatpush1.xpose.msra.mxu0 0.0
  %905 = vmatprep.subr.mxu0 0.0
  %906 = vmatpush1.xpose.msra.mxu0 0.0
  %907 = vmatprep.subr.mxu0 0.0
  %908 = vmatpush1.xpose.msra.mxu0 0.0
  %909 = vmatprep.subr.mxu0 0.0
  %910 = vmatpush1.xpose.msra.mxu0 0.0
  %911 = vmatprep.subr.mxu0 0.0
  %912 = vmatpush1.xpose.msra.mxu0 0.0
  %913 = vmatprep.subr.mxu0 0.0
  %914 = vmatpush1.xpose.msra.mxu0 0.0
  %915 = vmatprep.subr.mxu0 0.0
  %916 = vmatpush1.xpose.msra.mxu0 0.0
  %917 = vmatprep.subr.mxu0 0.0
  %918 = vmatpush1.xpose.msra.mxu0 0.0
  %919 = vmatprep.subr.mxu0 0.0
  %920 = vmatpush1.xpose.msra.mxu0 0.0
  %921 = vmatprep.subr.mxu0 0.0
  %922 = vmatpush1.xpose.msra.mxu0 0.0
  %923 = vmatprep.subr.mxu0 0.0
  %924 = vmatpush1.xpose.msra.mxu0 0.0
  %925 = vmatprep.mubr.f32.mxu0 0.0
  %926 = vmatmul.mubr.f32.gmra.mrb[0].mxu0 %v853
  %v927 = vpop.f32.mrb[0].mxu0
  %v928 = vadd.f32 0.0, %v927
  %v929 = vpop.f32.mrb[0].mxu0
  %930 = vmatprep.mubr.f32.mxu0 0.0
  %931 = vmatmul.mubr.f32.gmra.mrb[0].mxu0 %v855
  %v932 = vpop.f32.mrb[0].mxu0
  %v933 = vadd.f32 0.0, %v932
  %v934 = vpop.f32.mrb[0].mxu0
  %935 = vdwg.mxu0
  %v936 = vmul.f32 %v319, 0.35355338
  %v937 = vmul.f32 %v324, 0.35355338
  %v938 = vmul.f32 %v406, 0.35355338
  %v939 = vmul.f32 %v411, 0.35355338
  %v940 = vmul.f32 %v493, 0.35355338
  %v941 = vmul.f32 %v498, 0.35355338
  %v942 = vmul.f32 %v580, 0.35355338
  %v943 = vmul.f32 %v585, 0.35355338
  %v944 = vmul.f32 %v667, 0.35355338
  %v945 = vmul.f32 %v672, 0.35355338
  %v946 = vmul.f32 %v754, 0.35355338
  %v947 = vmul.f32 %v759, 0.35355338
  %v948 = vmul.f32 %v841, 0.35355338
  %v949 = vmul.f32 %v846, 0.35355338
  %v950 = vmul.f32 %v928, 0.35355338
  %v951 = vmul.f32 %v933, 0.35355338
  %vm952 = vcmask 130048
  %v953 = vsel %vm952, %v936, -inf
  %954 = vmax.xlane.f32.xlu0 %v953
  %v955 = vpop.xlane.xlu0 %954
  %v956 = vsel %vm952, %v937, -inf
  %957 = vmax.xlane.f32.xlu0 %v956
  %v958 = vpop.xlane.xlu0 %957
  %v959 = vsel %vm952, %v938, -inf
  %960 = vmax.xlane.f32.xlu0 %v959
  %v961 = vpop.xlane.xlu0 %960
  %v962 = vsel %vm952, %v939, -inf
  %963 = vmax.xlane.f32.xlu0 %v962
  %v964 = vpop.xlane.xlu0 %963
  %v965 = vsel %vm952, %v940, -inf
  %966 = vmax.xlane.f32.xlu0 %v965
  %v967 = vpop.xlane.xlu0 %966
  %v968 = vsel %vm952, %v941, -inf
  %969 = vmax.xlane.f32.xlu0 %v968
  %v970 = vpop.xlane.xlu0 %969
  %v971 = vsel %vm952, %v942, -inf
  %972 = vmax.xlane.f32.xlu0 %v971
  %v973 = vpop.xlane.xlu0 %972
  %v974 = vsel %vm952, %v943, -inf
  %975 = vmax.xlane.f32.xlu0 %v974
  %v976 = vpop.xlane.xlu0 %975
  %v977 = vsel %vm952, %v944, -inf
  %978 = vmax.xlane.f32.xlu0 %v977
  %v979 = vpop.xlane.xlu0 %978
  %v980 = vsel %vm952, %v945, -inf
  %981 = vmax.xlane.f32.xlu0 %v980
  %v982 = vpop.xlane.xlu0 %981
  %v983 = vsel %vm952, %v946, -inf
  %984 = vmax.xlane.f32.xlu0 %v983
  %v985 = vpop.xlane.xlu0 %984
  %v986 = vsel %vm952, %v947, -inf
  %987 = vmax.xlane.f32.xlu0 %v986
  %v988 = vpop.xlane.xlu0 %987
  %v989 = vsel %vm952, %v948, -inf
  %990 = vmax.xlane.f32.xlu0 %v989
  %v991 = vpop.xlane.xlu0 %990
  %v992 = vsel %vm952, %v949, -inf
  %993 = vmax.xlane.f32.xlu0 %v992
  %v994 = vpop.xlane.xlu0 %993
  %v995 = vsel %vm952, %v950, -inf
  %996 = vmax.xlane.f32.xlu0 %v995
  %v997 = vpop.xlane.xlu0 %996
  %v998 = vsel %vm952, %v951, -inf
  %999 = vmax.xlane.f32.xlu0 %v998
  %v1000 = vpop.xlane.xlu0 %999
  %v1001 = vsub.f32 %v936, %v955
  %v1002 = vsub.f32 %v937, %v958
  %v1003 = vsub.f32 %v938, %v961
  %v1004 = vsub.f32 %v939, %v964
  %v1005 = vsub.f32 %v940, %v967
  %v1006 = vsub.f32 %v941, %v970
  %v1007 = vsub.f32 %v942, %v973
  %v1008 = vsub.f32 %v943, %v976
  %v1009 = vsub.f32 %v944, %v979
  %v1010 = vsub.f32 %v945, %v982
  %v1011 = vsub.f32 %v946, %v985
  %v1012 = vsub.f32 %v947, %v988
  %v1013 = vsub.f32 %v948, %v991
  %v1014 = vsub.f32 %v949, %v994
  %v1015 = vsub.f32 %v950, %v997
  %v1016 = vsub.f32 %v951, %v1000
  %v1017 = vmul.f32 %v1001, 1.442695
  %v1018 = vpow.pop %v1017
  %v1019 = vmul.f32 %v1002, 1.442695
  %v1020 = vpow.pop %v1019
  %v1021 = vmul.f32 %v1003, 1.442695
  %v1022 = vpow.pop %v1021
  %v1023 = vmul.f32 %v1004, 1.442695
  %v1024 = vpow.pop %v1023
  %v1025 = vmul.f32 %v1005, 1.442695
  %v1026 = vpow.pop %v1025
  %v1027 = vmul.f32 %v1006, 1.442695
  %v1028 = vpow.pop %v1027
  %v1029 = vmul.f32 %v1007, 1.442695
  %v1030 = vpow.pop %v1029
  %v1031 = vmul.f32 %v1008, 1.442695
  %v1032 = vpow.pop %v1031
  %v1033 = vmul.f32 %v1009, 1.442695
  %v1034 = vpow.pop %v1033
  %v1035 = vmul.f32 %v1010, 1.442695
  %v1036 = vpow.pop %v1035
  %v1037 = vmul.f32 %v1011, 1.442695
  %v1038 = vpow.pop %v1037
  %v1039 = vmul.f32 %v1012, 1.442695
  %v1040 = vpow.pop %v1039
  %v1041 = vmul.f32 %v1013, 1.442695
  %v1042 = vpow.pop %v1041
  %v1043 = vmul.f32 %v1014, 1.442695
  %v1044 = vpow.pop %v1043
  %v1045 = vmul.f32 %v1015, 1.442695
  %v1046 = vpow.pop %v1045
  %v1047 = vmul.f32 %v1016, 1.442695
  %v1048 = vpow.pop %v1047
  %v1049 = vsel %vm952, %v1018, 0.0
  %1050 = vadd.xlane.f32.xlu0 %v1049
  %v1051 = vpop.xlane.xlu0 %1050
  %v1052 = vsel %vm952, %v1020, 0.0
  %1053 = vadd.xlane.f32.xlu0 %v1052
  %v1054 = vpop.xlane.xlu0 %1053
  %v1055 = vsel %vm952, %v1022, 0.0
  %1056 = vadd.xlane.f32.xlu0 %v1055
  %v1057 = vpop.xlane.xlu0 %1056
  %v1058 = vsel %vm952, %v1024, 0.0
  %1059 = vadd.xlane.f32.xlu0 %v1058
  %v1060 = vpop.xlane.xlu0 %1059
  %v1061 = vsel %vm952, %v1026, 0.0
  %1062 = vadd.xlane.f32.xlu0 %v1061
  %v1063 = vpop.xlane.xlu0 %1062
  %v1064 = vsel %vm952, %v1028, 0.0
  %1065 = vadd.xlane.f32.xlu0 %v1064
  %v1066 = vpop.xlane.xlu0 %1065
  %v1067 = vsel %vm952, %v1030, 0.0
  %1068 = vadd.xlane.f32.xlu0 %v1067
  %v1069 = vpop.xlane.xlu0 %1068
  %v1070 = vsel %vm952, %v1032, 0.0
  %1071 = vadd.xlane.f32.xlu0 %v1070
  %v1072 = vpop.xlane.xlu0 %1071
  %v1073 = vsel %vm952, %v1034, 0.0
  %1074 = vadd.xlane.f32.xlu0 %v1073
  %v1075 = vpop.xlane.xlu0 %1074
  %v1076 = vsel %vm952, %v1036, 0.0
  %1077 = vadd.xlane.f32.xlu0 %v1076
  %v1078 = vpop.xlane.xlu0 %1077
  %v1079 = vsel %vm952, %v1038, 0.0
  %1080 = vadd.xlane.f32.xlu0 %v1079
  %v1081 = vpop.xlane.xlu0 %1080
  %v1082 = vsel %vm952, %v1040, 0.0
  %1083 = vadd.xlane.f32.xlu0 %v1082
  %v1084 = vpop.xlane.xlu0 %1083
  %v1085 = vsel %vm952, %v1042, 0.0
  %1086 = vadd.xlane.f32.xlu0 %v1085
  %v1087 = vpop.xlane.xlu0 %1086
  %v1088 = vsel %vm952, %v1044, 0.0
  %1089 = vadd.xlane.f32.xlu0 %v1088
  %v1090 = vpop.xlane.xlu0 %1089
  %v1091 = vsel %vm952, %v1046, 0.0
  %1092 = vadd.xlane.f32.xlu0 %v1091
  %v1093 = vpop.xlane.xlu0 %1092
  %v1094 = vsel %vm952, %v1048, 0.0
  %1095 = vadd.xlane.f32.xlu0 %v1094
  %v1096 = vpop.xlane.xlu0 %1095
  %v1097 = vrcp.pop %v1051
  %v1098 = vmul.f32 %v1018, %v1097
  %v1099 = vrcp.pop %v1054
  %v1100 = vmul.f32 %v1020, %v1099
  %v1101 = vrcp.pop %v1057
  %v1102 = vmul.f32 %v1022, %v1101
  %v1103 = vrcp.pop %v1060
  %v1104 = vmul.f32 %v1024, %v1103
  %v1105 = vrcp.pop %v1063
  %v1106 = vmul.f32 %v1026, %v1105
  %v1107 = vrcp.pop %v1066
  %v1108 = vmul.f32 %v1028, %v1107
  %v1109 = vrcp.pop %v1069
  %v1110 = vmul.f32 %v1030, %v1109
  %v1111 = vrcp.pop %v1072
  %v1112 = vmul.f32 %v1032, %v1111
  %v1113 = vrcp.pop %v1075
  %v1114 = vmul.f32 %v1034, %v1113
  %v1115 = vrcp.pop %v1078
  %v1116 = vmul.f32 %v1036, %v1115
  %v1117 = vrcp.pop %v1081
  %v1118 = vmul.f32 %v1038, %v1117
  %v1119 = vrcp.pop %v1084
  %v1120 = vmul.f32 %v1040, %v1119
  %v1121 = vrcp.pop %v1087
  %v1122 = vmul.f32 %v1042, %v1121
  %v1123 = vrcp.pop %v1090
  %v1124 = vmul.f32 %v1044, %v1123
  %v1125 = vrcp.pop %v1093
  %v1126 = vmul.f32 %v1046, %v1125
  %v1127 = vrcp.pop %v1096
  %v1128 = vmul.f32 %v1048, %v1127
  %1129 = vrot.lane.b32.xlu0 %v193, 64
  %v1130 = vpop.permute.xlu0 %1129
  %1131 = vrot.lane.b32.xlu0 %v198, 64
  %v1132 = vpop.permute.xlu0 %1131
  %v1136 = vsel %vm952, %v1098, 0
  %v1139 = vsel %vm952, %v1100, 0
  %1141 = vmatprep.subr.mxu0 0.0
  %1142 = vmatpush1.msra.mxu0 %v1130
  %1143 = vmatprep.subr.mxu0 0.0
  %1144 = vmatpush1.msra.mxu0 %v1132
  %1145 = vmatprep.subr.mxu0 0.0
  %1146 = vmatpush1.msra.mxu0 0.0
  %1147 = vmatprep.subr.mxu0 0.0
  %1148 = vmatpush1.msra.mxu0 0.0
  %1149 = vmatprep.subr.mxu0 0.0
  %1150 = vmatpush1.msra.mxu0 0.0
  %1151 = vmatprep.subr.mxu0 0.0
  %1152 = vmatpush1.msra.mxu0 0.0
  %1153 = vmatprep.subr.mxu0 0.0
  %1154 = vmatpush1.msra.mxu0 0.0
  %1155 = vmatprep.subr.mxu0 0.0
  %1156 = vmatpush1.msra.mxu0 0.0
  %1157 = vmatprep.subr.mxu0 0.0
  %1158 = vmatpush1.msra.mxu0 0.0
  %1159 = vmatprep.subr.mxu0 0.0
  %1160 = vmatpush1.msra.mxu0 0.0
  %1161 = vmatprep.subr.mxu0 0.0
  %1162 = vmatpush1.msra.mxu0 0.0
  %1163 = vmatprep.subr.mxu0 0.0
  %1164 = vmatpush1.msra.mxu0 0.0
  %1165 = vmatprep.subr.mxu0 0.0
  %1166 = vmatpush1.msra.mxu0 0.0
  %1167 = vmatprep.subr.mxu0 0.0
  %1168 = vmatpush1.msra.mxu0 0.0
  %1169 = vmatprep.subr.mxu0 0.0
  %1170 = vmatpush1.msra.mxu0 0.0
  %1171 = vmatprep.subr.mxu0 0.0
  %1172 = vmatpush1.msra.mxu0 0.0
  %1173 = vmatprep.subr.mxu0 0.0
  %1174 = vmatpush1.msra.mxu0 0.0
  %1175 = vmatprep.subr.mxu0 0.0
  %1176 = vmatpush1.msra.mxu0 0.0
  %1177 = vmatprep.subr.mxu0 0.0
  %1178 = vmatpush1.msra.mxu0 0.0
  %1179 = vmatprep.subr.mxu0 0.0
  %1180 = vmatpush1.msra.mxu0 0.0
  %1181 = vmatprep.subr.mxu0 0.0
  %1182 = vmatpush1.msra.mxu0 0.0
  %1183 = vmatprep.subr.mxu0 0.0
  %1184 = vmatpush1.msra.mxu0 0.0
  %1185 = vmatprep.subr.mxu0 0.0
  %1186 = vmatpush1.msra.mxu0 0.0
  %1187 = vmatprep.subr.mxu0 0.0
  %1188 = vmatpush1.msra.mxu0 0.0
  %1189 = vmatprep.subr.mxu0 0.0
  %1190 = vmatpush1.msra.mxu0 0.0
  %1191 = vmatprep.subr.mxu0 0.0
  %1192 = vmatpush1.msra.mxu0 0.0
  %1193 = vmatprep.subr.mxu0 0.0
  %1194 = vmatpush1.msra.mxu0 0.0
  %1195 = vmatprep.subr.mxu0 0.0
  %1196 = vmatpush1.msra.mxu0 0.0
  %1197 = vmatprep.subr.mxu0 0.0
  %1198 = vmatpush1.msra.mxu0 0.0
  %1199 = vmatprep.subr.mxu0 0.0
  %1200 = vmatpush1.msra.mxu0 0.0
  %1201 = vmatprep.subr.mxu0 0.0
  %1202 = vmatpush1.msra.mxu0 0.0
  %1203 = vmatprep.subr.mxu0 0.0
  %1204 = vmatpush1.msra.mxu0 0.0
  %1205 = vmatprep.mubr.f32.mxu0 0.0
  %1206 = vmatmul.mubr.f32.gmra.mrb[0].mxu0 %v1136
  %v1207 = vpop.f32.mrb[0].mxu0
  %v1208 = vadd.f32 0.0, %v1207
  %v1209 = vpop.f32.mrb[0].mxu0
  %1210 = vmatprep.mubr.f32.mxu0 0.0
  %1211 = vmatmul.mubr.f32.gmra.mrb[0].mxu0 %v1139
  %v1212 = vpop.f32.mrb[0].mxu0
  %v1213 = vadd.f32 0.0, %v1212
  %v1214 = vpop.f32.mrb[0].mxu0
  %1215 = vdwg.mxu0
  %1216 = vrot.lane.b32.xlu0 %v203, 64
  %v1217 = vpop.permute.xlu0 %1216
  %1218 = vrot.lane.b32.xlu0 %v208, 64
  %v1219 = vpop.permute.xlu0 %1218
  %v1223 = vsel %vm952, %v1102, 0
  %v1226 = vsel %vm952, %v1104, 0
  %1228 = vmatprep.subr.mxu0 0.0
  %1229 = vmatpush1.msra.mxu0 %v1217
  %1230 = vmatprep.subr.mxu0 0.0
  %1231 = vmatpush1.msra.mxu0 %v1219
  %1232 = vmatprep.subr.mxu0 0.0
  %1233 = vmatpush1.msra.mxu0 0.0
  %1234 = vmatprep.subr.mxu0 0.0
  %1235 = vmatpush1.msra.mxu0 0.0
  %1236 = vmatprep.subr.mxu0 0.0
  %1237 = vmatpush1.msra.mxu0 0.0
  %1238 = vmatprep.subr.mxu0 0.0
  %1239 = vmatpush1.msra.mxu0 0.0
  %1240 = vmatprep.subr.mxu0 0.0
  %1241 = vmatpush1.msra.mxu0 0.0
  %1242 = vmatprep.subr.mxu0 0.0
  %1243 = vmatpush1.msra.mxu0 0.0
  %1244 = vmatprep.subr.mxu0 0.0
  %1245 = vmatpush1.msra.mxu0 0.0
  %1246 = vmatprep.subr.mxu0 0.0
  %1247 = vmatpush1.msra.mxu0 0.0
  %1248 = vmatprep.subr.mxu0 0.0
  %1249 = vmatpush1.msra.mxu0 0.0
  %1250 = vmatprep.subr.mxu0 0.0
  %1251 = vmatpush1.msra.mxu0 0.0
  %1252 = vmatprep.subr.mxu0 0.0
  %1253 = vmatpush1.msra.mxu0 0.0
  %1254 = vmatprep.subr.mxu0 0.0
  %1255 = vmatpush1.msra.mxu0 0.0
  %1256 = vmatprep.subr.mxu0 0.0
  %1257 = vmatpush1.msra.mxu0 0.0
  %1258 = vmatprep.subr.mxu0 0.0
  %1259 = vmatpush1.msra.mxu0 0.0
  %1260 = vmatprep.subr.mxu0 0.0
  %1261 = vmatpush1.msra.mxu0 0.0
  %1262 = vmatprep.subr.mxu0 0.0
  %1263 = vmatpush1.msra.mxu0 0.0
  %1264 = vmatprep.subr.mxu0 0.0
  %1265 = vmatpush1.msra.mxu0 0.0
  %1266 = vmatprep.subr.mxu0 0.0
  %1267 = vmatpush1.msra.mxu0 0.0
  %1268 = vmatprep.subr.mxu0 0.0
  %1269 = vmatpush1.msra.mxu0 0.0
  %1270 = vmatprep.subr.mxu0 0.0
  %1271 = vmatpush1.msra.mxu0 0.0
  %1272 = vmatprep.subr.mxu0 0.0
  %1273 = vmatpush1.msra.mxu0 0.0
  %1274 = vmatprep.subr.mxu0 0.0
  %1275 = vmatpush1.msra.mxu0 0.0
  %1276 = vmatprep.subr.mxu0 0.0
  %1277 = vmatpush1.msra.mxu0 0.0
  %1278 = vmatprep.subr.mxu0 0.0
  %1279 = vmatpush1.msra.mxu0 0.0
  %1280 = vmatprep.subr.mxu0 0.0
  %1281 = vmatpush1.msra.mxu0 0.0
  %1282 = vmatprep.subr.mxu0 0.0
  %1283 = vmatpush1.msra.mxu0 0.0
  %1284 = vmatprep.subr.mxu0 0.0
  %1285 = vmatpush1.msra.mxu0 0.0
  %1286 = vmatprep.subr.mxu0 0.0
  %1287 = vmatpush1.msra.mxu0 0.0
  %1288 = vmatprep.subr.mxu0 0.0
  %1289 = vmatpush1.msra.mxu0 0.0
  %1290 = vmatprep.subr.mxu0 0.0
  %1291 = vmatpush1.msra.mxu0 0.0
  %1292 = vmatprep.mubr.f32.mxu0 0.0
  %1293 = vmatmul.mubr.f32.gmra.mrb[0].mxu0 %v1223
  %v1294 = vpop.f32.mrb[0].mxu0
  %v1295 = vadd.f32 0.0, %v1294
  %v1296 = vpop.f32.mrb[0].mxu0
  %1297 = vmatprep.mubr.f32.mxu0 0.0
  %1298 = vmatmul.mubr.f32.gmra.mrb[0].mxu0 %v1226
  %v1299 = vpop.f32.mrb[0].mxu0
  %v1300 = vadd.f32 0.0, %v1299
  %v1301 = vpop.f32.mrb[0].mxu0
  %1302 = vdwg.mxu0
  %1303 = vrot.lane.b32.xlu0 %v216, 64
  %v1304 = vpop.permute.xlu0 %1303
  %1305 = vrot.lane.b32.xlu0 %v218, 64
  %v1306 = vpop.permute.xlu0 %1305
  %v1310 = vsel %vm952, %v1106, 0
  %v1313 = vsel %vm952, %v1108, 0
  %1315 = vmatprep.subr.mxu0 0.0
  %1316 = vmatpush1.msra.mxu0 %v1304
  %1317 = vmatprep.subr.mxu0 0.0
  %1318 = vmatpush1.msra.mxu0 %v1306
  %1319 = vmatprep.subr.mxu0 0.0
  %1320 = vmatpush1.msra.mxu0 0.0
  %1321 = vmatprep.subr.mxu0 0.0
  %1322 = vmatpush1.msra.mxu0 0.0
  %1323 = vmatprep.subr.mxu0 0.0
  %1324 = vmatpush1.msra.mxu0 0.0
  %1325 = vmatprep.subr.mxu0 0.0
  %1326 = vmatpush1.msra.mxu0 0.0
  %1327 = vmatprep.subr.mxu0 0.0
  %1328 = vmatpush1.msra.mxu0 0.0
  %1329 = vmatprep.subr.mxu0 0.0
  %1330 = vmatpush1.msra.mxu0 0.0
  %1331 = vmatprep.subr.mxu0 0.0
  %1332 = vmatpush1.msra.mxu0 0.0
  %1333 = vmatprep.subr.mxu0 0.0
  %1334 = vmatpush1.msra.mxu0 0.0
  %1335 = vmatprep.subr.mxu0 0.0
  %1336 = vmatpush1.msra.mxu0 0.0
  %1337 = vmatprep.subr.mxu0 0.0
  %1338 = vmatpush1.msra.mxu0 0.0
  %1339 = vmatprep.subr.mxu0 0.0
  %1340 = vmatpush1.msra.mxu0 0.0
  %1341 = vmatprep.subr.mxu0 0.0
  %1342 = vmatpush1.msra.mxu0 0.0
  %1343 = vmatprep.subr.mxu0 0.0
  %1344 = vmatpush1.msra.mxu0 0.0
  %1345 = vmatprep.subr.mxu0 0.0
  %1346 = vmatpush1.msra.mxu0 0.0
  %1347 = vmatprep.subr.mxu0 0.0
  %1348 = vmatpush1.msra.mxu0 0.0
  %1349 = vmatprep.subr.mxu0 0.0
  %1350 = vmatpush1.msra.mxu0 0.0
  %1351 = vmatprep.subr.mxu0 0.0
  %1352 = vmatpush1.msra.mxu0 0.0
  %1353 = vmatprep.subr.mxu0 0.0
  %1354 = vmatpush1.msra.mxu0 0.0
  %1355 = vmatprep.subr.mxu0 0.0
  %1356 = vmatpush1.msra.mxu0 0.0
  %1357 = vmatprep.subr.mxu0 0.0
  %1358 = vmatpush1.msra.mxu0 0.0
  %1359 = vmatprep.subr.mxu0 0.0
  %1360 = vmatpush1.msra.mxu0 0.0
  %1361 = vmatprep.subr.mxu0 0.0
  %1362 = vmatpush1.msra.mxu0 0.0
  %1363 = vmatprep.subr.mxu0 0.0
  %1364 = vmatpush1.msra.mxu0 0.0
  %1365 = vmatprep.subr.mxu0 0.0
  %1366 = vmatpush1.msra.mxu0 0.0
  %1367 = vmatprep.subr.mxu0 0.0
  %1368 = vmatpush1.msra.mxu0 0.0
  %1369 = vmatprep.subr.mxu0 0.0
  %1370 = vmatpush1.msra.mxu0 0.0
  %1371 = vmatprep.subr.mxu0 0.0
  %1372 = vmatpush1.msra.mxu0 0.0
  %1373 = vmatprep.subr.mxu0 0.0
  %1374 = vmatpush1.msra.mxu0 0.0
  %1375 = vmatprep.subr.mxu0 0.0
  %1376 = vmatpush1.msra.mxu0 0.0
  %1377 = vmatprep.subr.mxu0 0.0
  %1378 = vmatpush1.msra.mxu0 0.0
  %1379 = vmatprep.mubr.f32.mxu0 0.0
  %1380 = vmatmul.mubr.f32.gmra.mrb[0].mxu0 %v1310
  %v1381 = vpop.f32.mrb[0].mxu0
  %v1382 = vadd.f32 0.0, %v1381
  %v1383 = vpop.f32.mrb[0].mxu0
  %1384 = vmatprep.mubr.f32.mxu0 0.0
  %1385 = vmatmul.mubr.f32.gmra.mrb[0].mxu0 %v1313
  %v1386 = vpop.f32.mrb[0].mxu0
  %v1387 = vadd.f32 0.0, %v1386
  %v1388 = vpop.f32.mrb[0].mxu0
  %1389 = vdwg.mxu0
  %1390 = vrot.lane.b32.xlu0 %v220, 64
  %v1391 = vpop.permute.xlu0 %1390
  %1392 = vrot.lane.b32.xlu0 %v222, 64
  %v1393 = vpop.permute.xlu0 %1392
  %v1397 = vsel %vm952, %v1110, 0
  %v1400 = vsel %vm952, %v1112, 0
  %1402 = vmatprep.subr.mxu0 0.0
  %1403 = vmatpush1.msra.mxu0 %v1391
  %1404 = vmatprep.subr.mxu0 0.0
  %1405 = vmatpush1.msra.mxu0 %v1393
  %1406 = vmatprep.subr.mxu0 0.0
  %1407 = vmatpush1.msra.mxu0 0.0
  %1408 = vmatprep.subr.mxu0 0.0
  %1409 = vmatpush1.msra.mxu0 0.0
  %1410 = vmatprep.subr.mxu0 0.0
  %1411 = vmatpush1.msra.mxu0 0.0
  %1412 = vmatprep.subr.mxu0 0.0
  %1413 = vmatpush1.msra.mxu0 0.0
  %1414 = vmatprep.subr.mxu0 0.0
  %1415 = vmatpush1.msra.mxu0 0.0
  %1416 = vmatprep.subr.mxu0 0.0
  %1417 = vmatpush1.msra.mxu0 0.0
  %1418 = vmatprep.subr.mxu0 0.0
  %1419 = vmatpush1.msra.mxu0 0.0
  %1420 = vmatprep.subr.mxu0 0.0
  %1421 = vmatpush1.msra.mxu0 0.0
  %1422 = vmatprep.subr.mxu0 0.0
  %1423 = vmatpush1.msra.mxu0 0.0
  %1424 = vmatprep.subr.mxu0 0.0
  %1425 = vmatpush1.msra.mxu0 0.0
  %1426 = vmatprep.subr.mxu0 0.0
  %1427 = vmatpush1.msra.mxu0 0.0
  %1428 = vmatprep.subr.mxu0 0.0
  %1429 = vmatpush1.msra.mxu0 0.0
  %1430 = vmatprep.subr.mxu0 0.0
  %1431 = vmatpush1.msra.mxu0 0.0
  %1432 = vmatprep.subr.mxu0 0.0
  %1433 = vmatpush1.msra.mxu0 0.0
  %1434 = vmatprep.subr.mxu0 0.0
  %1435 = vmatpush1.msra.mxu0 0.0
  %1436 = vmatprep.subr.mxu0 0.0
  %1437 = vmatpush1.msra.mxu0 0.0
  %1438 = vmatprep.subr.mxu0 0.0
  %1439 = vmatpush1.msra.mxu0 0.0
  %1440 = vmatprep.subr.mxu0 0.0
  %1441 = vmatpush1.msra.mxu0 0.0
  %1442 = vmatprep.subr.mxu0 0.0
  %1443 = vmatpush1.msra.mxu0 0.0
  %1444 = vmatprep.subr.mxu0 0.0
  %1445 = vmatpush1.msra.mxu0 0.0
  %1446 = vmatprep.subr.mxu0 0.0
  %1447 = vmatpush1.msra.mxu0 0.0
  %1448 = vmatprep.subr.mxu0 0.0
  %1449 = vmatpush1.msra.mxu0 0.0
  %1450 = vmatprep.subr.mxu0 0.0
  %1451 = vmatpush1.msra.mxu0 0.0
  %1452 = vmatprep.subr.mxu0 0.0
  %1453 = vmatpush1.msra.mxu0 0.0
  %1454 = vmatprep.subr.mxu0 0.0
  %1455 = vmatpush1.msra.mxu0 0.0
  %1456 = vmatprep.subr.mxu0 0.0
  %1457 = vmatpush1.msra.mxu0 0.0
  %1458 = vmatprep.subr.mxu0 0.0
  %1459 = vmatpush1.msra.mxu0 0.0
  %1460 = vmatprep.subr.mxu0 0.0
  %1461 = vmatpush1.msra.mxu0 0.0
  %1462 = vmatprep.subr.mxu0 0.0
  %1463 = vmatpush1.msra.mxu0 0.0
  %1464 = vmatprep.subr.mxu0 0.0
  %1465 = vmatpush1.msra.mxu0 0.0
  %1466 = vmatprep.mubr.f32.mxu0 0.0
  %1467 = vmatmul.mubr.f32.gmra.mrb[0].mxu0 %v1397
  %v1468 = vpop.f32.mrb[0].mxu0
  %v1469 = vadd.f32 0.0, %v1468
  %v1470 = vpop.f32.mrb[0].mxu0
  %1471 = vmatprep.mubr.f32.mxu0 0.0
  %1472 = vmatmul.mubr.f32.gmra.mrb[0].mxu0 %v1400
  %v1473 = vpop.f32.mrb[0].mxu0
  %v1474 = vadd.f32 0.0, %v1473
  %v1475 = vpop.f32.mrb[0].mxu0
  %1476 = vdwg.mxu0
  %1477 = vrot.lane.b32.xlu0 %v224, 64
  %v1478 = vpop.permute.xlu0 %1477
  %1479 = vrot.lane.b32.xlu0 %v226, 64
  %v1480 = vpop.permute.xlu0 %1479
  %v1484 = vsel %vm952, %v1114, 0
  %v1487 = vsel %vm952, %v1116, 0
  %1489 = vmatprep.subr.mxu0 0.0
  %1490 = vmatpush1.msra.mxu0 %v1478
  %1491 = vmatprep.subr.mxu0 0.0
  %1492 = vmatpush1.msra.mxu0 %v1480
  %1493 = vmatprep.subr.mxu0 0.0
  %1494 = vmatpush1.msra.mxu0 0.0
  %1495 = vmatprep.subr.mxu0 0.0
  %1496 = vmatpush1.msra.mxu0 0.0
  %1497 = vmatprep.subr.mxu0 0.0
  %1498 = vmatpush1.msra.mxu0 0.0
  %1499 = vmatprep.subr.mxu0 0.0
  %1500 = vmatpush1.msra.mxu0 0.0
  %1501 = vmatprep.subr.mxu0 0.0
  %1502 = vmatpush1.msra.mxu0 0.0
  %1503 = vmatprep.subr.mxu0 0.0
  %1504 = vmatpush1.msra.mxu0 0.0
  %1505 = vmatprep.subr.mxu0 0.0
  %1506 = vmatpush1.msra.mxu0 0.0
  %1507 = vmatprep.subr.mxu0 0.0
  %1508 = vmatpush1.msra.mxu0 0.0
  %1509 = vmatprep.subr.mxu0 0.0
  %1510 = vmatpush1.msra.mxu0 0.0
  %1511 = vmatprep.subr.mxu0 0.0
  %1512 = vmatpush1.msra.mxu0 0.0
  %1513 = vmatprep.subr.mxu0 0.0
  %1514 = vmatpush1.msra.mxu0 0.0
  %1515 = vmatprep.subr.mxu0 0.0
  %1516 = vmatpush1.msra.mxu0 0.0
  %1517 = vmatprep.subr.mxu0 0.0
  %1518 = vmatpush1.msra.mxu0 0.0
  %1519 = vmatprep.subr.mxu0 0.0
  %1520 = vmatpush1.msra.mxu0 0.0
  %1521 = vmatprep.subr.mxu0 0.0
  %1522 = vmatpush1.msra.mxu0 0.0
  %1523 = vmatprep.subr.mxu0 0.0
  %1524 = vmatpush1.msra.mxu0 0.0
  %1525 = vmatprep.subr.mxu0 0.0
  %1526 = vmatpush1.msra.mxu0 0.0
  %1527 = vmatprep.subr.mxu0 0.0
  %1528 = vmatpush1.msra.mxu0 0.0
  %1529 = vmatprep.subr.mxu0 0.0
  %1530 = vmatpush1.msra.mxu0 0.0
  %1531 = vmatprep.subr.mxu0 0.0
  %1532 = vmatpush1.msra.mxu0 0.0
  %1533 = vmatprep.subr.mxu0 0.0
  %1534 = vmatpush1.msra.mxu0 0.0
  %1535 = vmatprep.subr.mxu0 0.0
  %1536 = vmatpush1.msra.mxu0 0.0
  %1537 = vmatprep.subr.mxu0 0.0
  %1538 = vmatpush1.msra.mxu0 0.0
  %1539 = vmatprep.subr.mxu0 0.0
  %1540 = vmatpush1.msra.mxu0 0.0
  %1541 = vmatprep.subr.mxu0 0.0
  %1542 = vmatpush1.msra.mxu0 0.0
  %1543 = vmatprep.subr.mxu0 0.0
  %1544 = vmatpush1.msra.mxu0 0.0
  %1545 = vmatprep.subr.mxu0 0.0
  %1546 = vmatpush1.msra.mxu0 0.0
  %1547 = vmatprep.subr.mxu0 0.0
  %1548 = vmatpush1.msra.mxu0 0.0
  %1549 = vmatprep.subr.mxu0 0.0
  %1550 = vmatpush1.msra.mxu0 0.0
  %1551 = vmatprep.subr.mxu0 0.0
  %1552 = vmatpush1.msra.mxu0 0.0
  %1553 = vmatprep.mubr.f32.mxu0 0.0
  %1554 = vmatmul.mubr.f32.gmra.mrb[0].mxu0 %v1484
  %v1555 = vpop.f32.mrb[0].mxu0
  %v1556 = vadd.f32 0.0, %v1555
  %v1557 = vpop.f32.mrb[0].mxu0
  %1558 = vmatprep.mubr.f32.mxu0 0.0
  %1559 = vmatmul.mubr.f32.gmra.mrb[0].mxu0 %v1487
  %v1560 = vpop.f32.mrb[0].mxu0
  %v1561 = vadd.f32 0.0, %v1560
  %v1562 = vpop.f32.mrb[0].mxu0
  %1563 = vdwg.mxu0
  %1564 = vrot.lane.b32.xlu0 %v228, 64
  %v1565 = vpop.permute.xlu0 %1564
  %1566 = vrot.lane.b32.xlu0 %v230, 64
  %v1567 = vpop.permute.xlu0 %1566
  %v1571 = vsel %vm952, %v1118, 0
  %v1574 = vsel %vm952, %v1120, 0
  %1576 = vmatprep.subr.mxu0 0.0
  %1577 = vmatpush1.msra.mxu0 %v1565
  %1578 = vmatprep.subr.mxu0 0.0
  %1579 = vmatpush1.msra.mxu0 %v1567
  %1580 = vmatprep.subr.mxu0 0.0
  %1581 = vmatpush1.msra.mxu0 0.0
  %1582 = vmatprep.subr.mxu0 0.0
  %1583 = vmatpush1.msra.mxu0 0.0
  %1584 = vmatprep.subr.mxu0 0.0
  %1585 = vmatpush1.msra.mxu0 0.0
  %1586 = vmatprep.subr.mxu0 0.0
  %1587 = vmatpush1.msra.mxu0 0.0
  %1588 = vmatprep.subr.mxu0 0.0
  %1589 = vmatpush1.msra.mxu0 0.0
  %1590 = vmatprep.subr.mxu0 0.0
  %1591 = vmatpush1.msra.mxu0 0.0
  %1592 = vmatprep.subr.mxu0 0.0
  %1593 = vmatpush1.msra.mxu0 0.0
  %1594 = vmatprep.subr.mxu0 0.0
  %1595 = vmatpush1.msra.mxu0 0.0
  %1596 = vmatprep.subr.mxu0 0.0
  %1597 = vmatpush1.msra.mxu0 0.0
  %1598 = vmatprep.subr.mxu0 0.0
  %1599 = vmatpush1.msra.mxu0 0.0
  %1600 = vmatprep.subr.mxu0 0.0
  %1601 = vmatpush1.msra.mxu0 0.0
  %1602 = vmatprep.subr.mxu0 0.0
  %1603 = vmatpush1.msra.mxu0 0.0
  %1604 = vmatprep.subr.mxu0 0.0
  %1605 = vmatpush1.msra.mxu0 0.0
  %1606 = vmatprep.subr.mxu0 0.0
  %1607 = vmatpush1.msra.mxu0 0.0
  %1608 = vmatprep.subr.mxu0 0.0
  %1609 = vmatpush1.msra.mxu0 0.0
  %1610 = vmatprep.subr.mxu0 0.0
  %1611 = vmatpush1.msra.mxu0 0.0
  %1612 = vmatprep.subr.mxu0 0.0
  %1613 = vmatpush1.msra.mxu0 0.0
  %1614 = vmatprep.subr.mxu0 0.0
  %1615 = vmatpush1.msra.mxu0 0.0
  %1616 = vmatprep.subr.mxu0 0.0
  %1617 = vmatpush1.msra.mxu0 0.0
  %1618 = vmatprep.subr.mxu0 0.0
  %1619 = vmatpush1.msra.mxu0 0.0
  %1620 = vmatprep.subr.mxu0 0.0
  %1621 = vmatpush1.msra.mxu0 0.0
  %1622 = vmatprep.subr.mxu0 0.0
  %1623 = vmatpush1.msra.mxu0 0.0
  %1624 = vmatprep.subr.mxu0 0.0
  %1625 = vmatpush1.msra.mxu0 0.0
  %1626 = vmatprep.subr.mxu0 0.0
  %1627 = vmatpush1.msra.mxu0 0.0
  %1628 = vmatprep.subr.mxu0 0.0
  %1629 = vmatpush1.msra.mxu0 0.0
  %1630 = vmatprep.subr.mxu0 0.0
  %1631 = vmatpush1.msra.mxu0 0.0
  %1632 = vmatprep.subr.mxu0 0.0
  %1633 = vmatpush1.msra.mxu0 0.0
  %1634 = vmatprep.subr.mxu0 0.0
  %1635 = vmatpush1.msra.mxu0 0.0
  %1636 = vmatprep.subr.mxu0 0.0
  %1637 = vmatpush1.msra.mxu0 0.0
  %1638 = vmatprep.subr.mxu0 0.0
  %1639 = vmatpush1.msra.mxu0 0.0
  %1640 = vmatprep.mubr.f32.mxu0 0.0
  %1641 = vmatmul.mubr.f32.gmra.mrb[0].mxu0 %v1571
  %v1642 = vpop.f32.mrb[0].mxu0
  %v1643 = vadd.f32 0.0, %v1642
  %v1644 = vpop.f32.mrb[0].mxu0
  %1645 = vmatprep.mubr.f32.mxu0 0.0
  %1646 = vmatmul.mubr.f32.gmra.mrb[0].mxu0 %v1574
  %v1647 = vpop.f32.mrb[0].mxu0
  %v1648 = vadd.f32 0.0, %v1647
  %v1649 = vpop.f32.mrb[0].mxu0
  %1650 = vdwg.mxu0
  %1651 = vrot.lane.b32.xlu0 %v232, 64
  %v1652 = vpop.permute.xlu0 %1651
  %1653 = vrot.lane.b32.xlu0 %v234, 64
  %v1654 = vpop.permute.xlu0 %1653
  %v1658 = vsel %vm952, %v1122, 0
  %v1661 = vsel %vm952, %v1124, 0
  %1663 = vmatprep.subr.mxu0 0.0
  %1664 = vmatpush1.msra.mxu0 %v1652
  %1665 = vmatprep.subr.mxu0 0.0
  %1666 = vmatpush1.msra.mxu0 %v1654
  %1667 = vmatprep.subr.mxu0 0.0
  %1668 = vmatpush1.msra.mxu0 0.0
  %1669 = vmatprep.subr.mxu0 0.0
  %1670 = vmatpush1.msra.mxu0 0.0
  %1671 = vmatprep.subr.mxu0 0.0
  %1672 = vmatpush1.msra.mxu0 0.0
  %1673 = vmatprep.subr.mxu0 0.0
  %1674 = vmatpush1.msra.mxu0 0.0
  %1675 = vmatprep.subr.mxu0 0.0
  %1676 = vmatpush1.msra.mxu0 0.0
  %1677 = vmatprep.subr.mxu0 0.0
  %1678 = vmatpush1.msra.mxu0 0.0
  %1679 = vmatprep.subr.mxu0 0.0
  %1680 = vmatpush1.msra.mxu0 0.0
  %1681 = vmatprep.subr.mxu0 0.0
  %1682 = vmatpush1.msra.mxu0 0.0
  %1683 = vmatprep.subr.mxu0 0.0
  %1684 = vmatpush1.msra.mxu0 0.0
  %1685 = vmatprep.subr.mxu0 0.0
  %1686 = vmatpush1.msra.mxu0 0.0
  %1687 = vmatprep.subr.mxu0 0.0
  %1688 = vmatpush1.msra.mxu0 0.0
  %1689 = vmatprep.subr.mxu0 0.0
  %1690 = vmatpush1.msra.mxu0 0.0
  %1691 = vmatprep.subr.mxu0 0.0
  %1692 = vmatpush1.msra.mxu0 0.0
  %1693 = vmatprep.subr.mxu0 0.0
  %1694 = vmatpush1.msra.mxu0 0.0
  %1695 = vmatprep.subr.mxu0 0.0
  %1696 = vmatpush1.msra.mxu0 0.0
  %1697 = vmatprep.subr.mxu0 0.0
  %1698 = vmatpush1.msra.mxu0 0.0
  %1699 = vmatprep.subr.mxu0 0.0
  %1700 = vmatpush1.msra.mxu0 0.0
  %1701 = vmatprep.subr.mxu0 0.0
  %1702 = vmatpush1.msra.mxu0 0.0
  %1703 = vmatprep.subr.mxu0 0.0
  %1704 = vmatpush1.msra.mxu0 0.0
  %1705 = vmatprep.subr.mxu0 0.0
  %1706 = vmatpush1.msra.mxu0 0.0
  %1707 = vmatprep.subr.mxu0 0.0
  %1708 = vmatpush1.msra.mxu0 0.0
  %1709 = vmatprep.subr.mxu0 0.0
  %1710 = vmatpush1.msra.mxu0 0.0
  %1711 = vmatprep.subr.mxu0 0.0
  %1712 = vmatpush1.msra.mxu0 0.0
  %1713 = vmatprep.subr.mxu0 0.0
  %1714 = vmatpush1.msra.mxu0 0.0
  %1715 = vmatprep.subr.mxu0 0.0
  %1716 = vmatpush1.msra.mxu0 0.0
  %1717 = vmatprep.subr.mxu0 0.0
  %1718 = vmatpush1.msra.mxu0 0.0
  %1719 = vmatprep.subr.mxu0 0.0
  %1720 = vmatpush1.msra.mxu0 0.0
  %1721 = vmatprep.subr.mxu0 0.0
  %1722 = vmatpush1.msra.mxu0 0.0
  %1723 = vmatprep.subr.mxu0 0.0
  %1724 = vmatpush1.msra.mxu0 0.0
  %1725 = vmatprep.subr.mxu0 0.0
  %1726 = vmatpush1.msra.mxu0 0.0
  %1727 = vmatprep.mubr.f32.mxu0 0.0
  %1728 = vmatmul.mubr.f32.gmra.mrb[0].mxu0 %v1658
  %v1729 = vpop.f32.mrb[0].mxu0
  %v1730 = vadd.f32 0.0, %v1729
  %v1731 = vpop.f32.mrb[0].mxu0
  %1732 = vmatprep.mubr.f32.mxu0 0.0
  %1733 = vmatmul.mubr.f32.gmra.mrb[0].mxu0 %v1661
  %v1734 = vpop.f32.mrb[0].mxu0
  %v1735 = vadd.f32 0.0, %v1734
  %v1736 = vpop.f32.mrb[0].mxu0
  %1737 = vdwg.mxu0
  %1738 = vrot.lane.b32.xlu0 %v236, 64
  %v1739 = vpop.permute.xlu0 %1738
  %1740 = vrot.lane.b32.xlu0 %v238, 64
  %v1741 = vpop.permute.xlu0 %1740
  %v1745 = vsel %vm952, %v1126, 0
  %v1748 = vsel %vm952, %v1128, 0
  %1750 = vmatprep.subr.mxu0 0.0
  %1751 = vmatpush1.msra.mxu0 %v1739
  %1752 = vmatprep.subr.mxu0 0.0
  %1753 = vmatpush1.msra.mxu0 %v1741
  %1754 = vmatprep.subr.mxu0 0.0
  %1755 = vmatpush1.msra.mxu0 0.0
  %1756 = vmatprep.subr.mxu0 0.0
  %1757 = vmatpush1.msra.mxu0 0.0
  %1758 = vmatprep.subr.mxu0 0.0
  %1759 = vmatpush1.msra.mxu0 0.0
  %1760 = vmatprep.subr.mxu0 0.0
  %1761 = vmatpush1.msra.mxu0 0.0
  %1762 = vmatprep.subr.mxu0 0.0
  %1763 = vmatpush1.msra.mxu0 0.0
  %1764 = vmatprep.subr.mxu0 0.0
  %1765 = vmatpush1.msra.mxu0 0.0
  %1766 = vmatprep.subr.mxu0 0.0
  %1767 = vmatpush1.msra.mxu0 0.0
  %1768 = vmatprep.subr.mxu0 0.0
  %1769 = vmatpush1.msra.mxu0 0.0
  %1770 = vmatprep.subr.mxu0 0.0
  %1771 = vmatpush1.msra.mxu0 0.0
  %1772 = vmatprep.subr.mxu0 0.0
  %1773 = vmatpush1.msra.mxu0 0.0
  %1774 = vmatprep.subr.mxu0 0.0
  %1775 = vmatpush1.msra.mxu0 0.0
  %1776 = vmatprep.subr.mxu0 0.0
  %1777 = vmatpush1.msra.mxu0 0.0
  %1778 = vmatprep.subr.mxu0 0.0
  %1779 = vmatpush1.msra.mxu0 0.0
  %1780 = vmatprep.subr.mxu0 0.0
  %1781 = vmatpush1.msra.mxu0 0.0
  %1782 = vmatprep.subr.mxu0 0.0
  %1783 = vmatpush1.msra.mxu0 0.0
  %1784 = vmatprep.subr.mxu0 0.0
  %1785 = vmatpush1.msra.mxu0 0.0
  %1786 = vmatprep.subr.mxu0 0.0
  %1787 = vmatpush1.msra.mxu0 0.0
  %1788 = vmatprep.subr.mxu0 0.0
  %1789 = vmatpush1.msra.mxu0 0.0
  %1790 = vmatprep.subr.mxu0 0.0
  %1791 = vmatpush1.msra.mxu0 0.0
  %1792 = vmatprep.subr.mxu0 0.0
  %1793 = vmatpush1.msra.mxu0 0.0
  %1794 = vmatprep.subr.mxu0 0.0
  %1795 = vmatpush1.msra.mxu0 0.0
  %1796 = vmatprep.subr.mxu0 0.0
  %1797 = vmatpush1.msra.mxu0 0.0
  %1798 = vmatprep.subr.mxu0 0.0
  %1799 = vmatpush1.msra.mxu0 0.0
  %1800 = vmatprep.subr.mxu0 0.0
  %1801 = vmatpush1.msra.mxu0 0.0
  %1802 = vmatprep.subr.mxu0 0.0
  %1803 = vmatpush1.msra.mxu0 0.0
  %1804 = vmatprep.subr.mxu0 0.0
  %1805 = vmatpush1.msra.mxu0 0.0
  %1806 = vmatprep.subr.mxu0 0.0
  %1807 = vmatpush1.msra.mxu0 0.0
  %1808 = vmatprep.subr.mxu0 0.0
  %1809 = vmatpush1.msra.mxu0 0.0
  %1810 = vmatprep.subr.mxu0 0.0
  %1811 = vmatpush1.msra.mxu0 0.0
  %1812 = vmatprep.subr.mxu0 0.0
  %1813 = vmatpush1.msra.mxu0 0.0
  %1814 = vmatprep.mubr.f32.mxu0 0.0
  %1815 = vmatmul.mubr.f32.gmra.mrb[0].mxu0 %v1745
  %v1816 = vpop.f32.mrb[0].mxu0
  %v1817 = vadd.f32 0.0, %v1816
  %v1818 = vpop.f32.mrb[0].mxu0
  %1819 = vmatprep.mubr.f32.mxu0 0.0
  %1820 = vmatmul.mubr.f32.gmra.mrb[0].mxu0 %v1748
  %v1821 = vpop.f32.mrb[0].mxu0
  %v1822 = vadd.f32 0.0, %v1821
  %v1823 = vpop.f32.mrb[0].mxu0
  %1824 = vdwg.mxu0
  %1829 = vrot.lane.b32.xlu0 %v1382, 8
  %v1830 = vpop.permute.xlu0 %1829
  %1831 = vrot.lane.b32.xlu0 %v1387, 8
  %v1832 = vpop.permute.xlu0 %1831
  %1833 = vrot.lane.b32.xlu0 %v1469, 8
  %v1834 = vpop.permute.xlu0 %1833
  %1835 = vrot.lane.b32.xlu0 %v1474, 8
  %v1836 = vpop.permute.xlu0 %1835
  %1845 = vrot.lane.b32.xlu0 %v1556, 16
  %v1846 = vpop.permute.xlu0 %1845
  %1847 = vrot.lane.b32.xlu0 %v1561, 16
  %v1848 = vpop.permute.xlu0 %1847
  %1849 = vrot.lane.b32.xlu0 %v1643, 16
  %v1850 = vpop.permute.xlu0 %1849
  %1851 = vrot.lane.b32.xlu0 %v1648, 16
  %v1852 = vpop.permute.xlu0 %1851
  %1861 = vrot.lane.b32.xlu0 %v1730, 24
  %v1862 = vpop.permute.xlu0 %1861
  %1863 = vrot.lane.b32.xlu0 %v1735, 24
  %v1864 = vpop.permute.xlu0 %1863
  %1865 = vrot.lane.b32.xlu0 %v1817, 24
  %v1866 = vpop.permute.xlu0 %1865
  %1867 = vrot.lane.b32.xlu0 %v1822, 24
  %v1868 = vpop.permute.xlu0 %1867
  %v1873 = vsel %vm243, %v1208, %v1830
  %v1874 = vsel %vm243, %v1213, %v1832
  %v1875 = vsel %vm243, %v1295, %v1834
  %v1876 = vsel %vm243, %v1300, %v1836
  %v1877 = vsel %vm952, %v1873, %v1846
  %v1878 = vsel %vm952, %v1874, %v1848
  %v1879 = vsel %vm952, %v1875, %v1850
  %v1880 = vsel %vm952, %v1876, %v1852
  %vm1881 = vcmask 195584
  %v1882 = vsel %vm1881, %v1877, %v1862
  %v1883 = vsel %vm1881, %v1878, %v1864
  %v1884 = vsel %vm1881, %v1879, %v1866
  %v1885 = vsel %vm1881, %v1880, %v1868
  %v1886 = vlaneseq
  %v1887 = vshrl.u32 %v1886, 7
  %v1888 = vsub.s32 0, %v1887
  %v1889 = vrot.slane %v18, %v1888
  %v1891 = vsel %vm40, %v1882, 0
  %v1894 = vsel %vm40, %v1883, 0
  %v1897 = vsel %vm40, %v1884, 0
  %v1900 = vsel %vm40, %v1885, 0
  %1902 = vmatprep.subr.mxu0 0.0
  %1903 = vmatpush1.msra.mxu0 %v28
  %1904 = vmatprep.subr.mxu0 0.0
  %1905 = vmatpush1.msra.mxu0 %v29
  %1906 = vmatprep.subr.mxu0 0.0
  %1907 = vmatpush1.msra.mxu0 %v30
  %1908 = vmatprep.subr.mxu0 0.0
  %1909 = vmatpush1.msra.mxu0 %v31
  %1910 = vmatprep.subr.mxu0 0.0
  %1911 = vmatpush1.msra.mxu0 0.0
  %1912 = vmatprep.subr.mxu0 0.0
  %1913 = vmatpush1.msra.mxu0 0.0
  %1914 = vmatprep.subr.mxu0 0.0
  %1915 = vmatpush1.msra.mxu0 0.0
  %1916 = vmatprep.subr.mxu0 0.0
  %1917 = vmatpush1.msra.mxu0 0.0
  %1918 = vmatprep.subr.mxu0 0.0
  %1919 = vmatpush1.msra.mxu0 0.0
  %1920 = vmatprep.subr.mxu0 0.0
  %1921 = vmatpush1.msra.mxu0 0.0
  %1922 = vmatprep.subr.mxu0 0.0
  %1923 = vmatpush1.msra.mxu0 0.0
  %1924 = vmatprep.subr.mxu0 0.0
  %1925 = vmatpush1.msra.mxu0 0.0
  %1926 = vmatprep.subr.mxu0 0.0
  %1927 = vmatpush1.msra.mxu0 0.0
  %1928 = vmatprep.subr.mxu0 0.0
  %1929 = vmatpush1.msra.mxu0 0.0
  %1930 = vmatprep.subr.mxu0 0.0
  %1931 = vmatpush1.msra.mxu0 0.0
  %1932 = vmatprep.subr.mxu0 0.0
  %1933 = vmatpush1.msra.mxu0 0.0
  %1934 = vmatprep.subr.mxu0 0.0
  %1935 = vmatpush1.msra.mxu0 0.0
  %1936 = vmatprep.subr.mxu0 0.0
  %1937 = vmatpush1.msra.mxu0 0.0
  %1938 = vmatprep.subr.mxu0 0.0
  %1939 = vmatpush1.msra.mxu0 0.0
  %1940 = vmatprep.subr.mxu0 0.0
  %1941 = vmatpush1.msra.mxu0 0.0
  %1942 = vmatprep.subr.mxu0 0.0
  %1943 = vmatpush1.msra.mxu0 0.0
  %1944 = vmatprep.subr.mxu0 0.0
  %1945 = vmatpush1.msra.mxu0 0.0
  %1946 = vmatprep.subr.mxu0 0.0
  %1947 = vmatpush1.msra.mxu0 0.0
  %1948 = vmatprep.subr.mxu0 0.0
  %1949 = vmatpush1.msra.mxu0 0.0
  %1950 = vmatprep.subr.mxu0 0.0
  %1951 = vmatpush1.msra.mxu0 0.0
  %1952 = vmatprep.subr.mxu0 0.0
  %1953 = vmatpush1.msra.mxu0 0.0
  %1954 = vmatprep.subr.mxu0 0.0
  %1955 = vmatpush1.msra.mxu0 0.0
  %1956 = vmatprep.subr.mxu0 0.0
  %1957 = vmatpush1.msra.mxu0 0.0
  %1958 = vmatprep.subr.mxu0 0.0
  %1959 = vmatpush1.msra.mxu0 0.0
  %1960 = vmatprep.subr.mxu0 0.0
  %1961 = vmatpush1.msra.mxu0 0.0
  %1962 = vmatprep.subr.mxu0 0.0
  %1963 = vmatpush1.msra.mxu0 0.0
  %1964 = vmatprep.subr.mxu0 0.0
  %1965 = vmatpush1.msra.mxu0 0.0
  %1966 = vmatprep.mubr.f32.mxu0 0.0
  %1967 = vmatmul.mubr.f32.gmra.mrb[0].mxu0 %v1891
  %v1968 = vpop.f32.mrb[0].mxu0
  %v1969 = vadd.f32 %v1889, %v1968
  %v1970 = vpop.f32.mrb[0].mxu0
  %1971 = vmatprep.mubr.f32.mxu0 0.0
  %1972 = vmatmul.mubr.f32.gmra.mrb[0].mxu0 %v1894
  %v1973 = vpop.f32.mrb[0].mxu0
  %v1974 = vadd.f32 %v1889, %v1973
  %v1975 = vpop.f32.mrb[0].mxu0
  %1976 = vmatprep.mubr.f32.mxu0 0.0
  %1977 = vmatmul.mubr.f32.gmra.mrb[0].mxu0 %v1897
  %v1978 = vpop.f32.mrb[0].mxu0
  %v1979 = vadd.f32 %v1889, %v1978
  %v1980 = vpop.f32.mrb[0].mxu0
  %1981 = vmatprep.mubr.f32.mxu0 0.0
  %1982 = vmatmul.mubr.f32.gmra.mrb[0].mxu0 %v1900
  %v1983 = vpop.f32.mrb[0].mxu0
  %v1984 = vadd.f32 %v1889, %v1983
  %v1985 = vpop.f32.mrb[0].mxu0
  %1986 = vdwg.mxu0
  %v1987 = vadd.f32 %v36, %v1969
  %v1988 = vadd.f32 %v37, %v1974
  %v1989 = vadd.f32 %v38, %v1979
  %v1990 = vadd.f32 %v39, %v1984
  %v1991 = vsel %vm40, %v1987, 0.0
  %1992 = vadd.xlane.f32.xlu0 %v1991
  %v1993 = vpop.xlane.xlu0 %1992
  %v1994 = vsel %vm40, %v1989, 0.0
  %1995 = vadd.xlane.f32.xlu0 %v1994
  %v1996 = vpop.xlane.xlu0 %1995
  %v1997 = vmul.f32 %v1993, %v53
  %v1998 = vmul.f32 %v1996, %v53
  %v1999 = vsub.f32 %v1987, %v1997
  %v2000 = vsub.f32 %v1989, %v1998
  %v2001 = vmul.f32 %v1999, %v1999
  %v2002 = vmul.f32 %v2000, %v2000
  %v2003 = vsel %vm40, %v2001, 0.0
  %2004 = vadd.xlane.f32.xlu0 %v2003
  %v2005 = vpop.xlane.xlu0 %2004
  %v2006 = vsel %vm40, %v2002, 0.0
  %2007 = vadd.xlane.f32.xlu0 %v2006
  %v2008 = vpop.xlane.xlu0 %2007
  %v2009 = vmul.f32 %v2005, %v53
  %v2010 = vmul.f32 %v2008, %v53
  %v2011 = vadd.f32 %v2009, 1e-06
  %v2012 = vadd.f32 %v2010, 1e-06
  %v2013 = vrsqrt.pop %v2011
  %v2014 = vrsqrt.pop %v2012
  %v2015 = vmul.f32 %v1999, %v2013
  %v2016 = vmul.f32 %v2000, %v2014
  %v2017 = vmul.f32 %v2015, %v97
  %v2018 = vmul.f32 %v2016, %v97
  %v2019 = vadd.f32 %v2017, %v105
  %v2020 = vadd.f32 %v2018, %v105
  %v2021 = vsel %vm40, %v1988, 0.0
  %2022 = vadd.xlane.f32.xlu0 %v2021
  %v2023 = vpop.xlane.xlu0 %2022
  %v2024 = vsel %vm40, %v1990, 0.0
  %2025 = vadd.xlane.f32.xlu0 %v2024
  %v2026 = vpop.xlane.xlu0 %2025
  %v2027 = vmul.f32 %v2023, %v53
  %v2028 = vmul.f32 %v2026, %v53
  %v2029 = vsub.f32 %v1988, %v2027
  %v2030 = vsub.f32 %v1990, %v2028
  %v2031 = vmul.f32 %v2029, %v2029
  %v2032 = vmul.f32 %v2030, %v2030
  %v2033 = vsel %vm40, %v2031, 0.0
  %2034 = vadd.xlane.f32.xlu0 %v2033
  %v2035 = vpop.xlane.xlu0 %2034
  %v2036 = vsel %vm40, %v2032, 0.0
  %2037 = vadd.xlane.f32.xlu0 %v2036
  %v2038 = vpop.xlane.xlu0 %2037
  %v2039 = vmul.f32 %v2035, %v53
  %v2040 = vmul.f32 %v2038, %v53
  %v2041 = vadd.f32 %v2039, 1e-06
  %v2042 = vadd.f32 %v2040, 1e-06
  %v2043 = vrsqrt.pop %v2041
  %v2044 = vrsqrt.pop %v2042
  %v2045 = vmul.f32 %v2029, %v2043
  %v2046 = vmul.f32 %v2030, %v2044
  %v2047 = vmul.f32 %v2045, %v97
  %v2048 = vmul.f32 %v2046, %v97
  %v2049 = vadd.f32 %v2047, %v105
  %v2050 = vadd.f32 %v2048, %v105
  %v2051 = vlaneseq
  %v2052 = vshrl.u32 %v2051, 7
  %v2053 = vsub.s32 0, %v2052
  %v2054 = vrot.slane %v17, %v2053
  %v2056 = vsel %vm40, %v2049, 0
  %v2059 = vsel %vm40, %v2050, 0
  %v2062 = vsel %vm40, %v2019, 0
  %v2065 = vsel %vm40, %v2020, 0
  %2067 = vmatprep.subr.mxu0 0.0
  %2068 = vmatpush1.msra.mxu0 %v24
  %2069 = vmatprep.subr.mxu0 0.0
  %2070 = vmatpush1.msra.mxu0 %v25
  %2071 = vmatprep.subr.mxu0 0.0
  %2072 = vmatpush1.msra.mxu0 %v26
  %2073 = vmatprep.subr.mxu0 0.0
  %2074 = vmatpush1.msra.mxu0 %v27
  %2075 = vmatprep.subr.mxu0 0.0
  %2076 = vmatpush1.msra.mxu0 0.0
  %2077 = vmatprep.subr.mxu0 0.0
  %2078 = vmatpush1.msra.mxu0 0.0
  %2079 = vmatprep.subr.mxu0 0.0
  %2080 = vmatpush1.msra.mxu0 0.0
  %2081 = vmatprep.subr.mxu0 0.0
  %2082 = vmatpush1.msra.mxu0 0.0
  %2083 = vmatprep.subr.mxu0 0.0
  %2084 = vmatpush1.msra.mxu0 0.0
  %2085 = vmatprep.subr.mxu0 0.0
  %2086 = vmatpush1.msra.mxu0 0.0
  %2087 = vmatprep.subr.mxu0 0.0
  %2088 = vmatpush1.msra.mxu0 0.0
  %2089 = vmatprep.subr.mxu0 0.0
  %2090 = vmatpush1.msra.mxu0 0.0
  %2091 = vmatprep.subr.mxu0 0.0
  %2092 = vmatpush1.msra.mxu0 0.0
  %2093 = vmatprep.subr.mxu0 0.0
  %2094 = vmatpush1.msra.mxu0 0.0
  %2095 = vmatprep.subr.mxu0 0.0
  %2096 = vmatpush1.msra.mxu0 0.0
  %2097 = vmatprep.subr.mxu0 0.0
  %2098 = vmatpush1.msra.mxu0 0.0
  %2099 = vmatprep.subr.mxu0 0.0
  %2100 = vmatpush1.msra.mxu0 0.0
  %2101 = vmatprep.subr.mxu0 0.0
  %2102 = vmatpush1.msra.mxu0 0.0
  %2103 = vmatprep.subr.mxu0 0.0
  %2104 = vmatpush1.msra.mxu0 0.0
  %2105 = vmatprep.subr.mxu0 0.0
  %2106 = vmatpush1.msra.mxu0 0.0
  %2107 = vmatprep.subr.mxu0 0.0
  %2108 = vmatpush1.msra.mxu0 0.0
  %2109 = vmatprep.subr.mxu0 0.0
  %2110 = vmatpush1.msra.mxu0 0.0
  %2111 = vmatprep.subr.mxu0 0.0
  %2112 = vmatpush1.msra.mxu0 0.0
  %2113 = vmatprep.subr.mxu0 0.0
  %2114 = vmatpush1.msra.mxu0 0.0
  %2115 = vmatprep.subr.mxu0 0.0
  %2116 = vmatpush1.msra.mxu0 0.0
  %2117 = vmatprep.subr.mxu0 0.0
  %2118 = vmatpush1.msra.mxu0 0.0
  %2119 = vmatprep.subr.mxu0 0.0
  %2120 = vmatpush1.msra.mxu0 0.0
  %2121 = vmatprep.subr.mxu0 0.0
  %2122 = vmatpush1.msra.mxu0 0.0
  %2123 = vmatprep.subr.mxu0 0.0
  %2124 = vmatpush1.msra.mxu0 0.0
  %2125 = vmatprep.subr.mxu0 0.0
  %2126 = vmatpush1.msra.mxu0 0.0
  %2127 = vmatprep.subr.mxu0 0.0
  %2128 = vmatpush1.msra.mxu0 0.0
  %2129 = vmatprep.subr.mxu0 0.0
  %2130 = vmatpush1.msra.mxu0 0.0
  %2131 = vmatprep.mubr.f32.mxu0 0.0
  %2132 = vmatmul.mubr.f32.gmra.mrb[0].mxu0 %v2056
  %v2133 = vpop.f32.mrb[0].mxu0
  %v2134 = vadd.f32 %v2054, %v2133
  %v2135 = vpop.f32.mrb[0].mxu0
  %2136 = vmatprep.mubr.f32.mxu0 0.0
  %2137 = vmatmul.mubr.f32.gmra.mrb[0].mxu0 %v2059
  %v2138 = vpop.f32.mrb[0].mxu0
  %v2139 = vadd.f32 %v2054, %v2138
  %v2140 = vpop.f32.mrb[0].mxu0
  %2141 = vmatprep.mubr.f32.mxu0 0.0
  %2142 = vmatmul.mubr.f32.gmra.mrb[0].mxu0 %v2062
  %v2143 = vpop.f32.mrb[0].mxu0
  %v2144 = vadd.f32 %v2054, %v2143
  %v2145 = vpop.f32.mrb[0].mxu0
  %2146 = vmatprep.mubr.f32.mxu0 0.0
  %2147 = vmatmul.mubr.f32.gmra.mrb[0].mxu0 %v2065
  %v2148 = vpop.f32.mrb[0].mxu0
  %v2149 = vadd.f32 %v2054, %v2148
  %v2150 = vpop.f32.mrb[0].mxu0
  %2151 = vdwg.mxu0
  %2154 = vrot.lane.b32.xlu0 %v2134, 120
  %v2155 = vpop.permute.xlu0 %2154
  %2156 = vrot.lane.b32.xlu0 %v2139, 120
  %v2157 = vpop.permute.xlu0 %2156
  %2158 = vrot.lane.b32.xlu0 %v2134, 112
  %v2159 = vpop.permute.xlu0 %2158
  %2160 = vrot.lane.b32.xlu0 %v2139, 112
  %v2161 = vpop.permute.xlu0 %2160
  %2162 = vrot.lane.b32.xlu0 %v2134, 104
  %v2163 = vpop.permute.xlu0 %2162
  %2164 = vrot.lane.b32.xlu0 %v2139, 104
  %v2165 = vpop.permute.xlu0 %2164
  %2168 = vrot.lane.b32.xlu0 %v2144, 120
  %v2169 = vpop.permute.xlu0 %2168
  %2170 = vrot.lane.b32.xlu0 %v2149, 120
  %v2171 = vpop.permute.xlu0 %2170
  %2172 = vrot.lane.b32.xlu0 %v2144, 112
  %v2173 = vpop.permute.xlu0 %2172
  %2174 = vrot.lane.b32.xlu0 %v2149, 112
  %v2175 = vpop.permute.xlu0 %2174
  %2176 = vrot.lane.b32.xlu0 %v2144, 104
  %v2177 = vpop.permute.xlu0 %2176
  %2178 = vrot.lane.b32.xlu0 %v2149, 104
  %v2179 = vpop.permute.xlu0 %2178
  %2180 = vrot.lane.b32.xlu0 %v2144, 96
  %v2181 = vpop.permute.xlu0 %2180
  %v2182 = vsel %vm243, %v2134, 0
  %v2184 = vsel %vm243, %v2181, 0
  %2186 = vmatprep.subr.mxu0 0.0
  %2187 = vmatpush1.xpose.msra.mxu0 %v2184
  %2188 = vmatprep.subr.mxu0 0.0
  %2189 = vmatpush1.xpose.msra.mxu0 0.0
  %2190 = vmatprep.subr.mxu0 0.0
  %2191 = vmatpush1.xpose.msra.mxu0 0.0
  %2192 = vmatprep.subr.mxu0 0.0
  %2193 = vmatpush1.xpose.msra.mxu0 0.0
  %2194 = vmatprep.subr.mxu0 0.0
  %2195 = vmatpush1.xpose.msra.mxu0 0.0
  %2196 = vmatprep.subr.mxu0 0.0
  %2197 = vmatpush1.xpose.msra.mxu0 0.0
  %2198 = vmatprep.subr.mxu0 0.0
  %2199 = vmatpush1.xpose.msra.mxu0 0.0
  %2200 = vmatprep.subr.mxu0 0.0
  %2201 = vmatpush1.xpose.msra.mxu0 0.0
  %2202 = vmatprep.subr.mxu0 0.0
  %2203 = vmatpush1.xpose.msra.mxu0 0.0
  %2204 = vmatprep.subr.mxu0 0.0
  %2205 = vmatpush1.xpose.msra.mxu0 0.0
  %2206 = vmatprep.subr.mxu0 0.0
  %2207 = vmatpush1.xpose.msra.mxu0 0.0
  %2208 = vmatprep.subr.mxu0 0.0
  %2209 = vmatpush1.xpose.msra.mxu0 0.0
  %2210 = vmatprep.subr.mxu0 0.0
  %2211 = vmatpush1.xpose.msra.mxu0 0.0
  %2212 = vmatprep.subr.mxu0 0.0
  %2213 = vmatpush1.xpose.msra.mxu0 0.0
  %2214 = vmatprep.subr.mxu0 0.0
  %2215 = vmatpush1.xpose.msra.mxu0 0.0
  %2216 = vmatprep.subr.mxu0 0.0
  %2217 = vmatpush1.xpose.msra.mxu0 0.0
  %2218 = vmatprep.subr.mxu0 0.0
  %2219 = vmatpush1.xpose.msra.mxu0 0.0
  %2220 = vmatprep.subr.mxu0 0.0
  %2221 = vmatpush1.xpose.msra.mxu0 0.0
  %2222 = vmatprep.subr.mxu0 0.0
  %2223 = vmatpush1.xpose.msra.mxu0 0.0
  %2224 = vmatprep.subr.mxu0 0.0
  %2225 = vmatpush1.xpose.msra.mxu0 0.0
  %2226 = vmatprep.subr.mxu0 0.0
  %2227 = vmatpush1.xpose.msra.mxu0 0.0
  %2228 = vmatprep.subr.mxu0 0.0
  %2229 = vmatpush1.xpose.msra.mxu0 0.0
  %2230 = vmatprep.subr.mxu0 0.0
  %2231 = vmatpush1.xpose.msra.mxu0 0.0
  %2232 = vmatprep.subr.mxu0 0.0
  %2233 = vmatpush1.xpose.msra.mxu0 0.0
  %2234 = vmatprep.subr.mxu0 0.0
  %2235 = vmatpush1.xpose.msra.mxu0 0.0
  %2236 = vmatprep.subr.mxu0 0.0
  %2237 = vmatpush1.xpose.msra.mxu0 0.0
  %2238 = vmatprep.subr.mxu0 0.0
  %2239 = vmatpush1.xpose.msra.mxu0 0.0
  %2240 = vmatprep.subr.mxu0 0.0
  %2241 = vmatpush1.xpose.msra.mxu0 0.0
  %2242 = vmatprep.subr.mxu0 0.0
  %2243 = vmatpush1.xpose.msra.mxu0 0.0
  %2244 = vmatprep.subr.mxu0 0.0
  %2245 = vmatpush1.xpose.msra.mxu0 0.0
  %2246 = vmatprep.subr.mxu0 0.0
  %2247 = vmatpush1.xpose.msra.mxu0 0.0
  %2248 = vmatprep.subr.mxu0 0.0
  %2249 = vmatpush1.xpose.msra.mxu0 0.0
  %2250 = vmatprep.mubr.f32.mxu0 0.0
  %2251 = vmatmul.mubr.f32.gmra.mrb[0].mxu0 %v2182
  %v2252 = vpop.f32.mrb[0].mxu0
  %v2253 = vadd.f32 0.0, %v2252
  %v2254 = vpop.f32.mrb[0].mxu0
  %2255 = vdwg.mxu0
  %2256 = vrot.lane.b32.xlu0 %v2149, 96
  %v2257 = vpop.permute.xlu0 %2256
  %v2258 = vsel %vm243, %v2139, 0
  %v2260 = vsel %vm243, %v2257, 0
  %2262 = vmatprep.subr.mxu0 0.0
  %2263 = vmatpush1.xpose.msra.mxu0 %v2260
  %2264 = vmatprep.subr.mxu0 0.0
  %2265 = vmatpush1.xpose.msra.mxu0 0.0
  %2266 = vmatprep.subr.mxu0 0.0
  %2267 = vmatpush1.xpose.msra.mxu0 0.0
  %2268 = vmatprep.subr.mxu0 0.0
  %2269 = vmatpush1.xpose.msra.mxu0 0.0
  %2270 = vmatprep.subr.mxu0 0.0
  %2271 = vmatpush1.xpose.msra.mxu0 0.0
  %2272 = vmatprep.subr.mxu0 0.0
  %2273 = vmatpush1.xpose.msra.mxu0 0.0
  %2274 = vmatprep.subr.mxu0 0.0
  %2275 = vmatpush1.xpose.msra.mxu0 0.0
  %2276 = vmatprep.subr.mxu0 0.0
  %2277 = vmatpush1.xpose.msra.mxu0 0.0
  %2278 = vmatprep.subr.mxu0 0.0
  %2279 = vmatpush1.xpose.msra.mxu0 0.0
  %2280 = vmatprep.subr.mxu0 0.0
  %2281 = vmatpush1.xpose.msra.mxu0 0.0
  %2282 = vmatprep.subr.mxu0 0.0
  %2283 = vmatpush1.xpose.msra.mxu0 0.0
  %2284 = vmatprep.subr.mxu0 0.0
  %2285 = vmatpush1.xpose.msra.mxu0 0.0
  %2286 = vmatprep.subr.mxu0 0.0
  %2287 = vmatpush1.xpose.msra.mxu0 0.0
  %2288 = vmatprep.subr.mxu0 0.0
  %2289 = vmatpush1.xpose.msra.mxu0 0.0
  %2290 = vmatprep.subr.mxu0 0.0
  %2291 = vmatpush1.xpose.msra.mxu0 0.0
  %2292 = vmatprep.subr.mxu0 0.0
  %2293 = vmatpush1.xpose.msra.mxu0 0.0
  %2294 = vmatprep.subr.mxu0 0.0
  %2295 = vmatpush1.xpose.msra.mxu0 0.0
  %2296 = vmatprep.subr.mxu0 0.0
  %2297 = vmatpush1.xpose.msra.mxu0 0.0
  %2298 = vmatprep.subr.mxu0 0.0
  %2299 = vmatpush1.xpose.msra.mxu0 0.0
  %2300 = vmatprep.subr.mxu0 0.0
  %2301 = vmatpush1.xpose.msra.mxu0 0.0
  %2302 = vmatprep.subr.mxu0 0.0
  %2303 = vmatpush1.xpose.msra.mxu0 0.0
  %2304 = vmatprep.subr.mxu0 0.0
  %2305 = vmatpush1.xpose.msra.mxu0 0.0
  %2306 = vmatprep.subr.mxu0 0.0
  %2307 = vmatpush1.xpose.msra.mxu0 0.0
  %2308 = vmatprep.subr.mxu0 0.0
  %2309 = vmatpush1.xpose.msra.mxu0 0.0
  %2310 = vmatprep.subr.mxu0 0.0
  %2311 = vmatpush1.xpose.msra.mxu0 0.0
  %2312 = vmatprep.subr.mxu0 0.0
  %2313 = vmatpush1.xpose.msra.mxu0 0.0
  %2314 = vmatprep.subr.mxu0 0.0
  %2315 = vmatpush1.xpose.msra.mxu0 0.0
  %2316 = vmatprep.subr.mxu0 0.0
  %2317 = vmatpush1.xpose.msra.mxu0 0.0
  %2318 = vmatprep.subr.mxu0 0.0
  %2319 = vmatpush1.xpose.msra.mxu0 0.0
  %2320 = vmatprep.subr.mxu0 0.0
  %2321 = vmatpush1.xpose.msra.mxu0 0.0
  %2322 = vmatprep.subr.mxu0 0.0
  %2323 = vmatpush1.xpose.msra.mxu0 0.0
  %2324 = vmatprep.subr.mxu0 0.0
  %2325 = vmatpush1.xpose.msra.mxu0 0.0
  %2326 = vmatprep.mubr.f32.mxu0 0.0
  %2327 = vmatmul.mubr.f32.gmra.mrb[0].mxu0 %v2258
  %v2328 = vpop.f32.mrb[0].mxu0
  %v2329 = vadd.f32 0.0, %v2328
  %v2330 = vpop.f32.mrb[0].mxu0
  %2331 = vdwg.mxu0
  %2332 = vrot.lane.b32.xlu0 %v2169, 96
  %v2333 = vpop.permute.xlu0 %2332
  %v2334 = vsel %vm243, %v2155, 0
  %v2336 = vsel %vm243, %v2333, 0
  %2338 = vmatprep.subr.mxu0 0.0
  %2339 = vmatpush1.xpose.msra.mxu0 %v2336
  %2340 = vmatprep.subr.mxu0 0.0
  %2341 = vmatpush1.xpose.msra.mxu0 0.0
  %2342 = vmatprep.subr.mxu0 0.0
  %2343 = vmatpush1.xpose.msra.mxu0 0.0
  %2344 = vmatprep.subr.mxu0 0.0
  %2345 = vmatpush1.xpose.msra.mxu0 0.0
  %2346 = vmatprep.subr.mxu0 0.0
  %2347 = vmatpush1.xpose.msra.mxu0 0.0
  %2348 = vmatprep.subr.mxu0 0.0
  %2349 = vmatpush1.xpose.msra.mxu0 0.0
  %2350 = vmatprep.subr.mxu0 0.0
  %2351 = vmatpush1.xpose.msra.mxu0 0.0
  %2352 = vmatprep.subr.mxu0 0.0
  %2353 = vmatpush1.xpose.msra.mxu0 0.0
  %2354 = vmatprep.subr.mxu0 0.0
  %2355 = vmatpush1.xpose.msra.mxu0 0.0
  %2356 = vmatprep.subr.mxu0 0.0
  %2357 = vmatpush1.xpose.msra.mxu0 0.0
  %2358 = vmatprep.subr.mxu0 0.0
  %2359 = vmatpush1.xpose.msra.mxu0 0.0
  %2360 = vmatprep.subr.mxu0 0.0
  %2361 = vmatpush1.xpose.msra.mxu0 0.0
  %2362 = vmatprep.subr.mxu0 0.0
  %2363 = vmatpush1.xpose.msra.mxu0 0.0
  %2364 = vmatprep.subr.mxu0 0.0
  %2365 = vmatpush1.xpose.msra.mxu0 0.0
  %2366 = vmatprep.subr.mxu0 0.0
  %2367 = vmatpush1.xpose.msra.mxu0 0.0
  %2368 = vmatprep.subr.mxu0 0.0
  %2369 = vmatpush1.xpose.msra.mxu0 0.0
  %2370 = vmatprep.subr.mxu0 0.0
  %2371 = vmatpush1.xpose.msra.mxu0 0.0
  %2372 = vmatprep.subr.mxu0 0.0
  %2373 = vmatpush1.xpose.msra.mxu0 0.0
  %2374 = vmatprep.subr.mxu0 0.0
  %2375 = vmatpush1.xpose.msra.mxu0 0.0
  %2376 = vmatprep.subr.mxu0 0.0
  %2377 = vmatpush1.xpose.msra.mxu0 0.0
  %2378 = vmatprep.subr.mxu0 0.0
  %2379 = vmatpush1.xpose.msra.mxu0 0.0
  %2380 = vmatprep.subr.mxu0 0.0
  %2381 = vmatpush1.xpose.msra.mxu0 0.0
  %2382 = vmatprep.subr.mxu0 0.0
  %2383 = vmatpush1.xpose.msra.mxu0 0.0
  %2384 = vmatprep.subr.mxu0 0.0
  %2385 = vmatpush1.xpose.msra.mxu0 0.0
  %2386 = vmatprep.subr.mxu0 0.0
  %2387 = vmatpush1.xpose.msra.mxu0 0.0
  %2388 = vmatprep.subr.mxu0 0.0
  %2389 = vmatpush1.xpose.msra.mxu0 0.0
  %2390 = vmatprep.subr.mxu0 0.0
  %2391 = vmatpush1.xpose.msra.mxu0 0.0
  %2392 = vmatprep.subr.mxu0 0.0
  %2393 = vmatpush1.xpose.msra.mxu0 0.0
  %2394 = vmatprep.subr.mxu0 0.0
  %2395 = vmatpush1.xpose.msra.mxu0 0.0
  %2396 = vmatprep.subr.mxu0 0.0
  %2397 = vmatpush1.xpose.msra.mxu0 0.0
  %2398 = vmatprep.subr.mxu0 0.0
  %2399 = vmatpush1.xpose.msra.mxu0 0.0
  %2400 = vmatprep.subr.mxu0 0.0
  %2401 = vmatpush1.xpose.msra.mxu0 0.0
  %2402 = vmatprep.mubr.f32.mxu0 0.0
  %2403 = vmatmul.mubr.f32.gmra.mrb[0].mxu0 %v2334
  %v2404 = vpop.f32.mrb[0].mxu0
  %v2405 = vadd.f32 0.0, %v2404
  %v2406 = vpop.f32.mrb[0].mxu0
  %2407 = vdwg.mxu0
  %2408 = vrot.lane.b32.xlu0 %v2171, 96
  %v2409 = vpop.permute.xlu0 %2408
  %v2410 = vsel %vm243, %v2157, 0
  %v2412 = vsel %vm243, %v2409, 0
  %2414 = vmatprep.subr.mxu0 0.0
  %2415 = vmatpush1.xpose.msra.mxu0 %v2412
  %2416 = vmatprep.subr.mxu0 0.0
  %2417 = vmatpush1.xpose.msra.mxu0 0.0
  %2418 = vmatprep.subr.mxu0 0.0
  %2419 = vmatpush1.xpose.msra.mxu0 0.0
  %2420 = vmatprep.subr.mxu0 0.0
  %2421 = vmatpush1.xpose.msra.mxu0 0.0
  %2422 = vmatprep.subr.mxu0 0.0
  %2423 = vmatpush1.xpose.msra.mxu0 0.0
  %2424 = vmatprep.subr.mxu0 0.0
  %2425 = vmatpush1.xpose.msra.mxu0 0.0
  %2426 = vmatprep.subr.mxu0 0.0
  %2427 = vmatpush1.xpose.msra.mxu0 0.0
  %2428 = vmatprep.subr.mxu0 0.0
  %2429 = vmatpush1.xpose.msra.mxu0 0.0
  %2430 = vmatprep.subr.mxu0 0.0
  %2431 = vmatpush1.xpose.msra.mxu0 0.0
  %2432 = vmatprep.subr.mxu0 0.0
  %2433 = vmatpush1.xpose.msra.mxu0 0.0
  %2434 = vmatprep.subr.mxu0 0.0
  %2435 = vmatpush1.xpose.msra.mxu0 0.0
  %2436 = vmatprep.subr.mxu0 0.0
  %2437 = vmatpush1.xpose.msra.mxu0 0.0
  %2438 = vmatprep.subr.mxu0 0.0
  %2439 = vmatpush1.xpose.msra.mxu0 0.0
  %2440 = vmatprep.subr.mxu0 0.0
  %2441 = vmatpush1.xpose.msra.mxu0 0.0
  %2442 = vmatprep.subr.mxu0 0.0
  %2443 = vmatpush1.xpose.msra.mxu0 0.0
  %2444 = vmatprep.subr.mxu0 0.0
  %2445 = vmatpush1.xpose.msra.mxu0 0.0
  %2446 = vmatprep.subr.mxu0 0.0
  %2447 = vmatpush1.xpose.msra.mxu0 0.0
  %2448 = vmatprep.subr.mxu0 0.0
  %2449 = vmatpush1.xpose.msra.mxu0 0.0
  %2450 = vmatprep.subr.mxu0 0.0
  %2451 = vmatpush1.xpose.msra.mxu0 0.0
  %2452 = vmatprep.subr.mxu0 0.0
  %2453 = vmatpush1.xpose.msra.mxu0 0.0
  %2454 = vmatprep.subr.mxu0 0.0
  %2455 = vmatpush1.xpose.msra.mxu0 0.0
  %2456 = vmatprep.subr.mxu0 0.0
  %2457 = vmatpush1.xpose.msra.mxu0 0.0
  %2458 = vmatprep.subr.mxu0 0.0
  %2459 = vmatpush1.xpose.msra.mxu0 0.0
  %2460 = vmatprep.subr.mxu0 0.0
  %2461 = vmatpush1.xpose.msra.mxu0 0.0
  %2462 = vmatprep.subr.mxu0 0.0
  %2463 = vmatpush1.xpose.msra.mxu0 0.0
  %2464 = vmatprep.subr.mxu0 0.0
  %2465 = vmatpush1.xpose.msra.mxu0 0.0
  %2466 = vmatprep.subr.mxu0 0.0
  %2467 = vmatpush1.xpose.msra.mxu0 0.0
  %2468 = vmatprep.subr.mxu0 0.0
  %2469 = vmatpush1.xpose.msra.mxu0 0.0
  %2470 = vmatprep.subr.mxu0 0.0
  %2471 = vmatpush1.xpose.msra.mxu0 0.0
  %2472 = vmatprep.subr.mxu0 0.0
  %2473 = vmatpush1.xpose.msra.mxu0 0.0
  %2474 = vmatprep.subr.mxu0 0.0
  %2475 = vmatpush1.xpose.msra.mxu0 0.0
  %2476 = vmatprep.subr.mxu0 0.0
  %2477 = vmatpush1.xpose.msra.mxu0 0.0
  %2478 = vmatprep.mubr.f32.mxu0 0.0
  %2479 = vmatmul.mubr.f32.gmra.mrb[0].mxu0 %v2410
  %v2480 = vpop.f32.mrb[0].mxu0
  %v2481 = vadd.f32 0.0, %v2480
  %v2482 = vpop.f32.mrb[0].mxu0
  %2483 = vdwg.mxu0
  %2484 = vrot.lane.b32.xlu0 %v2173, 96
  %v2485 = vpop.permute.xlu0 %2484
  %v2486 = vsel %vm243, %v2159, 0
  %v2488 = vsel %vm243, %v2485, 0
  %2490 = vmatprep.subr.mxu0 0.0
  %2491 = vmatpush1.xpose.msra.mxu0 %v2488
  %2492 = vmatprep.subr.mxu0 0.0
  %2493 = vmatpush1.xpose.msra.mxu0 0.0
  %2494 = vmatprep.subr.mxu0 0.0
  %2495 = vmatpush1.xpose.msra.mxu0 0.0
  %2496 = vmatprep.subr.mxu0 0.0
  %2497 = vmatpush1.xpose.msra.mxu0 0.0
  %2498 = vmatprep.subr.mxu0 0.0
  %2499 = vmatpush1.xpose.msra.mxu0 0.0
  %2500 = vmatprep.subr.mxu0 0.0
  %2501 = vmatpush1.xpose.msra.mxu0 0.0
  %2502 = vmatprep.subr.mxu0 0.0
  %2503 = vmatpush1.xpose.msra.mxu0 0.0
  %2504 = vmatprep.subr.mxu0 0.0
  %2505 = vmatpush1.xpose.msra.mxu0 0.0
  %2506 = vmatprep.subr.mxu0 0.0
  %2507 = vmatpush1.xpose.msra.mxu0 0.0
  %2508 = vmatprep.subr.mxu0 0.0
  %2509 = vmatpush1.xpose.msra.mxu0 0.0
  %2510 = vmatprep.subr.mxu0 0.0
  %2511 = vmatpush1.xpose.msra.mxu0 0.0
  %2512 = vmatprep.subr.mxu0 0.0
  %2513 = vmatpush1.xpose.msra.mxu0 0.0
  %2514 = vmatprep.subr.mxu0 0.0
  %2515 = vmatpush1.xpose.msra.mxu0 0.0
  %2516 = vmatprep.subr.mxu0 0.0
  %2517 = vmatpush1.xpose.msra.mxu0 0.0
  %2518 = vmatprep.subr.mxu0 0.0
  %2519 = vmatpush1.xpose.msra.mxu0 0.0
  %2520 = vmatprep.subr.mxu0 0.0
  %2521 = vmatpush1.xpose.msra.mxu0 0.0
  %2522 = vmatprep.subr.mxu0 0.0
  %2523 = vmatpush1.xpose.msra.mxu0 0.0
  %2524 = vmatprep.subr.mxu0 0.0
  %2525 = vmatpush1.xpose.msra.mxu0 0.0
  %2526 = vmatprep.subr.mxu0 0.0
  %2527 = vmatpush1.xpose.msra.mxu0 0.0
  %2528 = vmatprep.subr.mxu0 0.0
  %2529 = vmatpush1.xpose.msra.mxu0 0.0
  %2530 = vmatprep.subr.mxu0 0.0
  %2531 = vmatpush1.xpose.msra.mxu0 0.0
  %2532 = vmatprep.subr.mxu0 0.0
  %2533 = vmatpush1.xpose.msra.mxu0 0.0
  %2534 = vmatprep.subr.mxu0 0.0
  %2535 = vmatpush1.xpose.msra.mxu0 0.0
  %2536 = vmatprep.subr.mxu0 0.0
  %2537 = vmatpush1.xpose.msra.mxu0 0.0
  %2538 = vmatprep.subr.mxu0 0.0
  %2539 = vmatpush1.xpose.msra.mxu0 0.0
  %2540 = vmatprep.subr.mxu0 0.0
  %2541 = vmatpush1.xpose.msra.mxu0 0.0
  %2542 = vmatprep.subr.mxu0 0.0
  %2543 = vmatpush1.xpose.msra.mxu0 0.0
  %2544 = vmatprep.subr.mxu0 0.0
  %2545 = vmatpush1.xpose.msra.mxu0 0.0
  %2546 = vmatprep.subr.mxu0 0.0
  %2547 = vmatpush1.xpose.msra.mxu0 0.0
  %2548 = vmatprep.subr.mxu0 0.0
  %2549 = vmatpush1.xpose.msra.mxu0 0.0
  %2550 = vmatprep.subr.mxu0 0.0
  %2551 = vmatpush1.xpose.msra.mxu0 0.0
  %2552 = vmatprep.subr.mxu0 0.0
  %2553 = vmatpush1.xpose.msra.mxu0 0.0
  %2554 = vmatprep.mubr.f32.mxu0 0.0
  %2555 = vmatmul.mubr.f32.gmra.mrb[0].mxu0 %v2486
  %v2556 = vpop.f32.mrb[0].mxu0
  %v2557 = vadd.f32 0.0, %v2556
  %v2558 = vpop.f32.mrb[0].mxu0
  %2559 = vdwg.mxu0
  %2560 = vrot.lane.b32.xlu0 %v2175, 96
  %v2561 = vpop.permute.xlu0 %2560
  %v2562 = vsel %vm243, %v2161, 0
  %v2564 = vsel %vm243, %v2561, 0
  %2566 = vmatprep.subr.mxu0 0.0
  %2567 = vmatpush1.xpose.msra.mxu0 %v2564
  %2568 = vmatprep.subr.mxu0 0.0
  %2569 = vmatpush1.xpose.msra.mxu0 0.0
  %2570 = vmatprep.subr.mxu0 0.0
  %2571 = vmatpush1.xpose.msra.mxu0 0.0
  %2572 = vmatprep.subr.mxu0 0.0
  %2573 = vmatpush1.xpose.msra.mxu0 0.0
  %2574 = vmatprep.subr.mxu0 0.0
  %2575 = vmatpush1.xpose.msra.mxu0 0.0
  %2576 = vmatprep.subr.mxu0 0.0
  %2577 = vmatpush1.xpose.msra.mxu0 0.0
  %2578 = vmatprep.subr.mxu0 0.0
  %2579 = vmatpush1.xpose.msra.mxu0 0.0
  %2580 = vmatprep.subr.mxu0 0.0
  %2581 = vmatpush1.xpose.msra.mxu0 0.0
  %2582 = vmatprep.subr.mxu0 0.0
  %2583 = vmatpush1.xpose.msra.mxu0 0.0
  %2584 = vmatprep.subr.mxu0 0.0
  %2585 = vmatpush1.xpose.msra.mxu0 0.0
  %2586 = vmatprep.subr.mxu0 0.0
  %2587 = vmatpush1.xpose.msra.mxu0 0.0
  %2588 = vmatprep.subr.mxu0 0.0
  %2589 = vmatpush1.xpose.msra.mxu0 0.0
  %2590 = vmatprep.subr.mxu0 0.0
  %2591 = vmatpush1.xpose.msra.mxu0 0.0
  %2592 = vmatprep.subr.mxu0 0.0
  %2593 = vmatpush1.xpose.msra.mxu0 0.0
  %2594 = vmatprep.subr.mxu0 0.0
  %2595 = vmatpush1.xpose.msra.mxu0 0.0
  %2596 = vmatprep.subr.mxu0 0.0
  %2597 = vmatpush1.xpose.msra.mxu0 0.0
  %2598 = vmatprep.subr.mxu0 0.0
  %2599 = vmatpush1.xpose.msra.mxu0 0.0
  %2600 = vmatprep.subr.mxu0 0.0
  %2601 = vmatpush1.xpose.msra.mxu0 0.0
  %2602 = vmatprep.subr.mxu0 0.0
  %2603 = vmatpush1.xpose.msra.mxu0 0.0
  %2604 = vmatprep.subr.mxu0 0.0
  %2605 = vmatpush1.xpose.msra.mxu0 0.0
  %2606 = vmatprep.subr.mxu0 0.0
  %2607 = vmatpush1.xpose.msra.mxu0 0.0
  %2608 = vmatprep.subr.mxu0 0.0
  %2609 = vmatpush1.xpose.msra.mxu0 0.0
  %2610 = vmatprep.subr.mxu0 0.0
  %2611 = vmatpush1.xpose.msra.mxu0 0.0
  %2612 = vmatprep.subr.mxu0 0.0
  %2613 = vmatpush1.xpose.msra.mxu0 0.0
  %2614 = vmatprep.subr.mxu0 0.0
  %2615 = vmatpush1.xpose.msra.mxu0 0.0
  %2616 = vmatprep.subr.mxu0 0.0
  %2617 = vmatpush1.xpose.msra.mxu0 0.0
  %2618 = vmatprep.subr.mxu0 0.0
  %2619 = vmatpush1.xpose.msra.mxu0 0.0
  %2620 = vmatprep.subr.mxu0 0.0
  %2621 = vmatpush1.xpose.msra.mxu0 0.0
  %2622 = vmatprep.subr.mxu0 0.0
  %2623 = vmatpush1.xpose.msra.mxu0 0.0
  %2624 = vmatprep.subr.mxu0 0.0
  %2625 = vmatpush1.xpose.msra.mxu0 0.0
  %2626 = vmatprep.subr.mxu0 0.0
  %2627 = vmatpush1.xpose.msra.mxu0 0.0
  %2628 = vmatprep.subr.mxu0 0.0
  %2629 = vmatpush1.xpose.msra.mxu0 0.0
  %2630 = vmatprep.mubr.f32.mxu0 0.0
  %2631 = vmatmul.mubr.f32.gmra.mrb[0].mxu0 %v2562
  %v2632 = vpop.f32.mrb[0].mxu0
  %v2633 = vadd.f32 0.0, %v2632
  %v2634 = vpop.f32.mrb[0].mxu0
  %2635 = vdwg.mxu0
  %2636 = vrot.lane.b32.xlu0 %v2177, 96
  %v2637 = vpop.permute.xlu0 %2636
  %v2638 = vsel %vm243, %v2163, 0
  %v2640 = vsel %vm243, %v2637, 0
  %2642 = vmatprep.subr.mxu0 0.0
  %2643 = vmatpush1.xpose.msra.mxu0 %v2640
  %2644 = vmatprep.subr.mxu0 0.0
  %2645 = vmatpush1.xpose.msra.mxu0 0.0
  %2646 = vmatprep.subr.mxu0 0.0
  %2647 = vmatpush1.xpose.msra.mxu0 0.0
  %2648 = vmatprep.subr.mxu0 0.0
  %2649 = vmatpush1.xpose.msra.mxu0 0.0
  %2650 = vmatprep.subr.mxu0 0.0
  %2651 = vmatpush1.xpose.msra.mxu0 0.0
  %2652 = vmatprep.subr.mxu0 0.0
  %2653 = vmatpush1.xpose.msra.mxu0 0.0
  %2654 = vmatprep.subr.mxu0 0.0
  %2655 = vmatpush1.xpose.msra.mxu0 0.0
  %2656 = vmatprep.subr.mxu0 0.0
  %2657 = vmatpush1.xpose.msra.mxu0 0.0
  %2658 = vmatprep.subr.mxu0 0.0
  %2659 = vmatpush1.xpose.msra.mxu0 0.0
  %2660 = vmatprep.subr.mxu0 0.0
  %2661 = vmatpush1.xpose.msra.mxu0 0.0
  %2662 = vmatprep.subr.mxu0 0.0
  %2663 = vmatpush1.xpose.msra.mxu0 0.0
  %2664 = vmatprep.subr.mxu0 0.0
  %2665 = vmatpush1.xpose.msra.mxu0 0.0
  %2666 = vmatprep.subr.mxu0 0.0
  %2667 = vmatpush1.xpose.msra.mxu0 0.0
  %2668 = vmatprep.subr.mxu0 0.0
  %2669 = vmatpush1.xpose.msra.mxu0 0.0
  %2670 = vmatprep.subr.mxu0 0.0
  %2671 = vmatpush1.xpose.msra.mxu0 0.0
  %2672 = vmatprep.subr.mxu0 0.0
  %2673 = vmatpush1.xpose.msra.mxu0 0.0
  %2674 = vmatprep.subr.mxu0 0.0
  %2675 = vmatpush1.xpose.msra.mxu0 0.0
  %2676 = vmatprep.subr.mxu0 0.0
  %2677 = vmatpush1.xpose.msra.mxu0 0.0
  %2678 = vmatprep.subr.mxu0 0.0
  %2679 = vmatpush1.xpose.msra.mxu0 0.0
  %2680 = vmatprep.subr.mxu0 0.0
  %2681 = vmatpush1.xpose.msra.mxu0 0.0
  %2682 = vmatprep.subr.mxu0 0.0
  %2683 = vmatpush1.xpose.msra.mxu0 0.0
  %2684 = vmatprep.subr.mxu0 0.0
  %2685 = vmatpush1.xpose.msra.mxu0 0.0
  %2686 = vmatprep.subr.mxu0 0.0
  %2687 = vmatpush1.xpose.msra.mxu0 0.0
  %2688 = vmatprep.subr.mxu0 0.0
  %2689 = vmatpush1.xpose.msra.mxu0 0.0
  %2690 = vmatprep.subr.mxu0 0.0
  %2691 = vmatpush1.xpose.msra.mxu0 0.0
  %2692 = vmatprep.subr.mxu0 0.0
  %2693 = vmatpush1.xpose.msra.mxu0 0.0
  %2694 = vmatprep.subr.mxu0 0.0
  %2695 = vmatpush1.xpose.msra.mxu0 0.0
  %2696 = vmatprep.subr.mxu0 0.0
  %2697 = vmatpush1.xpose.msra.mxu0 0.0
  %2698 = vmatprep.subr.mxu0 0.0
  %2699 = vmatpush1.xpose.msra.mxu0 0.0
  %2700 = vmatprep.subr.mxu0 0.0
  %2701 = vmatpush1.xpose.msra.mxu0 0.0
  %2702 = vmatprep.subr.mxu0 0.0
  %2703 = vmatpush1.xpose.msra.mxu0 0.0
  %2704 = vmatprep.subr.mxu0 0.0
  %2705 = vmatpush1.xpose.msra.mxu0 0.0
  %2706 = vmatprep.mubr.f32.mxu0 0.0
  %2707 = vmatmul.mubr.f32.gmra.mrb[0].mxu0 %v2638
  %v2708 = vpop.f32.mrb[0].mxu0
  %v2709 = vadd.f32 0.0, %v2708
  %v2710 = vpop.f32.mrb[0].mxu0
  %2711 = vdwg.mxu0
  %2712 = vrot.lane.b32.xlu0 %v2179, 96
  %v2713 = vpop.permute.xlu0 %2712
  %v2714 = vsel %vm243, %v2165, 0
  %v2716 = vsel %vm243, %v2713, 0
  %2718 = vmatprep.subr.mxu0 0.0
  %2719 = vmatpush1.xpose.msra.mxu0 %v2716
  %2720 = vmatprep.subr.mxu0 0.0
  %2721 = vmatpush1.xpose.msra.mxu0 0.0
  %2722 = vmatprep.subr.mxu0 0.0
  %2723 = vmatpush1.xpose.msra.mxu0 0.0
  %2724 = vmatprep.subr.mxu0 0.0
  %2725 = vmatpush1.xpose.msra.mxu0 0.0
  %2726 = vmatprep.subr.mxu0 0.0
  %2727 = vmatpush1.xpose.msra.mxu0 0.0
  %2728 = vmatprep.subr.mxu0 0.0
  %2729 = vmatpush1.xpose.msra.mxu0 0.0
  %2730 = vmatprep.subr.mxu0 0.0
  %2731 = vmatpush1.xpose.msra.mxu0 0.0
  %2732 = vmatprep.subr.mxu0 0.0
  %2733 = vmatpush1.xpose.msra.mxu0 0.0
  %2734 = vmatprep.subr.mxu0 0.0
  %2735 = vmatpush1.xpose.msra.mxu0 0.0
  %2736 = vmatprep.subr.mxu0 0.0
  %2737 = vmatpush1.xpose.msra.mxu0 0.0
  %2738 = vmatprep.subr.mxu0 0.0
  %2739 = vmatpush1.xpose.msra.mxu0 0.0
  %2740 = vmatprep.subr.mxu0 0.0
  %2741 = vmatpush1.xpose.msra.mxu0 0.0
  %2742 = vmatprep.subr.mxu0 0.0
  %2743 = vmatpush1.xpose.msra.mxu0 0.0
  %2744 = vmatprep.subr.mxu0 0.0
  %2745 = vmatpush1.xpose.msra.mxu0 0.0
  %2746 = vmatprep.subr.mxu0 0.0
  %2747 = vmatpush1.xpose.msra.mxu0 0.0
  %2748 = vmatprep.subr.mxu0 0.0
  %2749 = vmatpush1.xpose.msra.mxu0 0.0
  %2750 = vmatprep.subr.mxu0 0.0
  %2751 = vmatpush1.xpose.msra.mxu0 0.0
  %2752 = vmatprep.subr.mxu0 0.0
  %2753 = vmatpush1.xpose.msra.mxu0 0.0
  %2754 = vmatprep.subr.mxu0 0.0
  %2755 = vmatpush1.xpose.msra.mxu0 0.0
  %2756 = vmatprep.subr.mxu0 0.0
  %2757 = vmatpush1.xpose.msra.mxu0 0.0
  %2758 = vmatprep.subr.mxu0 0.0
  %2759 = vmatpush1.xpose.msra.mxu0 0.0
  %2760 = vmatprep.subr.mxu0 0.0
  %2761 = vmatpush1.xpose.msra.mxu0 0.0
  %2762 = vmatprep.subr.mxu0 0.0
  %2763 = vmatpush1.xpose.msra.mxu0 0.0
  %2764 = vmatprep.subr.mxu0 0.0
  %2765 = vmatpush1.xpose.msra.mxu0 0.0
  %2766 = vmatprep.subr.mxu0 0.0
  %2767 = vmatpush1.xpose.msra.mxu0 0.0
  %2768 = vmatprep.subr.mxu0 0.0
  %2769 = vmatpush1.xpose.msra.mxu0 0.0
  %2770 = vmatprep.subr.mxu0 0.0
  %2771 = vmatpush1.xpose.msra.mxu0 0.0
  %2772 = vmatprep.subr.mxu0 0.0
  %2773 = vmatpush1.xpose.msra.mxu0 0.0
  %2774 = vmatprep.subr.mxu0 0.0
  %2775 = vmatpush1.xpose.msra.mxu0 0.0
  %2776 = vmatprep.subr.mxu0 0.0
  %2777 = vmatpush1.xpose.msra.mxu0 0.0
  %2778 = vmatprep.subr.mxu0 0.0
  %2779 = vmatpush1.xpose.msra.mxu0 0.0
  %2780 = vmatprep.subr.mxu0 0.0
  %2781 = vmatpush1.xpose.msra.mxu0 0.0
  %2782 = vmatprep.mubr.f32.mxu0 0.0
  %2783 = vmatmul.mubr.f32.gmra.mrb[0].mxu0 %v2714
  %v2784 = vpop.f32.mrb[0].mxu0
  %v2785 = vadd.f32 0.0, %v2784
  %v2786 = vpop.f32.mrb[0].mxu0
  %2787 = vdwg.mxu0
  %v2788 = vmul.f32 %v2253, 0.35355338
  %v2789 = vmul.f32 %v2329, 0.35355338
  %v2790 = vmul.f32 %v2405, 0.35355338
  %v2791 = vmul.f32 %v2481, 0.35355338
  %v2792 = vmul.f32 %v2557, 0.35355338
  %v2793 = vmul.f32 %v2633, 0.35355338
  %v2794 = vmul.f32 %v2709, 0.35355338
  %v2795 = vmul.f32 %v2785, 0.35355338
  %v2796 = vsel %vm243, %v2788, -inf
  %2797 = vmax.xlane.f32.xlu0 %v2796
  %v2798 = vpop.xlane.xlu0 %2797
  %v2799 = vsel %vm243, %v2789, -inf
  %2800 = vmax.xlane.f32.xlu0 %v2799
  %v2801 = vpop.xlane.xlu0 %2800
  %v2802 = vsel %vm243, %v2790, -inf
  %2803 = vmax.xlane.f32.xlu0 %v2802
  %v2804 = vpop.xlane.xlu0 %2803
  %v2805 = vsel %vm243, %v2791, -inf
  %2806 = vmax.xlane.f32.xlu0 %v2805
  %v2807 = vpop.xlane.xlu0 %2806
  %v2808 = vsel %vm243, %v2792, -inf
  %2809 = vmax.xlane.f32.xlu0 %v2808
  %v2810 = vpop.xlane.xlu0 %2809
  %v2811 = vsel %vm243, %v2793, -inf
  %2812 = vmax.xlane.f32.xlu0 %v2811
  %v2813 = vpop.xlane.xlu0 %2812
  %v2814 = vsel %vm243, %v2794, -inf
  %2815 = vmax.xlane.f32.xlu0 %v2814
  %v2816 = vpop.xlane.xlu0 %2815
  %v2817 = vsel %vm243, %v2795, -inf
  %2818 = vmax.xlane.f32.xlu0 %v2817
  %v2819 = vpop.xlane.xlu0 %2818
  %v2820 = vsub.f32 %v2788, %v2798
  %v2821 = vsub.f32 %v2789, %v2801
  %v2822 = vsub.f32 %v2790, %v2804
  %v2823 = vsub.f32 %v2791, %v2807
  %v2824 = vsub.f32 %v2792, %v2810
  %v2825 = vsub.f32 %v2793, %v2813
  %v2826 = vsub.f32 %v2794, %v2816
  %v2827 = vsub.f32 %v2795, %v2819
  %v2828 = vmul.f32 %v2820, 1.442695
  %v2829 = vpow.pop %v2828
  %v2830 = vmul.f32 %v2821, 1.442695
  %v2831 = vpow.pop %v2830
  %v2832 = vmul.f32 %v2822, 1.442695
  %v2833 = vpow.pop %v2832
  %v2834 = vmul.f32 %v2823, 1.442695
  %v2835 = vpow.pop %v2834
  %v2836 = vmul.f32 %v2824, 1.442695
  %v2837 = vpow.pop %v2836
  %v2838 = vmul.f32 %v2825, 1.442695
  %v2839 = vpow.pop %v2838
  %v2840 = vmul.f32 %v2826, 1.442695
  %v2841 = vpow.pop %v2840
  %v2842 = vmul.f32 %v2827, 1.442695
  %v2843 = vpow.pop %v2842
  %v2844 = vsel %vm243, %v2829, 0.0
  %2845 = vadd.xlane.f32.xlu0 %v2844
  %v2846 = vpop.xlane.xlu0 %2845
  %v2847 = vsel %vm243, %v2831, 0.0
  %2848 = vadd.xlane.f32.xlu0 %v2847
  %v2849 = vpop.xlane.xlu0 %2848
  %v2850 = vsel %vm243, %v2833, 0.0
  %2851 = vadd.xlane.f32.xlu0 %v2850
  %v2852 = vpop.xlane.xlu0 %2851
  %v2853 = vsel %vm243, %v2835, 0.0
  %2854 = vadd.xlane.f32.xlu0 %v2853
  %v2855 = vpop.xlane.xlu0 %2854
  %v2856 = vsel %vm243, %v2837, 0.0
  %2857 = vadd.xlane.f32.xlu0 %v2856
  %v2858 = vpop.xlane.xlu0 %2857
  %v2859 = vsel %vm243, %v2839, 0.0
  %2860 = vadd.xlane.f32.xlu0 %v2859
  %v2861 = vpop.xlane.xlu0 %2860
  %v2862 = vsel %vm243, %v2841, 0.0
  %2863 = vadd.xlane.f32.xlu0 %v2862
  %v2864 = vpop.xlane.xlu0 %2863
  %v2865 = vsel %vm243, %v2843, 0.0
  %2866 = vadd.xlane.f32.xlu0 %v2865
  %v2867 = vpop.xlane.xlu0 %2866
  %v2868 = vrcp.pop %v2846
  %v2869 = vmul.f32 %v2829, %v2868
  %v2870 = vrcp.pop %v2849
  %v2871 = vmul.f32 %v2831, %v2870
  %v2872 = vrcp.pop %v2852
  %v2873 = vmul.f32 %v2833, %v2872
  %v2874 = vrcp.pop %v2855
  %v2875 = vmul.f32 %v2835, %v2874
  %v2876 = vrcp.pop %v2858
  %v2877 = vmul.f32 %v2837, %v2876
  %v2878 = vrcp.pop %v2861
  %v2879 = vmul.f32 %v2839, %v2878
  %v2880 = vrcp.pop %v2864
  %v2881 = vmul.f32 %v2841, %v2880
  %v2882 = vrcp.pop %v2867
  %v2883 = vmul.f32 %v2843, %v2882
  %2884 = vrot.lane.b32.xlu0 %v2144, 64
  %v2885 = vpop.permute.xlu0 %2884
  %v2888 = vsel %vm243, %v2869, 0
  %2890 = vmatprep.subr.mxu0 0.0
  %2891 = vmatpush1.msra.mxu0 %v2885
  %2892 = vmatprep.subr.mxu0 0.0
  %2893 = vmatpush1.msra.mxu0 0.0
  %2894 = vmatprep.subr.mxu0 0.0
  %2895 = vmatpush1.msra.mxu0 0.0
  %2896 = vmatprep.subr.mxu0 0.0
  %2897 = vmatpush1.msra.mxu0 0.0
  %2898 = vmatprep.subr.mxu0 0.0
  %2899 = vmatpush1.msra.mxu0 0.0
  %2900 = vmatprep.subr.mxu0 0.0
  %2901 = vmatpush1.msra.mxu0 0.0
  %2902 = vmatprep.subr.mxu0 0.0
  %2903 = vmatpush1.msra.mxu0 0.0
  %2904 = vmatprep.subr.mxu0 0.0
  %2905 = vmatpush1.msra.mxu0 0.0
  %2906 = vmatprep.subr.mxu0 0.0
  %2907 = vmatpush1.msra.mxu0 0.0
  %2908 = vmatprep.subr.mxu0 0.0
  %2909 = vmatpush1.msra.mxu0 0.0
  %2910 = vmatprep.subr.mxu0 0.0
  %2911 = vmatpush1.msra.mxu0 0.0
  %2912 = vmatprep.subr.mxu0 0.0
  %2913 = vmatpush1.msra.mxu0 0.0
  %2914 = vmatprep.subr.mxu0 0.0
  %2915 = vmatpush1.msra.mxu0 0.0
  %2916 = vmatprep.subr.mxu0 0.0
  %2917 = vmatpush1.msra.mxu0 0.0
  %2918 = vmatprep.subr.mxu0 0.0
  %2919 = vmatpush1.msra.mxu0 0.0
  %2920 = vmatprep.subr.mxu0 0.0
  %2921 = vmatpush1.msra.mxu0 0.0
  %2922 = vmatprep.subr.mxu0 0.0
  %2923 = vmatpush1.msra.mxu0 0.0
  %2924 = vmatprep.subr.mxu0 0.0
  %2925 = vmatpush1.msra.mxu0 0.0
  %2926 = vmatprep.subr.mxu0 0.0
  %2927 = vmatpush1.msra.mxu0 0.0
  %2928 = vmatprep.subr.mxu0 0.0
  %2929 = vmatpush1.msra.mxu0 0.0
  %2930 = vmatprep.subr.mxu0 0.0
  %2931 = vmatpush1.msra.mxu0 0.0
  %2932 = vmatprep.subr.mxu0 0.0
  %2933 = vmatpush1.msra.mxu0 0.0
  %2934 = vmatprep.subr.mxu0 0.0
  %2935 = vmatpush1.msra.mxu0 0.0
  %2936 = vmatprep.subr.mxu0 0.0
  %2937 = vmatpush1.msra.mxu0 0.0
  %2938 = vmatprep.subr.mxu0 0.0
  %2939 = vmatpush1.msra.mxu0 0.0
  %2940 = vmatprep.subr.mxu0 0.0
  %2941 = vmatpush1.msra.mxu0 0.0
  %2942 = vmatprep.subr.mxu0 0.0
  %2943 = vmatpush1.msra.mxu0 0.0
  %2944 = vmatprep.subr.mxu0 0.0
  %2945 = vmatpush1.msra.mxu0 0.0
  %2946 = vmatprep.subr.mxu0 0.0
  %2947 = vmatpush1.msra.mxu0 0.0
  %2948 = vmatprep.subr.mxu0 0.0
  %2949 = vmatpush1.msra.mxu0 0.0
  %2950 = vmatprep.subr.mxu0 0.0
  %2951 = vmatpush1.msra.mxu0 0.0
  %2952 = vmatprep.subr.mxu0 0.0
  %2953 = vmatpush1.msra.mxu0 0.0
  %2954 = vmatprep.mubr.f32.mxu0 0.0
  %2955 = vmatmul.mubr.f32.gmra.mrb[0].mxu0 %v2888
  %v2956 = vpop.f32.mrb[0].mxu0
  %v2957 = vadd.f32 0.0, %v2956
  %v2958 = vpop.f32.mrb[0].mxu0
  %2959 = vdwg.mxu0
  %2960 = vrot.lane.b32.xlu0 %v2149, 64
  %v2961 = vpop.permute.xlu0 %2960
  %v2964 = vsel %vm243, %v2871, 0
  %2966 = vmatprep.subr.mxu0 0.0
  %2967 = vmatpush1.msra.mxu0 %v2961
  %2968 = vmatprep.subr.mxu0 0.0
  %2969 = vmatpush1.msra.mxu0 0.0
  %2970 = vmatprep.subr.mxu0 0.0
  %2971 = vmatpush1.msra.mxu0 0.0
  %2972 = vmatprep.subr.mxu0 0.0
  %2973 = vmatpush1.msra.mxu0 0.0
  %2974 = vmatprep.subr.mxu0 0.0
  %2975 = vmatpush1.msra.mxu0 0.0
  %2976 = vmatprep.subr.mxu0 0.0
  %2977 = vmatpush1.msra.mxu0 0.0
  %2978 = vmatprep.subr.mxu0 0.0
  %2979 = vmatpush1.msra.mxu0 0.0
  %2980 = vmatprep.subr.mxu0 0.0
  %2981 = vmatpush1.msra.mxu0 0.0
  %2982 = vmatprep.subr.mxu0 0.0
  %2983 = vmatpush1.msra.mxu0 0.0
  %2984 = vmatprep.subr.mxu0 0.0
  %2985 = vmatpush1.msra.mxu0 0.0
  %2986 = vmatprep.subr.mxu0 0.0
  %2987 = vmatpush1.msra.mxu0 0.0
  %2988 = vmatprep.subr.mxu0 0.0
  %2989 = vmatpush1.msra.mxu0 0.0
  %2990 = vmatprep.subr.mxu0 0.0
  %2991 = vmatpush1.msra.mxu0 0.0
  %2992 = vmatprep.subr.mxu0 0.0
  %2993 = vmatpush1.msra.mxu0 0.0
  %2994 = vmatprep.subr.mxu0 0.0
  %2995 = vmatpush1.msra.mxu0 0.0
  %2996 = vmatprep.subr.mxu0 0.0
  %2997 = vmatpush1.msra.mxu0 0.0
  %2998 = vmatprep.subr.mxu0 0.0
  %2999 = vmatpush1.msra.mxu0 0.0
  %3000 = vmatprep.subr.mxu0 0.0
  %3001 = vmatpush1.msra.mxu0 0.0
  %3002 = vmatprep.subr.mxu0 0.0
  %3003 = vmatpush1.msra.mxu0 0.0
  %3004 = vmatprep.subr.mxu0 0.0
  %3005 = vmatpush1.msra.mxu0 0.0
  %3006 = vmatprep.subr.mxu0 0.0
  %3007 = vmatpush1.msra.mxu0 0.0
  %3008 = vmatprep.subr.mxu0 0.0
  %3009 = vmatpush1.msra.mxu0 0.0
  %3010 = vmatprep.subr.mxu0 0.0
  %3011 = vmatpush1.msra.mxu0 0.0
  %3012 = vmatprep.subr.mxu0 0.0
  %3013 = vmatpush1.msra.mxu0 0.0
  %3014 = vmatprep.subr.mxu0 0.0
  %3015 = vmatpush1.msra.mxu0 0.0
  %3016 = vmatprep.subr.mxu0 0.0
  %3017 = vmatpush1.msra.mxu0 0.0
  %3018 = vmatprep.subr.mxu0 0.0
  %3019 = vmatpush1.msra.mxu0 0.0
  %3020 = vmatprep.subr.mxu0 0.0
  %3021 = vmatpush1.msra.mxu0 0.0
  %3022 = vmatprep.subr.mxu0 0.0
  %3023 = vmatpush1.msra.mxu0 0.0
  %3024 = vmatprep.subr.mxu0 0.0
  %3025 = vmatpush1.msra.mxu0 0.0
  %3026 = vmatprep.subr.mxu0 0.0
  %3027 = vmatpush1.msra.mxu0 0.0
  %3028 = vmatprep.subr.mxu0 0.0
  %3029 = vmatpush1.msra.mxu0 0.0
  %3030 = vmatprep.mubr.f32.mxu0 0.0
  %3031 = vmatmul.mubr.f32.gmra.mrb[0].mxu0 %v2964
  %v3032 = vpop.f32.mrb[0].mxu0
  %v3033 = vadd.f32 0.0, %v3032
  %v3034 = vpop.f32.mrb[0].mxu0
  %3035 = vdwg.mxu0
  %3036 = vrot.lane.b32.xlu0 %v2169, 64
  %v3037 = vpop.permute.xlu0 %3036
  %v3040 = vsel %vm243, %v2873, 0
  %3042 = vmatprep.subr.mxu0 0.0
  %3043 = vmatpush1.msra.mxu0 %v3037
  %3044 = vmatprep.subr.mxu0 0.0
  %3045 = vmatpush1.msra.mxu0 0.0
  %3046 = vmatprep.subr.mxu0 0.0
  %3047 = vmatpush1.msra.mxu0 0.0
  %3048 = vmatprep.subr.mxu0 0.0
  %3049 = vmatpush1.msra.mxu0 0.0
  %3050 = vmatprep.subr.mxu0 0.0
  %3051 = vmatpush1.msra.mxu0 0.0
  %3052 = vmatprep.subr.mxu0 0.0
  %3053 = vmatpush1.msra.mxu0 0.0
  %3054 = vmatprep.subr.mxu0 0.0
  %3055 = vmatpush1.msra.mxu0 0.0
  %3056 = vmatprep.subr.mxu0 0.0
  %3057 = vmatpush1.msra.mxu0 0.0
  %3058 = vmatprep.subr.mxu0 0.0
  %3059 = vmatpush1.msra.mxu0 0.0
  %3060 = vmatprep.subr.mxu0 0.0
  %3061 = vmatpush1.msra.mxu0 0.0
  %3062 = vmatprep.subr.mxu0 0.0
  %3063 = vmatpush1.msra.mxu0 0.0
  %3064 = vmatprep.subr.mxu0 0.0
  %3065 = vmatpush1.msra.mxu0 0.0
  %3066 = vmatprep.subr.mxu0 0.0
  %3067 = vmatpush1.msra.mxu0 0.0
  %3068 = vmatprep.subr.mxu0 0.0
  %3069 = vmatpush1.msra.mxu0 0.0
  %3070 = vmatprep.subr.mxu0 0.0
  %3071 = vmatpush1.msra.mxu0 0.0
  %3072 = vmatprep.subr.mxu0 0.0
  %3073 = vmatpush1.msra.mxu0 0.0
  %3074 = vmatprep.subr.mxu0 0.0
  %3075 = vmatpush1.msra.mxu0 0.0
  %3076 = vmatprep.subr.mxu0 0.0
  %3077 = vmatpush1.msra.mxu0 0.0
  %3078 = vmatprep.subr.mxu0 0.0
  %3079 = vmatpush1.msra.mxu0 0.0
  %3080 = vmatprep.subr.mxu0 0.0
  %3081 = vmatpush1.msra.mxu0 0.0
  %3082 = vmatprep.subr.mxu0 0.0
  %3083 = vmatpush1.msra.mxu0 0.0
  %3084 = vmatprep.subr.mxu0 0.0
  %3085 = vmatpush1.msra.mxu0 0.0
  %3086 = vmatprep.subr.mxu0 0.0
  %3087 = vmatpush1.msra.mxu0 0.0
  %3088 = vmatprep.subr.mxu0 0.0
  %3089 = vmatpush1.msra.mxu0 0.0
  %3090 = vmatprep.subr.mxu0 0.0
  %3091 = vmatpush1.msra.mxu0 0.0
  %3092 = vmatprep.subr.mxu0 0.0
  %3093 = vmatpush1.msra.mxu0 0.0
  %3094 = vmatprep.subr.mxu0 0.0
  %3095 = vmatpush1.msra.mxu0 0.0
  %3096 = vmatprep.subr.mxu0 0.0
  %3097 = vmatpush1.msra.mxu0 0.0
  %3098 = vmatprep.subr.mxu0 0.0
  %3099 = vmatpush1.msra.mxu0 0.0
  %3100 = vmatprep.subr.mxu0 0.0
  %3101 = vmatpush1.msra.mxu0 0.0
  %3102 = vmatprep.subr.mxu0 0.0
  %3103 = vmatpush1.msra.mxu0 0.0
  %3104 = vmatprep.subr.mxu0 0.0
  %3105 = vmatpush1.msra.mxu0 0.0
  %3106 = vmatprep.mubr.f32.mxu0 0.0
  %3107 = vmatmul.mubr.f32.gmra.mrb[0].mxu0 %v3040
  %v3108 = vpop.f32.mrb[0].mxu0
  %v3109 = vadd.f32 0.0, %v3108
  %v3110 = vpop.f32.mrb[0].mxu0
  %3111 = vdwg.mxu0
  %3112 = vrot.lane.b32.xlu0 %v2171, 64
  %v3113 = vpop.permute.xlu0 %3112
  %v3116 = vsel %vm243, %v2875, 0
  %3118 = vmatprep.subr.mxu0 0.0
  %3119 = vmatpush1.msra.mxu0 %v3113
  %3120 = vmatprep.subr.mxu0 0.0
  %3121 = vmatpush1.msra.mxu0 0.0
  %3122 = vmatprep.subr.mxu0 0.0
  %3123 = vmatpush1.msra.mxu0 0.0
  %3124 = vmatprep.subr.mxu0 0.0
  %3125 = vmatpush1.msra.mxu0 0.0
  %3126 = vmatprep.subr.mxu0 0.0
  %3127 = vmatpush1.msra.mxu0 0.0
  %3128 = vmatprep.subr.mxu0 0.0
  %3129 = vmatpush1.msra.mxu0 0.0
  %3130 = vmatprep.subr.mxu0 0.0
  %3131 = vmatpush1.msra.mxu0 0.0
  %3132 = vmatprep.subr.mxu0 0.0
  %3133 = vmatpush1.msra.mxu0 0.0
  %3134 = vmatprep.subr.mxu0 0.0
  %3135 = vmatpush1.msra.mxu0 0.0
  %3136 = vmatprep.subr.mxu0 0.0
  %3137 = vmatpush1.msra.mxu0 0.0
  %3138 = vmatprep.subr.mxu0 0.0
  %3139 = vmatpush1.msra.mxu0 0.0
  %3140 = vmatprep.subr.mxu0 0.0
  %3141 = vmatpush1.msra.mxu0 0.0
  %3142 = vmatprep.subr.mxu0 0.0
  %3143 = vmatpush1.msra.mxu0 0.0
  %3144 = vmatprep.subr.mxu0 0.0
  %3145 = vmatpush1.msra.mxu0 0.0
  %3146 = vmatprep.subr.mxu0 0.0
  %3147 = vmatpush1.msra.mxu0 0.0
  %3148 = vmatprep.subr.mxu0 0.0
  %3149 = vmatpush1.msra.mxu0 0.0
  %3150 = vmatprep.subr.mxu0 0.0
  %3151 = vmatpush1.msra.mxu0 0.0
  %3152 = vmatprep.subr.mxu0 0.0
  %3153 = vmatpush1.msra.mxu0 0.0
  %3154 = vmatprep.subr.mxu0 0.0
  %3155 = vmatpush1.msra.mxu0 0.0
  %3156 = vmatprep.subr.mxu0 0.0
  %3157 = vmatpush1.msra.mxu0 0.0
  %3158 = vmatprep.subr.mxu0 0.0
  %3159 = vmatpush1.msra.mxu0 0.0
  %3160 = vmatprep.subr.mxu0 0.0
  %3161 = vmatpush1.msra.mxu0 0.0
  %3162 = vmatprep.subr.mxu0 0.0
  %3163 = vmatpush1.msra.mxu0 0.0
  %3164 = vmatprep.subr.mxu0 0.0
  %3165 = vmatpush1.msra.mxu0 0.0
  %3166 = vmatprep.subr.mxu0 0.0
  %3167 = vmatpush1.msra.mxu0 0.0
  %3168 = vmatprep.subr.mxu0 0.0
  %3169 = vmatpush1.msra.mxu0 0.0
  %3170 = vmatprep.subr.mxu0 0.0
  %3171 = vmatpush1.msra.mxu0 0.0
  %3172 = vmatprep.subr.mxu0 0.0
  %3173 = vmatpush1.msra.mxu0 0.0
  %3174 = vmatprep.subr.mxu0 0.0
  %3175 = vmatpush1.msra.mxu0 0.0
  %3176 = vmatprep.subr.mxu0 0.0
  %3177 = vmatpush1.msra.mxu0 0.0
  %3178 = vmatprep.subr.mxu0 0.0
  %3179 = vmatpush1.msra.mxu0 0.0
  %3180 = vmatprep.subr.mxu0 0.0
  %3181 = vmatpush1.msra.mxu0 0.0
  %3182 = vmatprep.mubr.f32.mxu0 0.0
  %3183 = vmatmul.mubr.f32.gmra.mrb[0].mxu0 %v3116
  %v3184 = vpop.f32.mrb[0].mxu0
  %v3185 = vadd.f32 0.0, %v3184
  %v3186 = vpop.f32.mrb[0].mxu0
  %3187 = vdwg.mxu0
  %3188 = vrot.lane.b32.xlu0 %v2173, 64
  %v3189 = vpop.permute.xlu0 %3188
  %v3192 = vsel %vm243, %v2877, 0
  %3194 = vmatprep.subr.mxu0 0.0
  %3195 = vmatpush1.msra.mxu0 %v3189
  %3196 = vmatprep.subr.mxu0 0.0
  %3197 = vmatpush1.msra.mxu0 0.0
  %3198 = vmatprep.subr.mxu0 0.0
  %3199 = vmatpush1.msra.mxu0 0.0
  %3200 = vmatprep.subr.mxu0 0.0
  %3201 = vmatpush1.msra.mxu0 0.0
  %3202 = vmatprep.subr.mxu0 0.0
  %3203 = vmatpush1.msra.mxu0 0.0
  %3204 = vmatprep.subr.mxu0 0.0
  %3205 = vmatpush1.msra.mxu0 0.0
  %3206 = vmatprep.subr.mxu0 0.0
  %3207 = vmatpush1.msra.mxu0 0.0
  %3208 = vmatprep.subr.mxu0 0.0
  %3209 = vmatpush1.msra.mxu0 0.0
  %3210 = vmatprep.subr.mxu0 0.0
  %3211 = vmatpush1.msra.mxu0 0.0
  %3212 = vmatprep.subr.mxu0 0.0
  %3213 = vmatpush1.msra.mxu0 0.0
  %3214 = vmatprep.subr.mxu0 0.0
  %3215 = vmatpush1.msra.mxu0 0.0
  %3216 = vmatprep.subr.mxu0 0.0
  %3217 = vmatpush1.msra.mxu0 0.0
  %3218 = vmatprep.subr.mxu0 0.0
  %3219 = vmatpush1.msra.mxu0 0.0
  %3220 = vmatprep.subr.mxu0 0.0
  %3221 = vmatpush1.msra.mxu0 0.0
  %3222 = vmatprep.subr.mxu0 0.0
  %3223 = vmatpush1.msra.mxu0 0.0
  %3224 = vmatprep.subr.mxu0 0.0
  %3225 = vmatpush1.msra.mxu0 0.0
  %3226 = vmatprep.subr.mxu0 0.0
  %3227 = vmatpush1.msra.mxu0 0.0
  %3228 = vmatprep.subr.mxu0 0.0
  %3229 = vmatpush1.msra.mxu0 0.0
  %3230 = vmatprep.subr.mxu0 0.0
  %3231 = vmatpush1.msra.mxu0 0.0
  %3232 = vmatprep.subr.mxu0 0.0
  %3233 = vmatpush1.msra.mxu0 0.0
  %3234 = vmatprep.subr.mxu0 0.0
  %3235 = vmatpush1.msra.mxu0 0.0
  %3236 = vmatprep.subr.mxu0 0.0
  %3237 = vmatpush1.msra.mxu0 0.0
  %3238 = vmatprep.subr.mxu0 0.0
  %3239 = vmatpush1.msra.mxu0 0.0
  %3240 = vmatprep.subr.mxu0 0.0
  %3241 = vmatpush1.msra.mxu0 0.0
  %3242 = vmatprep.subr.mxu0 0.0
  %3243 = vmatpush1.msra.mxu0 0.0
  %3244 = vmatprep.subr.mxu0 0.0
  %3245 = vmatpush1.msra.mxu0 0.0
  %3246 = vmatprep.subr.mxu0 0.0
  %3247 = vmatpush1.msra.mxu0 0.0
  %3248 = vmatprep.subr.mxu0 0.0
  %3249 = vmatpush1.msra.mxu0 0.0
  %3250 = vmatprep.subr.mxu0 0.0
  %3251 = vmatpush1.msra.mxu0 0.0
  %3252 = vmatprep.subr.mxu0 0.0
  %3253 = vmatpush1.msra.mxu0 0.0
  %3254 = vmatprep.subr.mxu0 0.0
  %3255 = vmatpush1.msra.mxu0 0.0
  %3256 = vmatprep.subr.mxu0 0.0
  %3257 = vmatpush1.msra.mxu0 0.0
  %3258 = vmatprep.mubr.f32.mxu0 0.0
  %3259 = vmatmul.mubr.f32.gmra.mrb[0].mxu0 %v3192
  %v3260 = vpop.f32.mrb[0].mxu0
  %v3261 = vadd.f32 0.0, %v3260
  %v3262 = vpop.f32.mrb[0].mxu0
  %3263 = vdwg.mxu0
  %3264 = vrot.lane.b32.xlu0 %v2175, 64
  %v3265 = vpop.permute.xlu0 %3264
  %v3268 = vsel %vm243, %v2879, 0
  %3270 = vmatprep.subr.mxu0 0.0
  %3271 = vmatpush1.msra.mxu0 %v3265
  %3272 = vmatprep.subr.mxu0 0.0
  %3273 = vmatpush1.msra.mxu0 0.0
  %3274 = vmatprep.subr.mxu0 0.0
  %3275 = vmatpush1.msra.mxu0 0.0
  %3276 = vmatprep.subr.mxu0 0.0
  %3277 = vmatpush1.msra.mxu0 0.0
  %3278 = vmatprep.subr.mxu0 0.0
  %3279 = vmatpush1.msra.mxu0 0.0
  %3280 = vmatprep.subr.mxu0 0.0
  %3281 = vmatpush1.msra.mxu0 0.0
  %3282 = vmatprep.subr.mxu0 0.0
  %3283 = vmatpush1.msra.mxu0 0.0
  %3284 = vmatprep.subr.mxu0 0.0
  %3285 = vmatpush1.msra.mxu0 0.0
  %3286 = vmatprep.subr.mxu0 0.0
  %3287 = vmatpush1.msra.mxu0 0.0
  %3288 = vmatprep.subr.mxu0 0.0
  %3289 = vmatpush1.msra.mxu0 0.0
  %3290 = vmatprep.subr.mxu0 0.0
  %3291 = vmatpush1.msra.mxu0 0.0
  %3292 = vmatprep.subr.mxu0 0.0
  %3293 = vmatpush1.msra.mxu0 0.0
  %3294 = vmatprep.subr.mxu0 0.0
  %3295 = vmatpush1.msra.mxu0 0.0
  %3296 = vmatprep.subr.mxu0 0.0
  %3297 = vmatpush1.msra.mxu0 0.0
  %3298 = vmatprep.subr.mxu0 0.0
  %3299 = vmatpush1.msra.mxu0 0.0
  %3300 = vmatprep.subr.mxu0 0.0
  %3301 = vmatpush1.msra.mxu0 0.0
  %3302 = vmatprep.subr.mxu0 0.0
  %3303 = vmatpush1.msra.mxu0 0.0
  %3304 = vmatprep.subr.mxu0 0.0
  %3305 = vmatpush1.msra.mxu0 0.0
  %3306 = vmatprep.subr.mxu0 0.0
  %3307 = vmatpush1.msra.mxu0 0.0
  %3308 = vmatprep.subr.mxu0 0.0
  %3309 = vmatpush1.msra.mxu0 0.0
  %3310 = vmatprep.subr.mxu0 0.0
  %3311 = vmatpush1.msra.mxu0 0.0
  %3312 = vmatprep.subr.mxu0 0.0
  %3313 = vmatpush1.msra.mxu0 0.0
  %3314 = vmatprep.subr.mxu0 0.0
  %3315 = vmatpush1.msra.mxu0 0.0
  %3316 = vmatprep.subr.mxu0 0.0
  %3317 = vmatpush1.msra.mxu0 0.0
  %3318 = vmatprep.subr.mxu0 0.0
  %3319 = vmatpush1.msra.mxu0 0.0
  %3320 = vmatprep.subr.mxu0 0.0
  %3321 = vmatpush1.msra.mxu0 0.0
  %3322 = vmatprep.subr.mxu0 0.0
  %3323 = vmatpush1.msra.mxu0 0.0
  %3324 = vmatprep.subr.mxu0 0.0
  %3325 = vmatpush1.msra.mxu0 0.0
  %3326 = vmatprep.subr.mxu0 0.0
  %3327 = vmatpush1.msra.mxu0 0.0
  %3328 = vmatprep.subr.mxu0 0.0
  %3329 = vmatpush1.msra.mxu0 0.0
  %3330 = vmatprep.subr.mxu0 0.0
  %3331 = vmatpush1.msra.mxu0 0.0
  %3332 = vmatprep.subr.mxu0 0.0
  %3333 = vmatpush1.msra.mxu0 0.0
  %3334 = vmatprep.mubr.f32.mxu0 0.0
  %3335 = vmatmul.mubr.f32.gmra.mrb[0].mxu0 %v3268
  %v3336 = vpop.f32.mrb[0].mxu0
  %v3337 = vadd.f32 0.0, %v3336
  %v3338 = vpop.f32.mrb[0].mxu0
  %3339 = vdwg.mxu0
  %3340 = vrot.lane.b32.xlu0 %v2177, 64
  %v3341 = vpop.permute.xlu0 %3340
  %v3344 = vsel %vm243, %v2881, 0
  %3346 = vmatprep.subr.mxu0 0.0
  %3347 = vmatpush1.msra.mxu0 %v3341
  %3348 = vmatprep.subr.mxu0 0.0
  %3349 = vmatpush1.msra.mxu0 0.0
  %3350 = vmatprep.subr.mxu0 0.0
  %3351 = vmatpush1.msra.mxu0 0.0
  %3352 = vmatprep.subr.mxu0 0.0
  %3353 = vmatpush1.msra.mxu0 0.0
  %3354 = vmatprep.subr.mxu0 0.0
  %3355 = vmatpush1.msra.mxu0 0.0
  %3356 = vmatprep.subr.mxu0 0.0
  %3357 = vmatpush1.msra.mxu0 0.0
  %3358 = vmatprep.subr.mxu0 0.0
  %3359 = vmatpush1.msra.mxu0 0.0
  %3360 = vmatprep.subr.mxu0 0.0
  %3361 = vmatpush1.msra.mxu0 0.0
  %3362 = vmatprep.subr.mxu0 0.0
  %3363 = vmatpush1.msra.mxu0 0.0
  %3364 = vmatprep.subr.mxu0 0.0
  %3365 = vmatpush1.msra.mxu0 0.0
  %3366 = vmatprep.subr.mxu0 0.0
  %3367 = vmatpush1.msra.mxu0 0.0
  %3368 = vmatprep.subr.mxu0 0.0
  %3369 = vmatpush1.msra.mxu0 0.0
  %3370 = vmatprep.subr.mxu0 0.0
  %3371 = vmatpush1.msra.mxu0 0.0
  %3372 = vmatprep.subr.mxu0 0.0
  %3373 = vmatpush1.msra.mxu0 0.0
  %3374 = vmatprep.subr.mxu0 0.0
  %3375 = vmatpush1.msra.mxu0 0.0
  %3376 = vmatprep.subr.mxu0 0.0
  %3377 = vmatpush1.msra.mxu0 0.0
  %3378 = vmatprep.subr.mxu0 0.0
  %3379 = vmatpush1.msra.mxu0 0.0
  %3380 = vmatprep.subr.mxu0 0.0
  %3381 = vmatpush1.msra.mxu0 0.0
  %3382 = vmatprep.subr.mxu0 0.0
  %3383 = vmatpush1.msra.mxu0 0.0
  %3384 = vmatprep.subr.mxu0 0.0
  %3385 = vmatpush1.msra.mxu0 0.0
  %3386 = vmatprep.subr.mxu0 0.0
  %3387 = vmatpush1.msra.mxu0 0.0
  %3388 = vmatprep.subr.mxu0 0.0
  %3389 = vmatpush1.msra.mxu0 0.0
  %3390 = vmatprep.subr.mxu0 0.0
  %3391 = vmatpush1.msra.mxu0 0.0
  %3392 = vmatprep.subr.mxu0 0.0
  %3393 = vmatpush1.msra.mxu0 0.0
  %3394 = vmatprep.subr.mxu0 0.0
  %3395 = vmatpush1.msra.mxu0 0.0
  %3396 = vmatprep.subr.mxu0 0.0
  %3397 = vmatpush1.msra.mxu0 0.0
  %3398 = vmatprep.subr.mxu0 0.0
  %3399 = vmatpush1.msra.mxu0 0.0
  %3400 = vmatprep.subr.mxu0 0.0
  %3401 = vmatpush1.msra.mxu0 0.0
  %3402 = vmatprep.subr.mxu0 0.0
  %3403 = vmatpush1.msra.mxu0 0.0
  %3404 = vmatprep.subr.mxu0 0.0
  %3405 = vmatpush1.msra.mxu0 0.0
  %3406 = vmatprep.subr.mxu0 0.0
  %3407 = vmatpush1.msra.mxu0 0.0
  %3408 = vmatprep.subr.mxu0 0.0
  %3409 = vmatpush1.msra.mxu0 0.0
  %3410 = vmatprep.mubr.f32.mxu0 0.0
  %3411 = vmatmul.mubr.f32.gmra.mrb[0].mxu0 %v3344
  %v3412 = vpop.f32.mrb[0].mxu0
  %v3413 = vadd.f32 0.0, %v3412
  %v3414 = vpop.f32.mrb[0].mxu0
  %3415 = vdwg.mxu0
  %3416 = vrot.lane.b32.xlu0 %v2179, 64
  %v3417 = vpop.permute.xlu0 %3416
  %v3420 = vsel %vm243, %v2883, 0
  %3422 = vmatprep.subr.mxu0 0.0
  %3423 = vmatpush1.msra.mxu0 %v3417
  %3424 = vmatprep.subr.mxu0 0.0
  %3425 = vmatpush1.msra.mxu0 0.0
  %3426 = vmatprep.subr.mxu0 0.0
  %3427 = vmatpush1.msra.mxu0 0.0
  %3428 = vmatprep.subr.mxu0 0.0
  %3429 = vmatpush1.msra.mxu0 0.0
  %3430 = vmatprep.subr.mxu0 0.0
  %3431 = vmatpush1.msra.mxu0 0.0
  %3432 = vmatprep.subr.mxu0 0.0
  %3433 = vmatpush1.msra.mxu0 0.0
  %3434 = vmatprep.subr.mxu0 0.0
  %3435 = vmatpush1.msra.mxu0 0.0
  %3436 = vmatprep.subr.mxu0 0.0
  %3437 = vmatpush1.msra.mxu0 0.0
  %3438 = vmatprep.subr.mxu0 0.0
  %3439 = vmatpush1.msra.mxu0 0.0
  %3440 = vmatprep.subr.mxu0 0.0
  %3441 = vmatpush1.msra.mxu0 0.0
  %3442 = vmatprep.subr.mxu0 0.0
  %3443 = vmatpush1.msra.mxu0 0.0
  %3444 = vmatprep.subr.mxu0 0.0
  %3445 = vmatpush1.msra.mxu0 0.0
  %3446 = vmatprep.subr.mxu0 0.0
  %3447 = vmatpush1.msra.mxu0 0.0
  %3448 = vmatprep.subr.mxu0 0.0
  %3449 = vmatpush1.msra.mxu0 0.0
  %3450 = vmatprep.subr.mxu0 0.0
  %3451 = vmatpush1.msra.mxu0 0.0
  %3452 = vmatprep.subr.mxu0 0.0
  %3453 = vmatpush1.msra.mxu0 0.0
  %3454 = vmatprep.subr.mxu0 0.0
  %3455 = vmatpush1.msra.mxu0 0.0
  %3456 = vmatprep.subr.mxu0 0.0
  %3457 = vmatpush1.msra.mxu0 0.0
  %3458 = vmatprep.subr.mxu0 0.0
  %3459 = vmatpush1.msra.mxu0 0.0
  %3460 = vmatprep.subr.mxu0 0.0
  %3461 = vmatpush1.msra.mxu0 0.0
  %3462 = vmatprep.subr.mxu0 0.0
  %3463 = vmatpush1.msra.mxu0 0.0
  %3464 = vmatprep.subr.mxu0 0.0
  %3465 = vmatpush1.msra.mxu0 0.0
  %3466 = vmatprep.subr.mxu0 0.0
  %3467 = vmatpush1.msra.mxu0 0.0
  %3468 = vmatprep.subr.mxu0 0.0
  %3469 = vmatpush1.msra.mxu0 0.0
  %3470 = vmatprep.subr.mxu0 0.0
  %3471 = vmatpush1.msra.mxu0 0.0
  %3472 = vmatprep.subr.mxu0 0.0
  %3473 = vmatpush1.msra.mxu0 0.0
  %3474 = vmatprep.subr.mxu0 0.0
  %3475 = vmatpush1.msra.mxu0 0.0
  %3476 = vmatprep.subr.mxu0 0.0
  %3477 = vmatpush1.msra.mxu0 0.0
  %3478 = vmatprep.subr.mxu0 0.0
  %3479 = vmatpush1.msra.mxu0 0.0
  %3480 = vmatprep.subr.mxu0 0.0
  %3481 = vmatpush1.msra.mxu0 0.0
  %3482 = vmatprep.subr.mxu0 0.0
  %3483 = vmatpush1.msra.mxu0 0.0
  %3484 = vmatprep.subr.mxu0 0.0
  %3485 = vmatpush1.msra.mxu0 0.0
  %3486 = vmatprep.mubr.f32.mxu0 0.0
  %3487 = vmatmul.mubr.f32.gmra.mrb[0].mxu0 %v3420
  %v3488 = vpop.f32.mrb[0].mxu0
  %v3489 = vadd.f32 0.0, %v3488
  %v3490 = vpop.f32.mrb[0].mxu0
  %3491 = vdwg.mxu0
  %3494 = vrot.lane.b32.xlu0 %v3109, 8
  %v3495 = vpop.permute.xlu0 %3494
  %3496 = vrot.lane.b32.xlu0 %v3185, 8
  %v3497 = vpop.permute.xlu0 %3496
  %3502 = vrot.lane.b32.xlu0 %v3261, 16
  %v3503 = vpop.permute.xlu0 %3502
  %3504 = vrot.lane.b32.xlu0 %v3337, 16
  %v3505 = vpop.permute.xlu0 %3504
  %3510 = vrot.lane.b32.xlu0 %v3413, 24
  %v3511 = vpop.permute.xlu0 %3510
  %3512 = vrot.lane.b32.xlu0 %v3489, 24
  %v3513 = vpop.permute.xlu0 %3512
  %v3516 = vsel %vm243, %v2957, %v3495
  %v3517 = vsel %vm243, %v3033, %v3497
  %v3518 = vsel %vm952, %v3516, %v3503
  %v3519 = vsel %vm952, %v3517, %v3505
  %v3520 = vsel %vm1881, %v3518, %v3511
  %v3521 = vsel %vm1881, %v3519, %v3513
  %v3522 = vlaneseq
  %v3523 = vshrl.u32 %v3522, 7
  %v3524 = vsub.s32 0, %v3523
  %v3525 = vrot.slane %v19, %v3524
  %v3527 = vsel %vm40, %v3520, 0
  %v3530 = vsel %vm40, %v3521, 0
  %3532 = vmatprep.subr.mxu0 0.0
  %3533 = vmatpush1.msra.mxu0 %v32
  %3534 = vmatprep.subr.mxu0 0.0
  %3535 = vmatpush1.msra.mxu0 %v33
  %3536 = vmatprep.subr.mxu0 0.0
  %3537 = vmatpush1.msra.mxu0 %v34
  %3538 = vmatprep.subr.mxu0 0.0
  %3539 = vmatpush1.msra.mxu0 %v35
  %3540 = vmatprep.subr.mxu0 0.0
  %3541 = vmatpush1.msra.mxu0 0.0
  %3542 = vmatprep.subr.mxu0 0.0
  %3543 = vmatpush1.msra.mxu0 0.0
  %3544 = vmatprep.subr.mxu0 0.0
  %3545 = vmatpush1.msra.mxu0 0.0
  %3546 = vmatprep.subr.mxu0 0.0
  %3547 = vmatpush1.msra.mxu0 0.0
  %3548 = vmatprep.subr.mxu0 0.0
  %3549 = vmatpush1.msra.mxu0 0.0
  %3550 = vmatprep.subr.mxu0 0.0
  %3551 = vmatpush1.msra.mxu0 0.0
  %3552 = vmatprep.subr.mxu0 0.0
  %3553 = vmatpush1.msra.mxu0 0.0
  %3554 = vmatprep.subr.mxu0 0.0
  %3555 = vmatpush1.msra.mxu0 0.0
  %3556 = vmatprep.subr.mxu0 0.0
  %3557 = vmatpush1.msra.mxu0 0.0
  %3558 = vmatprep.subr.mxu0 0.0
  %3559 = vmatpush1.msra.mxu0 0.0
  %3560 = vmatprep.subr.mxu0 0.0
  %3561 = vmatpush1.msra.mxu0 0.0
  %3562 = vmatprep.subr.mxu0 0.0
  %3563 = vmatpush1.msra.mxu0 0.0
  %3564 = vmatprep.subr.mxu0 0.0
  %3565 = vmatpush1.msra.mxu0 0.0
  %3566 = vmatprep.subr.mxu0 0.0
  %3567 = vmatpush1.msra.mxu0 0.0
  %3568 = vmatprep.subr.mxu0 0.0
  %3569 = vmatpush1.msra.mxu0 0.0
  %3570 = vmatprep.subr.mxu0 0.0
  %3571 = vmatpush1.msra.mxu0 0.0
  %3572 = vmatprep.subr.mxu0 0.0
  %3573 = vmatpush1.msra.mxu0 0.0
  %3574 = vmatprep.subr.mxu0 0.0
  %3575 = vmatpush1.msra.mxu0 0.0
  %3576 = vmatprep.subr.mxu0 0.0
  %3577 = vmatpush1.msra.mxu0 0.0
  %3578 = vmatprep.subr.mxu0 0.0
  %3579 = vmatpush1.msra.mxu0 0.0
  %3580 = vmatprep.subr.mxu0 0.0
  %3581 = vmatpush1.msra.mxu0 0.0
  %3582 = vmatprep.subr.mxu0 0.0
  %3583 = vmatpush1.msra.mxu0 0.0
  %3584 = vmatprep.subr.mxu0 0.0
  %3585 = vmatpush1.msra.mxu0 0.0
  %3586 = vmatprep.subr.mxu0 0.0
  %3587 = vmatpush1.msra.mxu0 0.0
  %3588 = vmatprep.subr.mxu0 0.0
  %3589 = vmatpush1.msra.mxu0 0.0
  %3590 = vmatprep.subr.mxu0 0.0
  %3591 = vmatpush1.msra.mxu0 0.0
  %3592 = vmatprep.subr.mxu0 0.0
  %3593 = vmatpush1.msra.mxu0 0.0
  %3594 = vmatprep.subr.mxu0 0.0
  %3595 = vmatpush1.msra.mxu0 0.0
  %3596 = vmatprep.mubr.f32.mxu0 0.0
  %3597 = vmatmul.mubr.f32.gmra.mrb[0].mxu0 %v3527
  %v3598 = vpop.f32.mrb[0].mxu0
  %v3599 = vadd.f32 %v3525, %v3598
  %v3600 = vpop.f32.mrb[0].mxu0
  %3601 = vmatprep.mubr.f32.mxu0 0.0
  %3602 = vmatmul.mubr.f32.gmra.mrb[0].mxu0 %v3530
  %v3603 = vpop.f32.mrb[0].mxu0
  %v3604 = vadd.f32 %v3525, %v3603
  %v3605 = vpop.f32.mrb[0].mxu0
  %3606 = vdwg.mxu0
  %v3607 = vadd.f32 %v1988, %v3599
  %v3608 = vadd.f32 %v1990, %v3604
  %v3609 = vsel %vm40, %v3607, 0.0
  %3610 = vadd.xlane.f32.xlu0 %v3609
  %v3611 = vpop.xlane.xlu0 %3610
  %v3612 = vsel %vm40, %v3608, 0.0
  %3613 = vadd.xlane.f32.xlu0 %v3612
  %v3614 = vpop.xlane.xlu0 %3613
  %v3615 = vmul.f32 %v3611, %v53
  %v3616 = vmul.f32 %v3614, %v53
  %v3617 = vsub.f32 %v3607, %v3615
  %v3618 = vsub.f32 %v3608, %v3616
  %v3619 = vmul.f32 %v3617, %v3617
  %v3620 = vmul.f32 %v3618, %v3618
  %v3621 = vsel %vm40, %v3619, 0.0
  %3622 = vadd.xlane.f32.xlu0 %v3621
  %v3623 = vpop.xlane.xlu0 %3622
  %v3624 = vsel %vm40, %v3620, 0.0
  %3625 = vadd.xlane.f32.xlu0 %v3624
  %v3626 = vpop.xlane.xlu0 %3625
  %v3627 = vmul.f32 %v3623, %v53
  %v3628 = vmul.f32 %v3626, %v53
  %v3629 = vadd.f32 %v3627, 1e-06
  %v3630 = vadd.f32 %v3628, 1e-06
  %v3631 = vrsqrt.pop %v3629
  %v3632 = vrsqrt.pop %v3630
  %v3633 = vmul.f32 %v3617, %v3631
  %v3634 = vmul.f32 %v3618, %v3632
  %v3635 = vmul.f32 %v3633, %v97
  %v3636 = vmul.f32 %v3634, %v97
  %v3637 = vadd.f32 %v3635, %v105
  %v3638 = vadd.f32 %v3636, %v105
  %v3640 = vsel %vm40, %v3637, 0
  %v3643 = vsel %vm40, %v3638, 0
  %3645 = vmatprep.subr.mxu0 0.0
  %3646 = vmatpush1.msra.mxu0 %v24
  %3647 = vmatprep.subr.mxu0 0.0
  %3648 = vmatpush1.msra.mxu0 %v25
  %3649 = vmatprep.subr.mxu0 0.0
  %3650 = vmatpush1.msra.mxu0 %v26
  %3651 = vmatprep.subr.mxu0 0.0
  %3652 = vmatpush1.msra.mxu0 %v27
  %3653 = vmatprep.subr.mxu0 0.0
  %3654 = vmatpush1.msra.mxu0 0.0
  %3655 = vmatprep.subr.mxu0 0.0
  %3656 = vmatpush1.msra.mxu0 0.0
  %3657 = vmatprep.subr.mxu0 0.0
  %3658 = vmatpush1.msra.mxu0 0.0
  %3659 = vmatprep.subr.mxu0 0.0
  %3660 = vmatpush1.msra.mxu0 0.0
  %3661 = vmatprep.subr.mxu0 0.0
  %3662 = vmatpush1.msra.mxu0 0.0
  %3663 = vmatprep.subr.mxu0 0.0
  %3664 = vmatpush1.msra.mxu0 0.0
  %3665 = vmatprep.subr.mxu0 0.0
  %3666 = vmatpush1.msra.mxu0 0.0
  %3667 = vmatprep.subr.mxu0 0.0
  %3668 = vmatpush1.msra.mxu0 0.0
  %3669 = vmatprep.subr.mxu0 0.0
  %3670 = vmatpush1.msra.mxu0 0.0
  %3671 = vmatprep.subr.mxu0 0.0
  %3672 = vmatpush1.msra.mxu0 0.0
  %3673 = vmatprep.subr.mxu0 0.0
  %3674 = vmatpush1.msra.mxu0 0.0
  %3675 = vmatprep.subr.mxu0 0.0
  %3676 = vmatpush1.msra.mxu0 0.0
  %3677 = vmatprep.subr.mxu0 0.0
  %3678 = vmatpush1.msra.mxu0 0.0
  %3679 = vmatprep.subr.mxu0 0.0
  %3680 = vmatpush1.msra.mxu0 0.0
  %3681 = vmatprep.subr.mxu0 0.0
  %3682 = vmatpush1.msra.mxu0 0.0
  %3683 = vmatprep.subr.mxu0 0.0
  %3684 = vmatpush1.msra.mxu0 0.0
  %3685 = vmatprep.subr.mxu0 0.0
  %3686 = vmatpush1.msra.mxu0 0.0
  %3687 = vmatprep.subr.mxu0 0.0
  %3688 = vmatpush1.msra.mxu0 0.0
  %3689 = vmatprep.subr.mxu0 0.0
  %3690 = vmatpush1.msra.mxu0 0.0
  %3691 = vmatprep.subr.mxu0 0.0
  %3692 = vmatpush1.msra.mxu0 0.0
  %3693 = vmatprep.subr.mxu0 0.0
  %3694 = vmatpush1.msra.mxu0 0.0
  %3695 = vmatprep.subr.mxu0 0.0
  %3696 = vmatpush1.msra.mxu0 0.0
  %3697 = vmatprep.subr.mxu0 0.0
  %3698 = vmatpush1.msra.mxu0 0.0
  %3699 = vmatprep.subr.mxu0 0.0
  %3700 = vmatpush1.msra.mxu0 0.0
  %3701 = vmatprep.subr.mxu0 0.0
  %3702 = vmatpush1.msra.mxu0 0.0
  %3703 = vmatprep.subr.mxu0 0.0
  %3704 = vmatpush1.msra.mxu0 0.0
  %3705 = vmatprep.subr.mxu0 0.0
  %3706 = vmatpush1.msra.mxu0 0.0
  %3707 = vmatprep.subr.mxu0 0.0
  %3708 = vmatpush1.msra.mxu0 0.0
  %3709 = vmatprep.mubr.f32.mxu0 0.0
  %3710 = vmatmul.mubr.f32.gmra.mrb[0].mxu0 %v3640
  %v3711 = vpop.f32.mrb[0].mxu0
  %v3712 = vadd.f32 %v2054, %v3711
  %v3713 = vpop.f32.mrb[0].mxu0
  %3714 = vmatprep.mubr.f32.mxu0 0.0
  %3715 = vmatmul.mubr.f32.gmra.mrb[0].mxu0 %v3643
  %v3716 = vpop.f32.mrb[0].mxu0
  %v3717 = vadd.f32 %v2054, %v3716
  %v3718 = vpop.f32.mrb[0].mxu0
  %3719 = vdwg.mxu0
  %3722 = vrot.lane.b32.xlu0 %v3712, 120
  %v3723 = vpop.permute.xlu0 %3722
  %3724 = vrot.lane.b32.xlu0 %v3717, 120
  %v3725 = vpop.permute.xlu0 %3724
  %3726 = vrot.lane.b32.xlu0 %v3712, 112
  %v3727 = vpop.permute.xlu0 %3726
  %3728 = vrot.lane.b32.xlu0 %v3717, 112
  %v3729 = vpop.permute.xlu0 %3728
  %3730 = vrot.lane.b32.xlu0 %v3712, 104
  %v3731 = vpop.permute.xlu0 %3730
  %3732 = vrot.lane.b32.xlu0 %v3717, 104
  %v3733 = vpop.permute.xlu0 %3732
  %3734 = vrot.lane.b32.xlu0 %v3712, 96
  %v3735 = vpop.permute.xlu0 %3734
  %v3736 = vsel %vm243, %v2144, 0
  %v3738 = vsel %vm243, %v3735, 0
  %3740 = vmatprep.subr.mxu0 0.0
  %3741 = vmatpush1.xpose.msra.mxu0 %v3738
  %3742 = vmatprep.subr.mxu0 0.0
  %3743 = vmatpush1.xpose.msra.mxu0 0.0
  %3744 = vmatprep.subr.mxu0 0.0
  %3745 = vmatpush1.xpose.msra.mxu0 0.0
  %3746 = vmatprep.subr.mxu0 0.0
  %3747 = vmatpush1.xpose.msra.mxu0 0.0
  %3748 = vmatprep.subr.mxu0 0.0
  %3749 = vmatpush1.xpose.msra.mxu0 0.0
  %3750 = vmatprep.subr.mxu0 0.0
  %3751 = vmatpush1.xpose.msra.mxu0 0.0
  %3752 = vmatprep.subr.mxu0 0.0
  %3753 = vmatpush1.xpose.msra.mxu0 0.0
  %3754 = vmatprep.subr.mxu0 0.0
  %3755 = vmatpush1.xpose.msra.mxu0 0.0
  %3756 = vmatprep.subr.mxu0 0.0
  %3757 = vmatpush1.xpose.msra.mxu0 0.0
  %3758 = vmatprep.subr.mxu0 0.0
  %3759 = vmatpush1.xpose.msra.mxu0 0.0
  %3760 = vmatprep.subr.mxu0 0.0
  %3761 = vmatpush1.xpose.msra.mxu0 0.0
  %3762 = vmatprep.subr.mxu0 0.0
  %3763 = vmatpush1.xpose.msra.mxu0 0.0
  %3764 = vmatprep.subr.mxu0 0.0
  %3765 = vmatpush1.xpose.msra.mxu0 0.0
  %3766 = vmatprep.subr.mxu0 0.0
  %3767 = vmatpush1.xpose.msra.mxu0 0.0
  %3768 = vmatprep.subr.mxu0 0.0
  %3769 = vmatpush1.xpose.msra.mxu0 0.0
  %3770 = vmatprep.subr.mxu0 0.0
  %3771 = vmatpush1.xpose.msra.mxu0 0.0
  %3772 = vmatprep.subr.mxu0 0.0
  %3773 = vmatpush1.xpose.msra.mxu0 0.0
  %3774 = vmatprep.subr.mxu0 0.0
  %3775 = vmatpush1.xpose.msra.mxu0 0.0
  %3776 = vmatprep.subr.mxu0 0.0
  %3777 = vmatpush1.xpose.msra.mxu0 0.0
  %3778 = vmatprep.subr.mxu0 0.0
  %3779 = vmatpush1.xpose.msra.mxu0 0.0
  %3780 = vmatprep.subr.mxu0 0.0
  %3781 = vmatpush1.xpose.msra.mxu0 0.0
  %3782 = vmatprep.subr.mxu0 0.0
  %3783 = vmatpush1.xpose.msra.mxu0 0.0
  %3784 = vmatprep.subr.mxu0 0.0
  %3785 = vmatpush1.xpose.msra.mxu0 0.0
  %3786 = vmatprep.subr.mxu0 0.0
  %3787 = vmatpush1.xpose.msra.mxu0 0.0
  %3788 = vmatprep.subr.mxu0 0.0
  %3789 = vmatpush1.xpose.msra.mxu0 0.0
  %3790 = vmatprep.subr.mxu0 0.0
  %3791 = vmatpush1.xpose.msra.mxu0 0.0
  %3792 = vmatprep.subr.mxu0 0.0
  %3793 = vmatpush1.xpose.msra.mxu0 0.0
  %3794 = vmatprep.subr.mxu0 0.0
  %3795 = vmatpush1.xpose.msra.mxu0 0.0
  %3796 = vmatprep.subr.mxu0 0.0
  %3797 = vmatpush1.xpose.msra.mxu0 0.0
  %3798 = vmatprep.subr.mxu0 0.0
  %3799 = vmatpush1.xpose.msra.mxu0 0.0
  %3800 = vmatprep.subr.mxu0 0.0
  %3801 = vmatpush1.xpose.msra.mxu0 0.0
  %3802 = vmatprep.subr.mxu0 0.0
  %3803 = vmatpush1.xpose.msra.mxu0 0.0
  %3804 = vmatprep.mubr.f32.mxu0 0.0
  %3805 = vmatmul.mubr.f32.gmra.mrb[0].mxu0 %v3736
  %v3806 = vpop.f32.mrb[0].mxu0
  %v3807 = vadd.f32 0.0, %v3806
  %v3808 = vpop.f32.mrb[0].mxu0
  %3809 = vdwg.mxu0
  %3810 = vrot.lane.b32.xlu0 %v3717, 96
  %v3811 = vpop.permute.xlu0 %3810
  %v3812 = vsel %vm243, %v2149, 0
  %v3814 = vsel %vm243, %v3811, 0
  %3816 = vmatprep.subr.mxu0 0.0
  %3817 = vmatpush1.xpose.msra.mxu0 %v3814
  %3818 = vmatprep.subr.mxu0 0.0
  %3819 = vmatpush1.xpose.msra.mxu0 0.0
  %3820 = vmatprep.subr.mxu0 0.0
  %3821 = vmatpush1.xpose.msra.mxu0 0.0
  %3822 = vmatprep.subr.mxu0 0.0
  %3823 = vmatpush1.xpose.msra.mxu0 0.0
  %3824 = vmatprep.subr.mxu0 0.0
  %3825 = vmatpush1.xpose.msra.mxu0 0.0
  %3826 = vmatprep.subr.mxu0 0.0
  %3827 = vmatpush1.xpose.msra.mxu0 0.0
  %3828 = vmatprep.subr.mxu0 0.0
  %3829 = vmatpush1.xpose.msra.mxu0 0.0
  %3830 = vmatprep.subr.mxu0 0.0
  %3831 = vmatpush1.xpose.msra.mxu0 0.0
  %3832 = vmatprep.subr.mxu0 0.0
  %3833 = vmatpush1.xpose.msra.mxu0 0.0
  %3834 = vmatprep.subr.mxu0 0.0
  %3835 = vmatpush1.xpose.msra.mxu0 0.0
  %3836 = vmatprep.subr.mxu0 0.0
  %3837 = vmatpush1.xpose.msra.mxu0 0.0
  %3838 = vmatprep.subr.mxu0 0.0
  %3839 = vmatpush1.xpose.msra.mxu0 0.0
  %3840 = vmatprep.subr.mxu0 0.0
  %3841 = vmatpush1.xpose.msra.mxu0 0.0
  %3842 = vmatprep.subr.mxu0 0.0
  %3843 = vmatpush1.xpose.msra.mxu0 0.0
  %3844 = vmatprep.subr.mxu0 0.0
  %3845 = vmatpush1.xpose.msra.mxu0 0.0
  %3846 = vmatprep.subr.mxu0 0.0
  %3847 = vmatpush1.xpose.msra.mxu0 0.0
  %3848 = vmatprep.subr.mxu0 0.0
  %3849 = vmatpush1.xpose.msra.mxu0 0.0
  %3850 = vmatprep.subr.mxu0 0.0
  %3851 = vmatpush1.xpose.msra.mxu0 0.0
  %3852 = vmatprep.subr.mxu0 0.0
  %3853 = vmatpush1.xpose.msra.mxu0 0.0
  %3854 = vmatprep.subr.mxu0 0.0
  %3855 = vmatpush1.xpose.msra.mxu0 0.0
  %3856 = vmatprep.subr.mxu0 0.0
  %3857 = vmatpush1.xpose.msra.mxu0 0.0
  %3858 = vmatprep.subr.mxu0 0.0
  %3859 = vmatpush1.xpose.msra.mxu0 0.0
  %3860 = vmatprep.subr.mxu0 0.0
  %3861 = vmatpush1.xpose.msra.mxu0 0.0
  %3862 = vmatprep.subr.mxu0 0.0
  %3863 = vmatpush1.xpose.msra.mxu0 0.0
  %3864 = vmatprep.subr.mxu0 0.0
  %3865 = vmatpush1.xpose.msra.mxu0 0.0
  %3866 = vmatprep.subr.mxu0 0.0
  %3867 = vmatpush1.xpose.msra.mxu0 0.0
  %3868 = vmatprep.subr.mxu0 0.0
  %3869 = vmatpush1.xpose.msra.mxu0 0.0
  %3870 = vmatprep.subr.mxu0 0.0
  %3871 = vmatpush1.xpose.msra.mxu0 0.0
  %3872 = vmatprep.subr.mxu0 0.0
  %3873 = vmatpush1.xpose.msra.mxu0 0.0
  %3874 = vmatprep.subr.mxu0 0.0
  %3875 = vmatpush1.xpose.msra.mxu0 0.0
  %3876 = vmatprep.subr.mxu0 0.0
  %3877 = vmatpush1.xpose.msra.mxu0 0.0
  %3878 = vmatprep.subr.mxu0 0.0
  %3879 = vmatpush1.xpose.msra.mxu0 0.0
  %3880 = vmatprep.mubr.f32.mxu0 0.0
  %3881 = vmatmul.mubr.f32.gmra.mrb[0].mxu0 %v3812
  %v3882 = vpop.f32.mrb[0].mxu0
  %v3883 = vadd.f32 0.0, %v3882
  %v3884 = vpop.f32.mrb[0].mxu0
  %3885 = vdwg.mxu0
  %3886 = vrot.lane.b32.xlu0 %v3723, 96
  %v3887 = vpop.permute.xlu0 %3886
  %v3888 = vsel %vm243, %v2169, 0
  %v3890 = vsel %vm243, %v3887, 0
  %3892 = vmatprep.subr.mxu0 0.0
  %3893 = vmatpush1.xpose.msra.mxu0 %v3890
  %3894 = vmatprep.subr.mxu0 0.0
  %3895 = vmatpush1.xpose.msra.mxu0 0.0
  %3896 = vmatprep.subr.mxu0 0.0
  %3897 = vmatpush1.xpose.msra.mxu0 0.0
  %3898 = vmatprep.subr.mxu0 0.0
  %3899 = vmatpush1.xpose.msra.mxu0 0.0
  %3900 = vmatprep.subr.mxu0 0.0
  %3901 = vmatpush1.xpose.msra.mxu0 0.0
  %3902 = vmatprep.subr.mxu0 0.0
  %3903 = vmatpush1.xpose.msra.mxu0 0.0
  %3904 = vmatprep.subr.mxu0 0.0
  %3905 = vmatpush1.xpose.msra.mxu0 0.0
  %3906 = vmatprep.subr.mxu0 0.0
  %3907 = vmatpush1.xpose.msra.mxu0 0.0
  %3908 = vmatprep.subr.mxu0 0.0
  %3909 = vmatpush1.xpose.msra.mxu0 0.0
  %3910 = vmatprep.subr.mxu0 0.0
  %3911 = vmatpush1.xpose.msra.mxu0 0.0
  %3912 = vmatprep.subr.mxu0 0.0
  %3913 = vmatpush1.xpose.msra.mxu0 0.0
  %3914 = vmatprep.subr.mxu0 0.0
  %3915 = vmatpush1.xpose.msra.mxu0 0.0
  %3916 = vmatprep.subr.mxu0 0.0
  %3917 = vmatpush1.xpose.msra.mxu0 0.0
  %3918 = vmatprep.subr.mxu0 0.0
  %3919 = vmatpush1.xpose.msra.mxu0 0.0
  %3920 = vmatprep.subr.mxu0 0.0
  %3921 = vmatpush1.xpose.msra.mxu0 0.0
  %3922 = vmatprep.subr.mxu0 0.0
  %3923 = vmatpush1.xpose.msra.mxu0 0.0
  %3924 = vmatprep.subr.mxu0 0.0
  %3925 = vmatpush1.xpose.msra.mxu0 0.0
  %3926 = vmatprep.subr.mxu0 0.0
  %3927 = vmatpush1.xpose.msra.mxu0 0.0
  %3928 = vmatprep.subr.mxu0 0.0
  %3929 = vmatpush1.xpose.msra.mxu0 0.0
  %3930 = vmatprep.subr.mxu0 0.0
  %3931 = vmatpush1.xpose.msra.mxu0 0.0
  %3932 = vmatprep.subr.mxu0 0.0
  %3933 = vmatpush1.xpose.msra.mxu0 0.0
  %3934 = vmatprep.subr.mxu0 0.0
  %3935 = vmatpush1.xpose.msra.mxu0 0.0
  %3936 = vmatprep.subr.mxu0 0.0
  %3937 = vmatpush1.xpose.msra.mxu0 0.0
  %3938 = vmatprep.subr.mxu0 0.0
  %3939 = vmatpush1.xpose.msra.mxu0 0.0
  %3940 = vmatprep.subr.mxu0 0.0
  %3941 = vmatpush1.xpose.msra.mxu0 0.0
  %3942 = vmatprep.subr.mxu0 0.0
  %3943 = vmatpush1.xpose.msra.mxu0 0.0
  %3944 = vmatprep.subr.mxu0 0.0
  %3945 = vmatpush1.xpose.msra.mxu0 0.0
  %3946 = vmatprep.subr.mxu0 0.0
  %3947 = vmatpush1.xpose.msra.mxu0 0.0
  %3948 = vmatprep.subr.mxu0 0.0
  %3949 = vmatpush1.xpose.msra.mxu0 0.0
  %3950 = vmatprep.subr.mxu0 0.0
  %3951 = vmatpush1.xpose.msra.mxu0 0.0
  %3952 = vmatprep.subr.mxu0 0.0
  %3953 = vmatpush1.xpose.msra.mxu0 0.0
  %3954 = vmatprep.subr.mxu0 0.0
  %3955 = vmatpush1.xpose.msra.mxu0 0.0
  %3956 = vmatprep.mubr.f32.mxu0 0.0
  %3957 = vmatmul.mubr.f32.gmra.mrb[0].mxu0 %v3888
  %v3958 = vpop.f32.mrb[0].mxu0
  %v3959 = vadd.f32 0.0, %v3958
  %v3960 = vpop.f32.mrb[0].mxu0
  %3961 = vdwg.mxu0
  %3962 = vrot.lane.b32.xlu0 %v3725, 96
  %v3963 = vpop.permute.xlu0 %3962
  %v3964 = vsel %vm243, %v2171, 0
  %v3966 = vsel %vm243, %v3963, 0
  %3968 = vmatprep.subr.mxu0 0.0
  %3969 = vmatpush1.xpose.msra.mxu0 %v3966
  %3970 = vmatprep.subr.mxu0 0.0
  %3971 = vmatpush1.xpose.msra.mxu0 0.0
  %3972 = vmatprep.subr.mxu0 0.0
  %3973 = vmatpush1.xpose.msra.mxu0 0.0
  %3974 = vmatprep.subr.mxu0 0.0
  %3975 = vmatpush1.xpose.msra.mxu0 0.0
  %3976 = vmatprep.subr.mxu0 0.0
  %3977 = vmatpush1.xpose.msra.mxu0 0.0
  %3978 = vmatprep.subr.mxu0 0.0
  %3979 = vmatpush1.xpose.msra.mxu0 0.0
  %3980 = vmatprep.subr.mxu0 0.0
  %3981 = vmatpush1.xpose.msra.mxu0 0.0
  %3982 = vmatprep.subr.mxu0 0.0
  %3983 = vmatpush1.xpose.msra.mxu0 0.0
  %3984 = vmatprep.subr.mxu0 0.0
  %3985 = vmatpush1.xpose.msra.mxu0 0.0
  %3986 = vmatprep.subr.mxu0 0.0
  %3987 = vmatpush1.xpose.msra.mxu0 0.0
  %3988 = vmatprep.subr.mxu0 0.0
  %3989 = vmatpush1.xpose.msra.mxu0 0.0
  %3990 = vmatprep.subr.mxu0 0.0
  %3991 = vmatpush1.xpose.msra.mxu0 0.0
  %3992 = vmatprep.subr.mxu0 0.0
  %3993 = vmatpush1.xpose.msra.mxu0 0.0
  %3994 = vmatprep.subr.mxu0 0.0
  %3995 = vmatpush1.xpose.msra.mxu0 0.0
  %3996 = vmatprep.subr.mxu0 0.0
  %3997 = vmatpush1.xpose.msra.mxu0 0.0
  %3998 = vmatprep.subr.mxu0 0.0
  %3999 = vmatpush1.xpose.msra.mxu0 0.0
  %4000 = vmatprep.subr.mxu0 0.0
  %4001 = vmatpush1.xpose.msra.mxu0 0.0
  %4002 = vmatprep.subr.mxu0 0.0
  %4003 = vmatpush1.xpose.msra.mxu0 0.0
  %4004 = vmatprep.subr.mxu0 0.0
  %4005 = vmatpush1.xpose.msra.mxu0 0.0
  %4006 = vmatprep.subr.mxu0 0.0
  %4007 = vmatpush1.xpose.msra.mxu0 0.0
  %4008 = vmatprep.subr.mxu0 0.0
  %4009 = vmatpush1.xpose.msra.mxu0 0.0
  %4010 = vmatprep.subr.mxu0 0.0
  %4011 = vmatpush1.xpose.msra.mxu0 0.0
  %4012 = vmatprep.subr.mxu0 0.0
  %4013 = vmatpush1.xpose.msra.mxu0 0.0
  %4014 = vmatprep.subr.mxu0 0.0
  %4015 = vmatpush1.xpose.msra.mxu0 0.0
  %4016 = vmatprep.subr.mxu0 0.0
  %4017 = vmatpush1.xpose.msra.mxu0 0.0
  %4018 = vmatprep.subr.mxu0 0.0
  %4019 = vmatpush1.xpose.msra.mxu0 0.0
  %4020 = vmatprep.subr.mxu0 0.0
  %4021 = vmatpush1.xpose.msra.mxu0 0.0
  %4022 = vmatprep.subr.mxu0 0.0
  %4023 = vmatpush1.xpose.msra.mxu0 0.0
  %4024 = vmatprep.subr.mxu0 0.0
  %4025 = vmatpush1.xpose.msra.mxu0 0.0
  %4026 = vmatprep.subr.mxu0 0.0
  %4027 = vmatpush1.xpose.msra.mxu0 0.0
  %4028 = vmatprep.subr.mxu0 0.0
  %4029 = vmatpush1.xpose.msra.mxu0 0.0
  %4030 = vmatprep.subr.mxu0 0.0
  %4031 = vmatpush1.xpose.msra.mxu0 0.0
  %4032 = vmatprep.mubr.f32.mxu0 0.0
  %4033 = vmatmul.mubr.f32.gmra.mrb[0].mxu0 %v3964
  %v4034 = vpop.f32.mrb[0].mxu0
  %v4035 = vadd.f32 0.0, %v4034
  %v4036 = vpop.f32.mrb[0].mxu0
  %4037 = vdwg.mxu0
  %4038 = vrot.lane.b32.xlu0 %v3727, 96
  %v4039 = vpop.permute.xlu0 %4038
  %v4040 = vsel %vm243, %v2173, 0
  %v4042 = vsel %vm243, %v4039, 0
  %4044 = vmatprep.subr.mxu0 0.0
  %4045 = vmatpush1.xpose.msra.mxu0 %v4042
  %4046 = vmatprep.subr.mxu0 0.0
  %4047 = vmatpush1.xpose.msra.mxu0 0.0
  %4048 = vmatprep.subr.mxu0 0.0
  %4049 = vmatpush1.xpose.msra.mxu0 0.0
  %4050 = vmatprep.subr.mxu0 0.0
  %4051 = vmatpush1.xpose.msra.mxu0 0.0
  %4052 = vmatprep.subr.mxu0 0.0
  %4053 = vmatpush1.xpose.msra.mxu0 0.0
  %4054 = vmatprep.subr.mxu0 0.0
  %4055 = vmatpush1.xpose.msra.mxu0 0.0
  %4056 = vmatprep.subr.mxu0 0.0
  %4057 = vmatpush1.xpose.msra.mxu0 0.0
  %4058 = vmatprep.subr.mxu0 0.0
  %4059 = vmatpush1.xpose.msra.mxu0 0.0
  %4060 = vmatprep.subr.mxu0 0.0
  %4061 = vmatpush1.xpose.msra.mxu0 0.0
  %4062 = vmatprep.subr.mxu0 0.0
  %4063 = vmatpush1.xpose.msra.mxu0 0.0
  %4064 = vmatprep.subr.mxu0 0.0
  %4065 = vmatpush1.xpose.msra.mxu0 0.0
  %4066 = vmatprep.subr.mxu0 0.0
  %4067 = vmatpush1.xpose.msra.mxu0 0.0
  %4068 = vmatprep.subr.mxu0 0.0
  %4069 = vmatpush1.xpose.msra.mxu0 0.0
  %4070 = vmatprep.subr.mxu0 0.0
  %4071 = vmatpush1.xpose.msra.mxu0 0.0
  %4072 = vmatprep.subr.mxu0 0.0
  %4073 = vmatpush1.xpose.msra.mxu0 0.0
  %4074 = vmatprep.subr.mxu0 0.0
  %4075 = vmatpush1.xpose.msra.mxu0 0.0
  %4076 = vmatprep.subr.mxu0 0.0
  %4077 = vmatpush1.xpose.msra.mxu0 0.0
  %4078 = vmatprep.subr.mxu0 0.0
  %4079 = vmatpush1.xpose.msra.mxu0 0.0
  %4080 = vmatprep.subr.mxu0 0.0
  %4081 = vmatpush1.xpose.msra.mxu0 0.0
  %4082 = vmatprep.subr.mxu0 0.0
  %4083 = vmatpush1.xpose.msra.mxu0 0.0
  %4084 = vmatprep.subr.mxu0 0.0
  %4085 = vmatpush1.xpose.msra.mxu0 0.0
  %4086 = vmatprep.subr.mxu0 0.0
  %4087 = vmatpush1.xpose.msra.mxu0 0.0
  %4088 = vmatprep.subr.mxu0 0.0
  %4089 = vmatpush1.xpose.msra.mxu0 0.0
  %4090 = vmatprep.subr.mxu0 0.0
  %4091 = vmatpush1.xpose.msra.mxu0 0.0
  %4092 = vmatprep.subr.mxu0 0.0
  %4093 = vmatpush1.xpose.msra.mxu0 0.0
  %4094 = vmatprep.subr.mxu0 0.0
  %4095 = vmatpush1.xpose.msra.mxu0 0.0
  %4096 = vmatprep.subr.mxu0 0.0
  %4097 = vmatpush1.xpose.msra.mxu0 0.0
  %4098 = vmatprep.subr.mxu0 0.0
  %4099 = vmatpush1.xpose.msra.mxu0 0.0
  %4100 = vmatprep.subr.mxu0 0.0
  %4101 = vmatpush1.xpose.msra.mxu0 0.0
  %4102 = vmatprep.subr.mxu0 0.0
  %4103 = vmatpush1.xpose.msra.mxu0 0.0
  %4104 = vmatprep.subr.mxu0 0.0
  %4105 = vmatpush1.xpose.msra.mxu0 0.0
  %4106 = vmatprep.subr.mxu0 0.0
  %4107 = vmatpush1.xpose.msra.mxu0 0.0
  %4108 = vmatprep.mubr.f32.mxu0 0.0
  %4109 = vmatmul.mubr.f32.gmra.mrb[0].mxu0 %v4040
  %v4110 = vpop.f32.mrb[0].mxu0
  %v4111 = vadd.f32 0.0, %v4110
  %v4112 = vpop.f32.mrb[0].mxu0
  %4113 = vdwg.mxu0
  %4114 = vrot.lane.b32.xlu0 %v3729, 96
  %v4115 = vpop.permute.xlu0 %4114
  %v4116 = vsel %vm243, %v2175, 0
  %v4118 = vsel %vm243, %v4115, 0
  %4120 = vmatprep.subr.mxu0 0.0
  %4121 = vmatpush1.xpose.msra.mxu0 %v4118
  %4122 = vmatprep.subr.mxu0 0.0
  %4123 = vmatpush1.xpose.msra.mxu0 0.0
  %4124 = vmatprep.subr.mxu0 0.0
  %4125 = vmatpush1.xpose.msra.mxu0 0.0
  %4126 = vmatprep.subr.mxu0 0.0
  %4127 = vmatpush1.xpose.msra.mxu0 0.0
  %4128 = vmatprep.subr.mxu0 0.0
  %4129 = vmatpush1.xpose.msra.mxu0 0.0
  %4130 = vmatprep.subr.mxu0 0.0
  %4131 = vmatpush1.xpose.msra.mxu0 0.0
  %4132 = vmatprep.subr.mxu0 0.0
  %4133 = vmatpush1.xpose.msra.mxu0 0.0
  %4134 = vmatprep.subr.mxu0 0.0
  %4135 = vmatpush1.xpose.msra.mxu0 0.0
  %4136 = vmatprep.subr.mxu0 0.0
  %4137 = vmatpush1.xpose.msra.mxu0 0.0
  %4138 = vmatprep.subr.mxu0 0.0
  %4139 = vmatpush1.xpose.msra.mxu0 0.0
  %4140 = vmatprep.subr.mxu0 0.0
  %4141 = vmatpush1.xpose.msra.mxu0 0.0
  %4142 = vmatprep.subr.mxu0 0.0
  %4143 = vmatpush1.xpose.msra.mxu0 0.0
  %4144 = vmatprep.subr.mxu0 0.0
  %4145 = vmatpush1.xpose.msra.mxu0 0.0
  %4146 = vmatprep.subr.mxu0 0.0
  %4147 = vmatpush1.xpose.msra.mxu0 0.0
  %4148 = vmatprep.subr.mxu0 0.0
  %4149 = vmatpush1.xpose.msra.mxu0 0.0
  %4150 = vmatprep.subr.mxu0 0.0
  %4151 = vmatpush1.xpose.msra.mxu0 0.0
  %4152 = vmatprep.subr.mxu0 0.0
  %4153 = vmatpush1.xpose.msra.mxu0 0.0
  %4154 = vmatprep.subr.mxu0 0.0
  %4155 = vmatpush1.xpose.msra.mxu0 0.0
  %4156 = vmatprep.subr.mxu0 0.0
  %4157 = vmatpush1.xpose.msra.mxu0 0.0
  %4158 = vmatprep.subr.mxu0 0.0
  %4159 = vmatpush1.xpose.msra.mxu0 0.0
  %4160 = vmatprep.subr.mxu0 0.0
  %4161 = vmatpush1.xpose.msra.mxu0 0.0
  %4162 = vmatprep.subr.mxu0 0.0
  %4163 = vmatpush1.xpose.msra.mxu0 0.0
  %4164 = vmatprep.subr.mxu0 0.0
  %4165 = vmatpush1.xpose.msra.mxu0 0.0
  %4166 = vmatprep.subr.mxu0 0.0
  %4167 = vmatpush1.xpose.msra.mxu0 0.0
  %4168 = vmatprep.subr.mxu0 0.0
  %4169 = vmatpush1.xpose.msra.mxu0 0.0
  %4170 = vmatprep.subr.mxu0 0.0
  %4171 = vmatpush1.xpose.msra.mxu0 0.0
  %4172 = vmatprep.subr.mxu0 0.0
  %4173 = vmatpush1.xpose.msra.mxu0 0.0
  %4174 = vmatprep.subr.mxu0 0.0
  %4175 = vmatpush1.xpose.msra.mxu0 0.0
  %4176 = vmatprep.subr.mxu0 0.0
  %4177 = vmatpush1.xpose.msra.mxu0 0.0
  %4178 = vmatprep.subr.mxu0 0.0
  %4179 = vmatpush1.xpose.msra.mxu0 0.0
  %4180 = vmatprep.subr.mxu0 0.0
  %4181 = vmatpush1.xpose.msra.mxu0 0.0
  %4182 = vmatprep.subr.mxu0 0.0
  %4183 = vmatpush1.xpose.msra.mxu0 0.0
  %4184 = vmatprep.mubr.f32.mxu0 0.0
  %4185 = vmatmul.mubr.f32.gmra.mrb[0].mxu0 %v4116
  %v4186 = vpop.f32.mrb[0].mxu0
  %v4187 = vadd.f32 0.0, %v4186
  %v4188 = vpop.f32.mrb[0].mxu0
  %4189 = vdwg.mxu0
  %4190 = vrot.lane.b32.xlu0 %v3731, 96
  %v4191 = vpop.permute.xlu0 %4190
  %v4192 = vsel %vm243, %v2177, 0
  %v4194 = vsel %vm243, %v4191, 0
  %4196 = vmatprep.subr.mxu0 0.0
  %4197 = vmatpush1.xpose.msra.mxu0 %v4194
  %4198 = vmatprep.subr.mxu0 0.0
  %4199 = vmatpush1.xpose.msra.mxu0 0.0
  %4200 = vmatprep.subr.mxu0 0.0
  %4201 = vmatpush1.xpose.msra.mxu0 0.0
  %4202 = vmatprep.subr.mxu0 0.0
  %4203 = vmatpush1.xpose.msra.mxu0 0.0
  %4204 = vmatprep.subr.mxu0 0.0
  %4205 = vmatpush1.xpose.msra.mxu0 0.0
  %4206 = vmatprep.subr.mxu0 0.0
  %4207 = vmatpush1.xpose.msra.mxu0 0.0
  %4208 = vmatprep.subr.mxu0 0.0
  %4209 = vmatpush1.xpose.msra.mxu0 0.0
  %4210 = vmatprep.subr.mxu0 0.0
  %4211 = vmatpush1.xpose.msra.mxu0 0.0
  %4212 = vmatprep.subr.mxu0 0.0
  %4213 = vmatpush1.xpose.msra.mxu0 0.0
  %4214 = vmatprep.subr.mxu0 0.0
  %4215 = vmatpush1.xpose.msra.mxu0 0.0
  %4216 = vmatprep.subr.mxu0 0.0
  %4217 = vmatpush1.xpose.msra.mxu0 0.0
  %4218 = vmatprep.subr.mxu0 0.0
  %4219 = vmatpush1.xpose.msra.mxu0 0.0
  %4220 = vmatprep.subr.mxu0 0.0
  %4221 = vmatpush1.xpose.msra.mxu0 0.0
  %4222 = vmatprep.subr.mxu0 0.0
  %4223 = vmatpush1.xpose.msra.mxu0 0.0
  %4224 = vmatprep.subr.mxu0 0.0
  %4225 = vmatpush1.xpose.msra.mxu0 0.0
  %4226 = vmatprep.subr.mxu0 0.0
  %4227 = vmatpush1.xpose.msra.mxu0 0.0
  %4228 = vmatprep.subr.mxu0 0.0
  %4229 = vmatpush1.xpose.msra.mxu0 0.0
  %4230 = vmatprep.subr.mxu0 0.0
  %4231 = vmatpush1.xpose.msra.mxu0 0.0
  %4232 = vmatprep.subr.mxu0 0.0
  %4233 = vmatpush1.xpose.msra.mxu0 0.0
  %4234 = vmatprep.subr.mxu0 0.0
  %4235 = vmatpush1.xpose.msra.mxu0 0.0
  %4236 = vmatprep.subr.mxu0 0.0
  %4237 = vmatpush1.xpose.msra.mxu0 0.0
  %4238 = vmatprep.subr.mxu0 0.0
  %4239 = vmatpush1.xpose.msra.mxu0 0.0
  %4240 = vmatprep.subr.mxu0 0.0
  %4241 = vmatpush1.xpose.msra.mxu0 0.0
  %4242 = vmatprep.subr.mxu0 0.0
  %4243 = vmatpush1.xpose.msra.mxu0 0.0
  %4244 = vmatprep.subr.mxu0 0.0
  %4245 = vmatpush1.xpose.msra.mxu0 0.0
  %4246 = vmatprep.subr.mxu0 0.0
  %4247 = vmatpush1.xpose.msra.mxu0 0.0
  %4248 = vmatprep.subr.mxu0 0.0
  %4249 = vmatpush1.xpose.msra.mxu0 0.0
  %4250 = vmatprep.subr.mxu0 0.0
  %4251 = vmatpush1.xpose.msra.mxu0 0.0
  %4252 = vmatprep.subr.mxu0 0.0
  %4253 = vmatpush1.xpose.msra.mxu0 0.0
  %4254 = vmatprep.subr.mxu0 0.0
  %4255 = vmatpush1.xpose.msra.mxu0 0.0
  %4256 = vmatprep.subr.mxu0 0.0
  %4257 = vmatpush1.xpose.msra.mxu0 0.0
  %4258 = vmatprep.subr.mxu0 0.0
  %4259 = vmatpush1.xpose.msra.mxu0 0.0
  %4260 = vmatprep.mubr.f32.mxu0 0.0
  %4261 = vmatmul.mubr.f32.gmra.mrb[0].mxu0 %v4192
  %v4262 = vpop.f32.mrb[0].mxu0
  %v4263 = vadd.f32 0.0, %v4262
  %v4264 = vpop.f32.mrb[0].mxu0
  %4265 = vdwg.mxu0
  %4266 = vrot.lane.b32.xlu0 %v3733, 96
  %v4267 = vpop.permute.xlu0 %4266
  %v4268 = vsel %vm243, %v2179, 0
  %v4270 = vsel %vm243, %v4267, 0
  %4272 = vmatprep.subr.mxu0 0.0
  %4273 = vmatpush1.xpose.msra.mxu0 %v4270
  %4274 = vmatprep.subr.mxu0 0.0
  %4275 = vmatpush1.xpose.msra.mxu0 0.0
  %4276 = vmatprep.subr.mxu0 0.0
  %4277 = vmatpush1.xpose.msra.mxu0 0.0
  %4278 = vmatprep.subr.mxu0 0.0
  %4279 = vmatpush1.xpose.msra.mxu0 0.0
  %4280 = vmatprep.subr.mxu0 0.0
  %4281 = vmatpush1.xpose.msra.mxu0 0.0
  %4282 = vmatprep.subr.mxu0 0.0
  %4283 = vmatpush1.xpose.msra.mxu0 0.0
  %4284 = vmatprep.subr.mxu0 0.0
  %4285 = vmatpush1.xpose.msra.mxu0 0.0
  %4286 = vmatprep.subr.mxu0 0.0
  %4287 = vmatpush1.xpose.msra.mxu0 0.0
  %4288 = vmatprep.subr.mxu0 0.0
  %4289 = vmatpush1.xpose.msra.mxu0 0.0
  %4290 = vmatprep.subr.mxu0 0.0
  %4291 = vmatpush1.xpose.msra.mxu0 0.0
  %4292 = vmatprep.subr.mxu0 0.0
  %4293 = vmatpush1.xpose.msra.mxu0 0.0
  %4294 = vmatprep.subr.mxu0 0.0
  %4295 = vmatpush1.xpose.msra.mxu0 0.0
  %4296 = vmatprep.subr.mxu0 0.0
  %4297 = vmatpush1.xpose.msra.mxu0 0.0
  %4298 = vmatprep.subr.mxu0 0.0
  %4299 = vmatpush1.xpose.msra.mxu0 0.0
  %4300 = vmatprep.subr.mxu0 0.0
  %4301 = vmatpush1.xpose.msra.mxu0 0.0
  %4302 = vmatprep.subr.mxu0 0.0
  %4303 = vmatpush1.xpose.msra.mxu0 0.0
  %4304 = vmatprep.subr.mxu0 0.0
  %4305 = vmatpush1.xpose.msra.mxu0 0.0
  %4306 = vmatprep.subr.mxu0 0.0
  %4307 = vmatpush1.xpose.msra.mxu0 0.0
  %4308 = vmatprep.subr.mxu0 0.0
  %4309 = vmatpush1.xpose.msra.mxu0 0.0
  %4310 = vmatprep.subr.mxu0 0.0
  %4311 = vmatpush1.xpose.msra.mxu0 0.0
  %4312 = vmatprep.subr.mxu0 0.0
  %4313 = vmatpush1.xpose.msra.mxu0 0.0
  %4314 = vmatprep.subr.mxu0 0.0
  %4315 = vmatpush1.xpose.msra.mxu0 0.0
  %4316 = vmatprep.subr.mxu0 0.0
  %4317 = vmatpush1.xpose.msra.mxu0 0.0
  %4318 = vmatprep.subr.mxu0 0.0
  %4319 = vmatpush1.xpose.msra.mxu0 0.0
  %4320 = vmatprep.subr.mxu0 0.0
  %4321 = vmatpush1.xpose.msra.mxu0 0.0
  %4322 = vmatprep.subr.mxu0 0.0
  %4323 = vmatpush1.xpose.msra.mxu0 0.0
  %4324 = vmatprep.subr.mxu0 0.0
  %4325 = vmatpush1.xpose.msra.mxu0 0.0
  %4326 = vmatprep.subr.mxu0 0.0
  %4327 = vmatpush1.xpose.msra.mxu0 0.0
  %4328 = vmatprep.subr.mxu0 0.0
  %4329 = vmatpush1.xpose.msra.mxu0 0.0
  %4330 = vmatprep.subr.mxu0 0.0
  %4331 = vmatpush1.xpose.msra.mxu0 0.0
  %4332 = vmatprep.subr.mxu0 0.0
  %4333 = vmatpush1.xpose.msra.mxu0 0.0
  %4334 = vmatprep.subr.mxu0 0.0
  %4335 = vmatpush1.xpose.msra.mxu0 0.0
  %4336 = vmatprep.mubr.f32.mxu0 0.0
  %4337 = vmatmul.mubr.f32.gmra.mrb[0].mxu0 %v4268
  %v4338 = vpop.f32.mrb[0].mxu0
  %v4339 = vadd.f32 0.0, %v4338
  %v4340 = vpop.f32.mrb[0].mxu0
  %4341 = vdwg.mxu0
  %v4342 = vmul.f32 %v3807, 0.35355338
  %v4343 = vmul.f32 %v3883, 0.35355338
  %v4344 = vmul.f32 %v3959, 0.35355338
  %v4345 = vmul.f32 %v4035, 0.35355338
  %v4346 = vmul.f32 %v4111, 0.35355338
  %v4347 = vmul.f32 %v4187, 0.35355338
  %v4348 = vmul.f32 %v4263, 0.35355338
  %v4349 = vmul.f32 %v4339, 0.35355338
  %v4350 = vsel %vm243, %v4342, -inf
  %4351 = vmax.xlane.f32.xlu0 %v4350
  %v4352 = vpop.xlane.xlu0 %4351
  %v4353 = vsel %vm243, %v4343, -inf
  %4354 = vmax.xlane.f32.xlu0 %v4353
  %v4355 = vpop.xlane.xlu0 %4354
  %v4356 = vsel %vm243, %v4344, -inf
  %4357 = vmax.xlane.f32.xlu0 %v4356
  %v4358 = vpop.xlane.xlu0 %4357
  %v4359 = vsel %vm243, %v4345, -inf
  %4360 = vmax.xlane.f32.xlu0 %v4359
  %v4361 = vpop.xlane.xlu0 %4360
  %v4362 = vsel %vm243, %v4346, -inf
  %4363 = vmax.xlane.f32.xlu0 %v4362
  %v4364 = vpop.xlane.xlu0 %4363
  %v4365 = vsel %vm243, %v4347, -inf
  %4366 = vmax.xlane.f32.xlu0 %v4365
  %v4367 = vpop.xlane.xlu0 %4366
  %v4368 = vsel %vm243, %v4348, -inf
  %4369 = vmax.xlane.f32.xlu0 %v4368
  %v4370 = vpop.xlane.xlu0 %4369
  %v4371 = vsel %vm243, %v4349, -inf
  %4372 = vmax.xlane.f32.xlu0 %v4371
  %v4373 = vpop.xlane.xlu0 %4372
  %v4374 = vsub.f32 %v4342, %v4352
  %v4375 = vsub.f32 %v4343, %v4355
  %v4376 = vsub.f32 %v4344, %v4358
  %v4377 = vsub.f32 %v4345, %v4361
  %v4378 = vsub.f32 %v4346, %v4364
  %v4379 = vsub.f32 %v4347, %v4367
  %v4380 = vsub.f32 %v4348, %v4370
  %v4381 = vsub.f32 %v4349, %v4373
  %v4382 = vmul.f32 %v4374, 1.442695
  %v4383 = vpow.pop %v4382
  %v4384 = vmul.f32 %v4375, 1.442695
  %v4385 = vpow.pop %v4384
  %v4386 = vmul.f32 %v4376, 1.442695
  %v4387 = vpow.pop %v4386
  %v4388 = vmul.f32 %v4377, 1.442695
  %v4389 = vpow.pop %v4388
  %v4390 = vmul.f32 %v4378, 1.442695
  %v4391 = vpow.pop %v4390
  %v4392 = vmul.f32 %v4379, 1.442695
  %v4393 = vpow.pop %v4392
  %v4394 = vmul.f32 %v4380, 1.442695
  %v4395 = vpow.pop %v4394
  %v4396 = vmul.f32 %v4381, 1.442695
  %v4397 = vpow.pop %v4396
  %v4398 = vsel %vm243, %v4383, 0.0
  %4399 = vadd.xlane.f32.xlu0 %v4398
  %v4400 = vpop.xlane.xlu0 %4399
  %v4401 = vsel %vm243, %v4385, 0.0
  %4402 = vadd.xlane.f32.xlu0 %v4401
  %v4403 = vpop.xlane.xlu0 %4402
  %v4404 = vsel %vm243, %v4387, 0.0
  %4405 = vadd.xlane.f32.xlu0 %v4404
  %v4406 = vpop.xlane.xlu0 %4405
  %v4407 = vsel %vm243, %v4389, 0.0
  %4408 = vadd.xlane.f32.xlu0 %v4407
  %v4409 = vpop.xlane.xlu0 %4408
  %v4410 = vsel %vm243, %v4391, 0.0
  %4411 = vadd.xlane.f32.xlu0 %v4410
  %v4412 = vpop.xlane.xlu0 %4411
  %v4413 = vsel %vm243, %v4393, 0.0
  %4414 = vadd.xlane.f32.xlu0 %v4413
  %v4415 = vpop.xlane.xlu0 %4414
  %v4416 = vsel %vm243, %v4395, 0.0
  %4417 = vadd.xlane.f32.xlu0 %v4416
  %v4418 = vpop.xlane.xlu0 %4417
  %v4419 = vsel %vm243, %v4397, 0.0
  %4420 = vadd.xlane.f32.xlu0 %v4419
  %v4421 = vpop.xlane.xlu0 %4420
  %v4422 = vrcp.pop %v4400
  %v4423 = vmul.f32 %v4383, %v4422
  %v4424 = vrcp.pop %v4403
  %v4425 = vmul.f32 %v4385, %v4424
  %v4426 = vrcp.pop %v4406
  %v4427 = vmul.f32 %v4387, %v4426
  %v4428 = vrcp.pop %v4409
  %v4429 = vmul.f32 %v4389, %v4428
  %v4430 = vrcp.pop %v4412
  %v4431 = vmul.f32 %v4391, %v4430
  %v4432 = vrcp.pop %v4415
  %v4433 = vmul.f32 %v4393, %v4432
  %v4434 = vrcp.pop %v4418
  %v4435 = vmul.f32 %v4395, %v4434
  %v4436 = vrcp.pop %v4421
  %v4437 = vmul.f32 %v4397, %v4436
  %4438 = vrot.lane.b32.xlu0 %v3712, 64
  %v4439 = vpop.permute.xlu0 %4438
  %v4442 = vsel %vm243, %v4423, 0
  %4444 = vmatprep.subr.mxu0 0.0
  %4445 = vmatpush1.msra.mxu0 %v4439
  %4446 = vmatprep.subr.mxu0 0.0
  %4447 = vmatpush1.msra.mxu0 0.0
  %4448 = vmatprep.subr.mxu0 0.0
  %4449 = vmatpush1.msra.mxu0 0.0
  %4450 = vmatprep.subr.mxu0 0.0
  %4451 = vmatpush1.msra.mxu0 0.0
  %4452 = vmatprep.subr.mxu0 0.0
  %4453 = vmatpush1.msra.mxu0 0.0
  %4454 = vmatprep.subr.mxu0 0.0
  %4455 = vmatpush1.msra.mxu0 0.0
  %4456 = vmatprep.subr.mxu0 0.0
  %4457 = vmatpush1.msra.mxu0 0.0
  %4458 = vmatprep.subr.mxu0 0.0
  %4459 = vmatpush1.msra.mxu0 0.0
  %4460 = vmatprep.subr.mxu0 0.0
  %4461 = vmatpush1.msra.mxu0 0.0
  %4462 = vmatprep.subr.mxu0 0.0
  %4463 = vmatpush1.msra.mxu0 0.0
  %4464 = vmatprep.subr.mxu0 0.0
  %4465 = vmatpush1.msra.mxu0 0.0
  %4466 = vmatprep.subr.mxu0 0.0
  %4467 = vmatpush1.msra.mxu0 0.0
  %4468 = vmatprep.subr.mxu0 0.0
  %4469 = vmatpush1.msra.mxu0 0.0
  %4470 = vmatprep.subr.mxu0 0.0
  %4471 = vmatpush1.msra.mxu0 0.0
  %4472 = vmatprep.subr.mxu0 0.0
  %4473 = vmatpush1.msra.mxu0 0.0
  %4474 = vmatprep.subr.mxu0 0.0
  %4475 = vmatpush1.msra.mxu0 0.0
  %4476 = vmatprep.subr.mxu0 0.0
  %4477 = vmatpush1.msra.mxu0 0.0
  %4478 = vmatprep.subr.mxu0 0.0
  %4479 = vmatpush1.msra.mxu0 0.0
  %4480 = vmatprep.subr.mxu0 0.0
  %4481 = vmatpush1.msra.mxu0 0.0
  %4482 = vmatprep.subr.mxu0 0.0
  %4483 = vmatpush1.msra.mxu0 0.0
  %4484 = vmatprep.subr.mxu0 0.0
  %4485 = vmatpush1.msra.mxu0 0.0
  %4486 = vmatprep.subr.mxu0 0.0
  %4487 = vmatpush1.msra.mxu0 0.0
  %4488 = vmatprep.subr.mxu0 0.0
  %4489 = vmatpush1.msra.mxu0 0.0
  %4490 = vmatprep.subr.mxu0 0.0
  %4491 = vmatpush1.msra.mxu0 0.0
  %4492 = vmatprep.subr.mxu0 0.0
  %4493 = vmatpush1.msra.mxu0 0.0
  %4494 = vmatprep.subr.mxu0 0.0
  %4495 = vmatpush1.msra.mxu0 0.0
  %4496 = vmatprep.subr.mxu0 0.0
  %4497 = vmatpush1.msra.mxu0 0.0
  %4498 = vmatprep.subr.mxu0 0.0
  %4499 = vmatpush1.msra.mxu0 0.0
  %4500 = vmatprep.subr.mxu0 0.0
  %4501 = vmatpush1.msra.mxu0 0.0
  %4502 = vmatprep.subr.mxu0 0.0
  %4503 = vmatpush1.msra.mxu0 0.0
  %4504 = vmatprep.subr.mxu0 0.0
  %4505 = vmatpush1.msra.mxu0 0.0
  %4506 = vmatprep.subr.mxu0 0.0
  %4507 = vmatpush1.msra.mxu0 0.0
  %4508 = vmatprep.mubr.f32.mxu0 0.0
  %4509 = vmatmul.mubr.f32.gmra.mrb[0].mxu0 %v4442
  %v4510 = vpop.f32.mrb[0].mxu0
  %v4511 = vadd.f32 0.0, %v4510
  %v4512 = vpop.f32.mrb[0].mxu0
  %4513 = vdwg.mxu0
  %4514 = vrot.lane.b32.xlu0 %v3717, 64
  %v4515 = vpop.permute.xlu0 %4514
  %v4518 = vsel %vm243, %v4425, 0
  %4520 = vmatprep.subr.mxu0 0.0
  %4521 = vmatpush1.msra.mxu0 %v4515
  %4522 = vmatprep.subr.mxu0 0.0
  %4523 = vmatpush1.msra.mxu0 0.0
  %4524 = vmatprep.subr.mxu0 0.0
  %4525 = vmatpush1.msra.mxu0 0.0
  %4526 = vmatprep.subr.mxu0 0.0
  %4527 = vmatpush1.msra.mxu0 0.0
  %4528 = vmatprep.subr.mxu0 0.0
  %4529 = vmatpush1.msra.mxu0 0.0
  %4530 = vmatprep.subr.mxu0 0.0
  %4531 = vmatpush1.msra.mxu0 0.0
  %4532 = vmatprep.subr.mxu0 0.0
  %4533 = vmatpush1.msra.mxu0 0.0
  %4534 = vmatprep.subr.mxu0 0.0
  %4535 = vmatpush1.msra.mxu0 0.0
  %4536 = vmatprep.subr.mxu0 0.0
  %4537 = vmatpush1.msra.mxu0 0.0
  %4538 = vmatprep.subr.mxu0 0.0
  %4539 = vmatpush1.msra.mxu0 0.0
  %4540 = vmatprep.subr.mxu0 0.0
  %4541 = vmatpush1.msra.mxu0 0.0
  %4542 = vmatprep.subr.mxu0 0.0
  %4543 = vmatpush1.msra.mxu0 0.0
  %4544 = vmatprep.subr.mxu0 0.0
  %4545 = vmatpush1.msra.mxu0 0.0
  %4546 = vmatprep.subr.mxu0 0.0
  %4547 = vmatpush1.msra.mxu0 0.0
  %4548 = vmatprep.subr.mxu0 0.0
  %4549 = vmatpush1.msra.mxu0 0.0
  %4550 = vmatprep.subr.mxu0 0.0
  %4551 = vmatpush1.msra.mxu0 0.0
  %4552 = vmatprep.subr.mxu0 0.0
  %4553 = vmatpush1.msra.mxu0 0.0
  %4554 = vmatprep.subr.mxu0 0.0
  %4555 = vmatpush1.msra.mxu0 0.0
  %4556 = vmatprep.subr.mxu0 0.0
  %4557 = vmatpush1.msra.mxu0 0.0
  %4558 = vmatprep.subr.mxu0 0.0
  %4559 = vmatpush1.msra.mxu0 0.0
  %4560 = vmatprep.subr.mxu0 0.0
  %4561 = vmatpush1.msra.mxu0 0.0
  %4562 = vmatprep.subr.mxu0 0.0
  %4563 = vmatpush1.msra.mxu0 0.0
  %4564 = vmatprep.subr.mxu0 0.0
  %4565 = vmatpush1.msra.mxu0 0.0
  %4566 = vmatprep.subr.mxu0 0.0
  %4567 = vmatpush1.msra.mxu0 0.0
  %4568 = vmatprep.subr.mxu0 0.0
  %4569 = vmatpush1.msra.mxu0 0.0
  %4570 = vmatprep.subr.mxu0 0.0
  %4571 = vmatpush1.msra.mxu0 0.0
  %4572 = vmatprep.subr.mxu0 0.0
  %4573 = vmatpush1.msra.mxu0 0.0
  %4574 = vmatprep.subr.mxu0 0.0
  %4575 = vmatpush1.msra.mxu0 0.0
  %4576 = vmatprep.subr.mxu0 0.0
  %4577 = vmatpush1.msra.mxu0 0.0
  %4578 = vmatprep.subr.mxu0 0.0
  %4579 = vmatpush1.msra.mxu0 0.0
  %4580 = vmatprep.subr.mxu0 0.0
  %4581 = vmatpush1.msra.mxu0 0.0
  %4582 = vmatprep.subr.mxu0 0.0
  %4583 = vmatpush1.msra.mxu0 0.0
  %4584 = vmatprep.mubr.f32.mxu0 0.0
  %4585 = vmatmul.mubr.f32.gmra.mrb[0].mxu0 %v4518
  %v4586 = vpop.f32.mrb[0].mxu0
  %v4587 = vadd.f32 0.0, %v4586
  %v4588 = vpop.f32.mrb[0].mxu0
  %4589 = vdwg.mxu0
  %4590 = vrot.lane.b32.xlu0 %v3723, 64
  %v4591 = vpop.permute.xlu0 %4590
  %v4594 = vsel %vm243, %v4427, 0
  %4596 = vmatprep.subr.mxu0 0.0
  %4597 = vmatpush1.msra.mxu0 %v4591
  %4598 = vmatprep.subr.mxu0 0.0
  %4599 = vmatpush1.msra.mxu0 0.0
  %4600 = vmatprep.subr.mxu0 0.0
  %4601 = vmatpush1.msra.mxu0 0.0
  %4602 = vmatprep.subr.mxu0 0.0
  %4603 = vmatpush1.msra.mxu0 0.0
  %4604 = vmatprep.subr.mxu0 0.0
  %4605 = vmatpush1.msra.mxu0 0.0
  %4606 = vmatprep.subr.mxu0 0.0
  %4607 = vmatpush1.msra.mxu0 0.0
  %4608 = vmatprep.subr.mxu0 0.0
  %4609 = vmatpush1.msra.mxu0 0.0
  %4610 = vmatprep.subr.mxu0 0.0
  %4611 = vmatpush1.msra.mxu0 0.0
  %4612 = vmatprep.subr.mxu0 0.0
  %4613 = vmatpush1.msra.mxu0 0.0
  %4614 = vmatprep.subr.mxu0 0.0
  %4615 = vmatpush1.msra.mxu0 0.0
  %4616 = vmatprep.subr.mxu0 0.0
  %4617 = vmatpush1.msra.mxu0 0.0
  %4618 = vmatprep.subr.mxu0 0.0
  %4619 = vmatpush1.msra.mxu0 0.0
  %4620 = vmatprep.subr.mxu0 0.0
  %4621 = vmatpush1.msra.mxu0 0.0
  %4622 = vmatprep.subr.mxu0 0.0
  %4623 = vmatpush1.msra.mxu0 0.0
  %4624 = vmatprep.subr.mxu0 0.0
  %4625 = vmatpush1.msra.mxu0 0.0
  %4626 = vmatprep.subr.mxu0 0.0
  %4627 = vmatpush1.msra.mxu0 0.0
  %4628 = vmatprep.subr.mxu0 0.0
  %4629 = vmatpush1.msra.mxu0 0.0
  %4630 = vmatprep.subr.mxu0 0.0
  %4631 = vmatpush1.msra.mxu0 0.0
  %4632 = vmatprep.subr.mxu0 0.0
  %4633 = vmatpush1.msra.mxu0 0.0
  %4634 = vmatprep.subr.mxu0 0.0
  %4635 = vmatpush1.msra.mxu0 0.0
  %4636 = vmatprep.subr.mxu0 0.0
  %4637 = vmatpush1.msra.mxu0 0.0
  %4638 = vmatprep.subr.mxu0 0.0
  %4639 = vmatpush1.msra.mxu0 0.0
  %4640 = vmatprep.subr.mxu0 0.0
  %4641 = vmatpush1.msra.mxu0 0.0
  %4642 = vmatprep.subr.mxu0 0.0
  %4643 = vmatpush1.msra.mxu0 0.0
  %4644 = vmatprep.subr.mxu0 0.0
  %4645 = vmatpush1.msra.mxu0 0.0
  %4646 = vmatprep.subr.mxu0 0.0
  %4647 = vmatpush1.msra.mxu0 0.0
  %4648 = vmatprep.subr.mxu0 0.0
  %4649 = vmatpush1.msra.mxu0 0.0
  %4650 = vmatprep.subr.mxu0 0.0
  %4651 = vmatpush1.msra.mxu0 0.0
  %4652 = vmatprep.subr.mxu0 0.0
  %4653 = vmatpush1.msra.mxu0 0.0
  %4654 = vmatprep.subr.mxu0 0.0
  %4655 = vmatpush1.msra.mxu0 0.0
  %4656 = vmatprep.subr.mxu0 0.0
  %4657 = vmatpush1.msra.mxu0 0.0
  %4658 = vmatprep.subr.mxu0 0.0
  %4659 = vmatpush1.msra.mxu0 0.0
  %4660 = vmatprep.mubr.f32.mxu0 0.0
  %4661 = vmatmul.mubr.f32.gmra.mrb[0].mxu0 %v4594
  %v4662 = vpop.f32.mrb[0].mxu0
  %v4663 = vadd.f32 0.0, %v4662
  %v4664 = vpop.f32.mrb[0].mxu0
  %4665 = vdwg.mxu0
  %4666 = vrot.lane.b32.xlu0 %v3725, 64
  %v4667 = vpop.permute.xlu0 %4666
  %v4670 = vsel %vm243, %v4429, 0
  %4672 = vmatprep.subr.mxu0 0.0
  %4673 = vmatpush1.msra.mxu0 %v4667
  %4674 = vmatprep.subr.mxu0 0.0
  %4675 = vmatpush1.msra.mxu0 0.0
  %4676 = vmatprep.subr.mxu0 0.0
  %4677 = vmatpush1.msra.mxu0 0.0
  %4678 = vmatprep.subr.mxu0 0.0
  %4679 = vmatpush1.msra.mxu0 0.0
  %4680 = vmatprep.subr.mxu0 0.0
  %4681 = vmatpush1.msra.mxu0 0.0
  %4682 = vmatprep.subr.mxu0 0.0
  %4683 = vmatpush1.msra.mxu0 0.0
  %4684 = vmatprep.subr.mxu0 0.0
  %4685 = vmatpush1.msra.mxu0 0.0
  %4686 = vmatprep.subr.mxu0 0.0
  %4687 = vmatpush1.msra.mxu0 0.0
  %4688 = vmatprep.subr.mxu0 0.0
  %4689 = vmatpush1.msra.mxu0 0.0
  %4690 = vmatprep.subr.mxu0 0.0
  %4691 = vmatpush1.msra.mxu0 0.0
  %4692 = vmatprep.subr.mxu0 0.0
  %4693 = vmatpush1.msra.mxu0 0.0
  %4694 = vmatprep.subr.mxu0 0.0
  %4695 = vmatpush1.msra.mxu0 0.0
  %4696 = vmatprep.subr.mxu0 0.0
  %4697 = vmatpush1.msra.mxu0 0.0
  %4698 = vmatprep.subr.mxu0 0.0
  %4699 = vmatpush1.msra.mxu0 0.0
  %4700 = vmatprep.subr.mxu0 0.0
  %4701 = vmatpush1.msra.mxu0 0.0
  %4702 = vmatprep.subr.mxu0 0.0
  %4703 = vmatpush1.msra.mxu0 0.0
  %4704 = vmatprep.subr.mxu0 0.0
  %4705 = vmatpush1.msra.mxu0 0.0
  %4706 = vmatprep.subr.mxu0 0.0
  %4707 = vmatpush1.msra.mxu0 0.0
  %4708 = vmatprep.subr.mxu0 0.0
  %4709 = vmatpush1.msra.mxu0 0.0
  %4710 = vmatprep.subr.mxu0 0.0
  %4711 = vmatpush1.msra.mxu0 0.0
  %4712 = vmatprep.subr.mxu0 0.0
  %4713 = vmatpush1.msra.mxu0 0.0
  %4714 = vmatprep.subr.mxu0 0.0
  %4715 = vmatpush1.msra.mxu0 0.0
  %4716 = vmatprep.subr.mxu0 0.0
  %4717 = vmatpush1.msra.mxu0 0.0
  %4718 = vmatprep.subr.mxu0 0.0
  %4719 = vmatpush1.msra.mxu0 0.0
  %4720 = vmatprep.subr.mxu0 0.0
  %4721 = vmatpush1.msra.mxu0 0.0
  %4722 = vmatprep.subr.mxu0 0.0
  %4723 = vmatpush1.msra.mxu0 0.0
  %4724 = vmatprep.subr.mxu0 0.0
  %4725 = vmatpush1.msra.mxu0 0.0
  %4726 = vmatprep.subr.mxu0 0.0
  %4727 = vmatpush1.msra.mxu0 0.0
  %4728 = vmatprep.subr.mxu0 0.0
  %4729 = vmatpush1.msra.mxu0 0.0
  %4730 = vmatprep.subr.mxu0 0.0
  %4731 = vmatpush1.msra.mxu0 0.0
  %4732 = vmatprep.subr.mxu0 0.0
  %4733 = vmatpush1.msra.mxu0 0.0
  %4734 = vmatprep.subr.mxu0 0.0
  %4735 = vmatpush1.msra.mxu0 0.0
  %4736 = vmatprep.mubr.f32.mxu0 0.0
  %4737 = vmatmul.mubr.f32.gmra.mrb[0].mxu0 %v4670
  %v4738 = vpop.f32.mrb[0].mxu0
  %v4739 = vadd.f32 0.0, %v4738
  %v4740 = vpop.f32.mrb[0].mxu0
  %4741 = vdwg.mxu0
  %4742 = vrot.lane.b32.xlu0 %v3727, 64
  %v4743 = vpop.permute.xlu0 %4742
  %v4746 = vsel %vm243, %v4431, 0
  %4748 = vmatprep.subr.mxu0 0.0
  %4749 = vmatpush1.msra.mxu0 %v4743
  %4750 = vmatprep.subr.mxu0 0.0
  %4751 = vmatpush1.msra.mxu0 0.0
  %4752 = vmatprep.subr.mxu0 0.0
  %4753 = vmatpush1.msra.mxu0 0.0
  %4754 = vmatprep.subr.mxu0 0.0
  %4755 = vmatpush1.msra.mxu0 0.0
  %4756 = vmatprep.subr.mxu0 0.0
  %4757 = vmatpush1.msra.mxu0 0.0
  %4758 = vmatprep.subr.mxu0 0.0
  %4759 = vmatpush1.msra.mxu0 0.0
  %4760 = vmatprep.subr.mxu0 0.0
  %4761 = vmatpush1.msra.mxu0 0.0
  %4762 = vmatprep.subr.mxu0 0.0
  %4763 = vmatpush1.msra.mxu0 0.0
  %4764 = vmatprep.subr.mxu0 0.0
  %4765 = vmatpush1.msra.mxu0 0.0
  %4766 = vmatprep.subr.mxu0 0.0
  %4767 = vmatpush1.msra.mxu0 0.0
  %4768 = vmatprep.subr.mxu0 0.0
  %4769 = vmatpush1.msra.mxu0 0.0
  %4770 = vmatprep.subr.mxu0 0.0
  %4771 = vmatpush1.msra.mxu0 0.0
  %4772 = vmatprep.subr.mxu0 0.0
  %4773 = vmatpush1.msra.mxu0 0.0
  %4774 = vmatprep.subr.mxu0 0.0
  %4775 = vmatpush1.msra.mxu0 0.0
  %4776 = vmatprep.subr.mxu0 0.0
  %4777 = vmatpush1.msra.mxu0 0.0
  %4778 = vmatprep.subr.mxu0 0.0
  %4779 = vmatpush1.msra.mxu0 0.0
  %4780 = vmatprep.subr.mxu0 0.0
  %4781 = vmatpush1.msra.mxu0 0.0
  %4782 = vmatprep.subr.mxu0 0.0
  %4783 = vmatpush1.msra.mxu0 0.0
  %4784 = vmatprep.subr.mxu0 0.0
  %4785 = vmatpush1.msra.mxu0 0.0
  %4786 = vmatprep.subr.mxu0 0.0
  %4787 = vmatpush1.msra.mxu0 0.0
  %4788 = vmatprep.subr.mxu0 0.0
  %4789 = vmatpush1.msra.mxu0 0.0
  %4790 = vmatprep.subr.mxu0 0.0
  %4791 = vmatpush1.msra.mxu0 0.0
  %4792 = vmatprep.subr.mxu0 0.0
  %4793 = vmatpush1.msra.mxu0 0.0
  %4794 = vmatprep.subr.mxu0 0.0
  %4795 = vmatpush1.msra.mxu0 0.0
  %4796 = vmatprep.subr.mxu0 0.0
  %4797 = vmatpush1.msra.mxu0 0.0
  %4798 = vmatprep.subr.mxu0 0.0
  %4799 = vmatpush1.msra.mxu0 0.0
  %4800 = vmatprep.subr.mxu0 0.0
  %4801 = vmatpush1.msra.mxu0 0.0
  %4802 = vmatprep.subr.mxu0 0.0
  %4803 = vmatpush1.msra.mxu0 0.0
  %4804 = vmatprep.subr.mxu0 0.0
  %4805 = vmatpush1.msra.mxu0 0.0
  %4806 = vmatprep.subr.mxu0 0.0
  %4807 = vmatpush1.msra.mxu0 0.0
  %4808 = vmatprep.subr.mxu0 0.0
  %4809 = vmatpush1.msra.mxu0 0.0
  %4810 = vmatprep.subr.mxu0 0.0
  %4811 = vmatpush1.msra.mxu0 0.0
  %4812 = vmatprep.mubr.f32.mxu0 0.0
  %4813 = vmatmul.mubr.f32.gmra.mrb[0].mxu0 %v4746
  %v4814 = vpop.f32.mrb[0].mxu0
  %v4815 = vadd.f32 0.0, %v4814
  %v4816 = vpop.f32.mrb[0].mxu0
  %4817 = vdwg.mxu0
  %4818 = vrot.lane.b32.xlu0 %v3729, 64
  %v4819 = vpop.permute.xlu0 %4818
  %v4822 = vsel %vm243, %v4433, 0
  %4824 = vmatprep.subr.mxu0 0.0
  %4825 = vmatpush1.msra.mxu0 %v4819
  %4826 = vmatprep.subr.mxu0 0.0
  %4827 = vmatpush1.msra.mxu0 0.0
  %4828 = vmatprep.subr.mxu0 0.0
  %4829 = vmatpush1.msra.mxu0 0.0
  %4830 = vmatprep.subr.mxu0 0.0
  %4831 = vmatpush1.msra.mxu0 0.0
  %4832 = vmatprep.subr.mxu0 0.0
  %4833 = vmatpush1.msra.mxu0 0.0
  %4834 = vmatprep.subr.mxu0 0.0
  %4835 = vmatpush1.msra.mxu0 0.0
  %4836 = vmatprep.subr.mxu0 0.0
  %4837 = vmatpush1.msra.mxu0 0.0
  %4838 = vmatprep.subr.mxu0 0.0
  %4839 = vmatpush1.msra.mxu0 0.0
  %4840 = vmatprep.subr.mxu0 0.0
  %4841 = vmatpush1.msra.mxu0 0.0
  %4842 = vmatprep.subr.mxu0 0.0
  %4843 = vmatpush1.msra.mxu0 0.0
  %4844 = vmatprep.subr.mxu0 0.0
  %4845 = vmatpush1.msra.mxu0 0.0
  %4846 = vmatprep.subr.mxu0 0.0
  %4847 = vmatpush1.msra.mxu0 0.0
  %4848 = vmatprep.subr.mxu0 0.0
  %4849 = vmatpush1.msra.mxu0 0.0
  %4850 = vmatprep.subr.mxu0 0.0
  %4851 = vmatpush1.msra.mxu0 0.0
  %4852 = vmatprep.subr.mxu0 0.0
  %4853 = vmatpush1.msra.mxu0 0.0
  %4854 = vmatprep.subr.mxu0 0.0
  %4855 = vmatpush1.msra.mxu0 0.0
  %4856 = vmatprep.subr.mxu0 0.0
  %4857 = vmatpush1.msra.mxu0 0.0
  %4858 = vmatprep.subr.mxu0 0.0
  %4859 = vmatpush1.msra.mxu0 0.0
  %4860 = vmatprep.subr.mxu0 0.0
  %4861 = vmatpush1.msra.mxu0 0.0
  %4862 = vmatprep.subr.mxu0 0.0
  %4863 = vmatpush1.msra.mxu0 0.0
  %4864 = vmatprep.subr.mxu0 0.0
  %4865 = vmatpush1.msra.mxu0 0.0
  %4866 = vmatprep.subr.mxu0 0.0
  %4867 = vmatpush1.msra.mxu0 0.0
  %4868 = vmatprep.subr.mxu0 0.0
  %4869 = vmatpush1.msra.mxu0 0.0
  %4870 = vmatprep.subr.mxu0 0.0
  %4871 = vmatpush1.msra.mxu0 0.0
  %4872 = vmatprep.subr.mxu0 0.0
  %4873 = vmatpush1.msra.mxu0 0.0
  %4874 = vmatprep.subr.mxu0 0.0
  %4875 = vmatpush1.msra.mxu0 0.0
  %4876 = vmatprep.subr.mxu0 0.0
  %4877 = vmatpush1.msra.mxu0 0.0
  %4878 = vmatprep.subr.mxu0 0.0
  %4879 = vmatpush1.msra.mxu0 0.0
  %4880 = vmatprep.subr.mxu0 0.0
  %4881 = vmatpush1.msra.mxu0 0.0
  %4882 = vmatprep.subr.mxu0 0.0
  %4883 = vmatpush1.msra.mxu0 0.0
  %4884 = vmatprep.subr.mxu0 0.0
  %4885 = vmatpush1.msra.mxu0 0.0
  %4886 = vmatprep.subr.mxu0 0.0
  %4887 = vmatpush1.msra.mxu0 0.0
  %4888 = vmatprep.mubr.f32.mxu0 0.0
  %4889 = vmatmul.mubr.f32.gmra.mrb[0].mxu0 %v4822
  %v4890 = vpop.f32.mrb[0].mxu0
  %v4891 = vadd.f32 0.0, %v4890
  %v4892 = vpop.f32.mrb[0].mxu0
  %4893 = vdwg.mxu0
  %4894 = vrot.lane.b32.xlu0 %v3731, 64
  %v4895 = vpop.permute.xlu0 %4894
  %v4898 = vsel %vm243, %v4435, 0
  %4900 = vmatprep.subr.mxu0 0.0
  %4901 = vmatpush1.msra.mxu0 %v4895
  %4902 = vmatprep.subr.mxu0 0.0
  %4903 = vmatpush1.msra.mxu0 0.0
  %4904 = vmatprep.subr.mxu0 0.0
  %4905 = vmatpush1.msra.mxu0 0.0
  %4906 = vmatprep.subr.mxu0 0.0
  %4907 = vmatpush1.msra.mxu0 0.0
  %4908 = vmatprep.subr.mxu0 0.0
  %4909 = vmatpush1.msra.mxu0 0.0
  %4910 = vmatprep.subr.mxu0 0.0
  %4911 = vmatpush1.msra.mxu0 0.0
  %4912 = vmatprep.subr.mxu0 0.0
  %4913 = vmatpush1.msra.mxu0 0.0
  %4914 = vmatprep.subr.mxu0 0.0
  %4915 = vmatpush1.msra.mxu0 0.0
  %4916 = vmatprep.subr.mxu0 0.0
  %4917 = vmatpush1.msra.mxu0 0.0
  %4918 = vmatprep.subr.mxu0 0.0
  %4919 = vmatpush1.msra.mxu0 0.0
  %4920 = vmatprep.subr.mxu0 0.0
  %4921 = vmatpush1.msra.mxu0 0.0
  %4922 = vmatprep.subr.mxu0 0.0
  %4923 = vmatpush1.msra.mxu0 0.0
  %4924 = vmatprep.subr.mxu0 0.0
  %4925 = vmatpush1.msra.mxu0 0.0
  %4926 = vmatprep.subr.mxu0 0.0
  %4927 = vmatpush1.msra.mxu0 0.0
  %4928 = vmatprep.subr.mxu0 0.0
  %4929 = vmatpush1.msra.mxu0 0.0
  %4930 = vmatprep.subr.mxu0 0.0
  %4931 = vmatpush1.msra.mxu0 0.0
  %4932 = vmatprep.subr.mxu0 0.0
  %4933 = vmatpush1.msra.mxu0 0.0
  %4934 = vmatprep.subr.mxu0 0.0
  %4935 = vmatpush1.msra.mxu0 0.0
  %4936 = vmatprep.subr.mxu0 0.0
  %4937 = vmatpush1.msra.mxu0 0.0
  %4938 = vmatprep.subr.mxu0 0.0
  %4939 = vmatpush1.msra.mxu0 0.0
  %4940 = vmatprep.subr.mxu0 0.0
  %4941 = vmatpush1.msra.mxu0 0.0
  %4942 = vmatprep.subr.mxu0 0.0
  %4943 = vmatpush1.msra.mxu0 0.0
  %4944 = vmatprep.subr.mxu0 0.0
  %4945 = vmatpush1.msra.mxu0 0.0
  %4946 = vmatprep.subr.mxu0 0.0
  %4947 = vmatpush1.msra.mxu0 0.0
  %4948 = vmatprep.subr.mxu0 0.0
  %4949 = vmatpush1.msra.mxu0 0.0
  %4950 = vmatprep.subr.mxu0 0.0
  %4951 = vmatpush1.msra.mxu0 0.0
  %4952 = vmatprep.subr.mxu0 0.0
  %4953 = vmatpush1.msra.mxu0 0.0
  %4954 = vmatprep.subr.mxu0 0.0
  %4955 = vmatpush1.msra.mxu0 0.0
  %4956 = vmatprep.subr.mxu0 0.0
  %4957 = vmatpush1.msra.mxu0 0.0
  %4958 = vmatprep.subr.mxu0 0.0
  %4959 = vmatpush1.msra.mxu0 0.0
  %4960 = vmatprep.subr.mxu0 0.0
  %4961 = vmatpush1.msra.mxu0 0.0
  %4962 = vmatprep.subr.mxu0 0.0
  %4963 = vmatpush1.msra.mxu0 0.0
  %4964 = vmatprep.mubr.f32.mxu0 0.0
  %4965 = vmatmul.mubr.f32.gmra.mrb[0].mxu0 %v4898
  %v4966 = vpop.f32.mrb[0].mxu0
  %v4967 = vadd.f32 0.0, %v4966
  %v4968 = vpop.f32.mrb[0].mxu0
  %4969 = vdwg.mxu0
  %4970 = vrot.lane.b32.xlu0 %v3733, 64
  %v4971 = vpop.permute.xlu0 %4970
  %v4974 = vsel %vm243, %v4437, 0
  %4976 = vmatprep.subr.mxu0 0.0
  %4977 = vmatpush1.msra.mxu0 %v4971
  %4978 = vmatprep.subr.mxu0 0.0
  %4979 = vmatpush1.msra.mxu0 0.0
  %4980 = vmatprep.subr.mxu0 0.0
  %4981 = vmatpush1.msra.mxu0 0.0
  %4982 = vmatprep.subr.mxu0 0.0
  %4983 = vmatpush1.msra.mxu0 0.0
  %4984 = vmatprep.subr.mxu0 0.0
  %4985 = vmatpush1.msra.mxu0 0.0
  %4986 = vmatprep.subr.mxu0 0.0
  %4987 = vmatpush1.msra.mxu0 0.0
  %4988 = vmatprep.subr.mxu0 0.0
  %4989 = vmatpush1.msra.mxu0 0.0
  %4990 = vmatprep.subr.mxu0 0.0
  %4991 = vmatpush1.msra.mxu0 0.0
  %4992 = vmatprep.subr.mxu0 0.0
  %4993 = vmatpush1.msra.mxu0 0.0
  %4994 = vmatprep.subr.mxu0 0.0
  %4995 = vmatpush1.msra.mxu0 0.0
  %4996 = vmatprep.subr.mxu0 0.0
  %4997 = vmatpush1.msra.mxu0 0.0
  %4998 = vmatprep.subr.mxu0 0.0
  %4999 = vmatpush1.msra.mxu0 0.0
  %5000 = vmatprep.subr.mxu0 0.0
  %5001 = vmatpush1.msra.mxu0 0.0
  %5002 = vmatprep.subr.mxu0 0.0
  %5003 = vmatpush1.msra.mxu0 0.0
  %5004 = vmatprep.subr.mxu0 0.0
  %5005 = vmatpush1.msra.mxu0 0.0
  %5006 = vmatprep.subr.mxu0 0.0
  %5007 = vmatpush1.msra.mxu0 0.0
  %5008 = vmatprep.subr.mxu0 0.0
  %5009 = vmatpush1.msra.mxu0 0.0
  %5010 = vmatprep.subr.mxu0 0.0
  %5011 = vmatpush1.msra.mxu0 0.0
  %5012 = vmatprep.subr.mxu0 0.0
  %5013 = vmatpush1.msra.mxu0 0.0
  %5014 = vmatprep.subr.mxu0 0.0
  %5015 = vmatpush1.msra.mxu0 0.0
  %5016 = vmatprep.subr.mxu0 0.0
  %5017 = vmatpush1.msra.mxu0 0.0
  %5018 = vmatprep.subr.mxu0 0.0
  %5019 = vmatpush1.msra.mxu0 0.0
  %5020 = vmatprep.subr.mxu0 0.0
  %5021 = vmatpush1.msra.mxu0 0.0
  %5022 = vmatprep.subr.mxu0 0.0
  %5023 = vmatpush1.msra.mxu0 0.0
  %5024 = vmatprep.subr.mxu0 0.0
  %5025 = vmatpush1.msra.mxu0 0.0
  %5026 = vmatprep.subr.mxu0 0.0
  %5027 = vmatpush1.msra.mxu0 0.0
  %5028 = vmatprep.subr.mxu0 0.0
  %5029 = vmatpush1.msra.mxu0 0.0
  %5030 = vmatprep.subr.mxu0 0.0
  %5031 = vmatpush1.msra.mxu0 0.0
  %5032 = vmatprep.subr.mxu0 0.0
  %5033 = vmatpush1.msra.mxu0 0.0
  %5034 = vmatprep.subr.mxu0 0.0
  %5035 = vmatpush1.msra.mxu0 0.0
  %5036 = vmatprep.subr.mxu0 0.0
  %5037 = vmatpush1.msra.mxu0 0.0
  %5038 = vmatprep.subr.mxu0 0.0
  %5039 = vmatpush1.msra.mxu0 0.0
  %5040 = vmatprep.mubr.f32.mxu0 0.0
  %5041 = vmatmul.mubr.f32.gmra.mrb[0].mxu0 %v4974
  %v5042 = vpop.f32.mrb[0].mxu0
  %v5043 = vadd.f32 0.0, %v5042
  %v5044 = vpop.f32.mrb[0].mxu0
  %5045 = vdwg.mxu0
  %5048 = vrot.lane.b32.xlu0 %v4663, 8
  %v5049 = vpop.permute.xlu0 %5048
  %5050 = vrot.lane.b32.xlu0 %v4739, 8
  %v5051 = vpop.permute.xlu0 %5050
  %5056 = vrot.lane.b32.xlu0 %v4815, 16
  %v5057 = vpop.permute.xlu0 %5056
  %5058 = vrot.lane.b32.xlu0 %v4891, 16
  %v5059 = vpop.permute.xlu0 %5058
  %5064 = vrot.lane.b32.xlu0 %v4967, 24
  %v5065 = vpop.permute.xlu0 %5064
  %5066 = vrot.lane.b32.xlu0 %v5043, 24
  %v5067 = vpop.permute.xlu0 %5066
  %v5070 = vsel %vm243, %v4511, %v5049
  %v5071 = vsel %vm243, %v4587, %v5051
  %v5072 = vsel %vm952, %v5070, %v5057
  %v5073 = vsel %vm952, %v5071, %v5059
  %v5074 = vsel %vm1881, %v5072, %v5065
  %v5075 = vsel %vm1881, %v5073, %v5067
  %v5077 = vsel %vm40, %v5074, 0
  %v5080 = vsel %vm40, %v5075, 0
  %5082 = vmatprep.subr.mxu0 0.0
  %5083 = vmatpush1.msra.mxu0 %v32
  %5084 = vmatprep.subr.mxu0 0.0
  %5085 = vmatpush1.msra.mxu0 %v33
  %5086 = vmatprep.subr.mxu0 0.0
  %5087 = vmatpush1.msra.mxu0 %v34
  %5088 = vmatprep.subr.mxu0 0.0
  %5089 = vmatpush1.msra.mxu0 %v35
  %5090 = vmatprep.subr.mxu0 0.0
  %5091 = vmatpush1.msra.mxu0 0.0
  %5092 = vmatprep.subr.mxu0 0.0
  %5093 = vmatpush1.msra.mxu0 0.0
  %5094 = vmatprep.subr.mxu0 0.0
  %5095 = vmatpush1.msra.mxu0 0.0
  %5096 = vmatprep.subr.mxu0 0.0
  %5097 = vmatpush1.msra.mxu0 0.0
  %5098 = vmatprep.subr.mxu0 0.0
  %5099 = vmatpush1.msra.mxu0 0.0
  %5100 = vmatprep.subr.mxu0 0.0
  %5101 = vmatpush1.msra.mxu0 0.0
  %5102 = vmatprep.subr.mxu0 0.0
  %5103 = vmatpush1.msra.mxu0 0.0
  %5104 = vmatprep.subr.mxu0 0.0
  %5105 = vmatpush1.msra.mxu0 0.0
  %5106 = vmatprep.subr.mxu0 0.0
  %5107 = vmatpush1.msra.mxu0 0.0
  %5108 = vmatprep.subr.mxu0 0.0
  %5109 = vmatpush1.msra.mxu0 0.0
  %5110 = vmatprep.subr.mxu0 0.0
  %5111 = vmatpush1.msra.mxu0 0.0
  %5112 = vmatprep.subr.mxu0 0.0
  %5113 = vmatpush1.msra.mxu0 0.0
  %5114 = vmatprep.subr.mxu0 0.0
  %5115 = vmatpush1.msra.mxu0 0.0
  %5116 = vmatprep.subr.mxu0 0.0
  %5117 = vmatpush1.msra.mxu0 0.0
  %5118 = vmatprep.subr.mxu0 0.0
  %5119 = vmatpush1.msra.mxu0 0.0
  %5120 = vmatprep.subr.mxu0 0.0
  %5121 = vmatpush1.msra.mxu0 0.0
  %5122 = vmatprep.subr.mxu0 0.0
  %5123 = vmatpush1.msra.mxu0 0.0
  %5124 = vmatprep.subr.mxu0 0.0
  %5125 = vmatpush1.msra.mxu0 0.0
  %5126 = vmatprep.subr.mxu0 0.0
  %5127 = vmatpush1.msra.mxu0 0.0
  %5128 = vmatprep.subr.mxu0 0.0
  %5129 = vmatpush1.msra.mxu0 0.0
  %5130 = vmatprep.subr.mxu0 0.0
  %5131 = vmatpush1.msra.mxu0 0.0
  %5132 = vmatprep.subr.mxu0 0.0
  %5133 = vmatpush1.msra.mxu0 0.0
  %5134 = vmatprep.subr.mxu0 0.0
  %5135 = vmatpush1.msra.mxu0 0.0
  %5136 = vmatprep.subr.mxu0 0.0
  %5137 = vmatpush1.msra.mxu0 0.0
  %5138 = vmatprep.subr.mxu0 0.0
  %5139 = vmatpush1.msra.mxu0 0.0
  %5140 = vmatprep.subr.mxu0 0.0
  %5141 = vmatpush1.msra.mxu0 0.0
  %5142 = vmatprep.subr.mxu0 0.0
  %5143 = vmatpush1.msra.mxu0 0.0
  %5144 = vmatprep.subr.mxu0 0.0
  %5145 = vmatpush1.msra.mxu0 0.0
  %5146 = vmatprep.mubr.f32.mxu0 0.0
  %5147 = vmatmul.mubr.f32.gmra.mrb[0].mxu0 %v5077
  %v5148 = vpop.f32.mrb[0].mxu0
  %v5149 = vadd.f32 %v3525, %v5148
  %v5150 = vpop.f32.mrb[0].mxu0
  %5151 = vmatprep.mubr.f32.mxu0 0.0
  %5152 = vmatmul.mubr.f32.gmra.mrb[0].mxu0 %v5080
  %v5153 = vpop.f32.mrb[0].mxu0
  %v5154 = vadd.f32 %v3525, %v5153
  %v5155 = vpop.f32.mrb[0].mxu0
  %5156 = vdwg.mxu0
  %v5157 = vadd.f32 %v1987, %v5149
  %v5158 = vadd.f32 %v1989, %v5154
  %5160 = vrot.lane.b32.xlu0 %v3607, 32
  %v5161 = vpop.permute.xlu0 %5160
  %5164 = vrot.lane.b32.xlu0 %v5158, 64
  %v5165 = vpop.permute.xlu0 %5164
  %5168 = vrot.lane.b32.xlu0 %v3608, 96
  %v5169 = vpop.permute.xlu0 %5168
  %v5171 = vsel %vm40, %v5157, %v5161
  %vm5172 = vcmask 523264
  %v5173 = vsel %vm5172, %v5171, %v5165
  %vm5174 = vcmask 785408
  %v5175 = vsel %vm5174, %v5173, %v5169
  %5176 = vst [vmem:[%s3] sm:$0xff] %v5175
  // Predicated region
  $region14: #{block_forward.1} parent=0 // pred_check
    _
  $region15: #{block_forward.1} parent=0 // pred_check_branch
    %5178 = sbr.rel (0) target = $region17
  $region16: #{block_forward.1} parent=0 // pred_region
    _
  $region17: #{block_forward.1} parent=0 // pred_fallthru
    _
  // Predicated region
  $region18: #{block_forward.1} parent=0 // pred_check
    _
  $region19: #{block_forward.1} parent=0 // pred_check_branch
    %5180 = sbr.rel (0) target = $region21
  $region20: #{block_forward.1} parent=0 // pred_region
    _
  $region21: #{block_forward.1} parent=0 // pred_fallthru
    _

</llo_original>
